<compile_context>
chip_gen: v5e
topology: v5e:2x2
jax: 0.10.0
libtpu: 0.0.40
codegen_flags: <defaults>
</compile_context>

<pallas_src>
import jax
import jax.numpy as jnp
from jax import lax
from jax.experimental import pallas as pl
from jax.experimental.pallas import tpu as pltpu

EMBEDDING_DIM = 100
HIDDEN_DIM = 128
OUTPUT_DIM = 2
VOCAB_SIZE = 512      # small synthetic vocab (module uses 40157; table is glue anyway)
BATCH = 2
SEQ = 8

B_PAD = 8             # pad batch to a full sublane group
O_PAD = 128           # pad FC output dim to a full lane group


def lstm_classifier_kernel(gx_ref,    # (T*Bp, 4H) f32  pre-gathered layer-0 input gates
                           w0_ref,    # (H, 8H)    bf16 [Whh0 | Wih1]
                           whh1_ref,  # (H, 4H)    bf16 Whh1
                           b1_ref,    # (1, 4H)    f32  b_ih1 + b_hh1
                           wfc_ref,   # (H, Op)    bf16 (zero-padded cols)
                           bfc_ref,   # (1, Op)    f32  (zero-padded)
                           out_ref):  # (Bp, Op)   f32
    Bp = out_ref.shape[0]
    H = HIDDEN_DIM
    T = gx_ref.shape[0] // Bp

    # Hoist weight / bias loads out of the unrolled recurrence; the
    # (1,4H)->(Bp,4H) bias broadcast is materialized exactly once.
    w0 = w0_ref[...]
    w1r = whh1_ref[...]
    b1_full = jnp.broadcast_to(b1_ref[...], (Bp, 4 * H))

    def sigmoid(x):
        # Exact: sigma(x) = 0.5*tanh(x/2) + 0.5  (EUP tanh + cheap VPU ops).
        return 0.5 * jnp.tanh(0.5 * x) + 0.5

    def gate_math(gates, c_prev):
        # PyTorch gate order [i, f, g, o]; all elementwise math in f32.
        i = sigmoid(gates[:, 0 * H:1 * H])
        f = sigmoid(gates[:, 1 * H:2 * H])
        g = jnp.tanh(gates[:, 2 * H:3 * H])
        o = sigmoid(gates[:, 3 * H:4 * H])
        c_new = f * c_prev + i * g
        # bf16 copy (next matmul operand) produced here so the cast overlaps
        # the remaining gate math instead of heading the next step's matmul.
        h_bf = (o * jnp.tanh(c_new)).astype(jnp.bfloat16)
        return h_bf, c_new

    zf = jnp.zeros((Bp, H), jnp.float32)

    # Prologue (layer 0, t = 0): zero initial state => gates are just the
    # pre-gathered input projection; no matmul on the chain yet.
    h0b, c0 = gate_math(gx_ref[pl.ds(0, Bp), :], zf)
    h1b, c1 = zf.astype(jnp.bfloat16), zf

    # Wave-pipelined steady state: iteration t finishes layer 1 for step t and
    # layer 0 for step t+1.  The two matmuls are independent of each other, as
    # are the two gate_math blocks, so the per-step serial chain is one matmul
    # + one gate_math instead of two of each.
    def step(t, carry):
        h0b, c0, h1b, c1 = carry
        big0 = jnp.dot(h0b, w0, preferred_element_type=jnp.float32)    # (Bp, 8H)
        rec1 = jnp.dot(h1b, w1r, preferred_element_type=jnp.float32)   # (Bp, 4H)
        # Layer 1, step t.
        h1b, c1 = gate_math(big0[:, 4 * H:] + rec1 + b1_full, c1)
        # Layer 0, step t+1.
        start = pl.multiple_of((t + 1) * Bp, Bp)
        h0b, c0 = gate_math(gx_ref[pl.ds(start, Bp), :] + big0[:, :4 * H], c0)
        return h0b, c0, h1b, c1

    h0b, c0, h1b, c1 = lax.fori_loop(0, T - 1, step, (h0b, c0, h1b, c1),
                                     unroll=True)

    # Epilogue: final layer-1 step (t = T-1); only the Wih1 half of w0 is needed.
    gates1 = (jnp.dot(h0b, w0[:, 4 * H:], preferred_element_type=jnp.float32)
              + jnp.dot(h1b, w1r, preferred_element_type=jnp.float32)
              + b1_full)
    h1b, _ = gate_math(gates1, c1)

    # lstm_out[:, -1, :] == final layer-2 hidden state; classifier head.
    # TODO(synk): nn.Dropout / inter-layer LSTM dropout are train-only; this
    # kernel implements eval semantics (identity).
    out_ref[...] = (jnp.dot(h1b, wfc_ref[...], preferred_element_type=jnp.float32)
                    + bfc_ref[...])


@jax.jit
def lstm_classifier_forward(token_ids, params):
    B, T = token_ids.shape
    # Layer-0 input projection + bias folded into the table at init: per call,
    # one lane-dense row gather replaces gather/transpose/pad/cast/matmul glue.
    tok_tm = jnp.pad(jnp.transpose(token_ids, (1, 0)),
                     ((0, 0), (0, B_PAD - B)))                      # (T, Bp); pad = token 0
    gx = jnp.take(params["table_gx"], tok_tm.reshape(-1), axis=0)   # (T*Bp, 4H) f32

    vmem = pl.BlockSpec(memory_space=pltpu.MemorySpace.VMEM)
    out = pl.pallas_call(
        lstm_classifier_kernel,
        out_shape=jax.ShapeDtypeStruct((B_PAD, O_PAD), jnp.float32),
        in_specs=[vmem] * 6,
        out_specs=vmem,
    )(gx, params["w0_big"], params["whh1T"], params["b1"],
      params["wfcT"], params["bfc"])
    return out[:B, :OUTPUT_DIM]


def init_params(key):
    ks = jax.random.split(key, 10)
    bound = 1.0 / float(jnp.sqrt(HIDDEN_DIM))

    def u(k, shape):
        return jax.random.uniform(k, shape, jnp.float32, -bound, bound)

    emb = 0.1 * jax.random.normal(ks[0], (VOCAB_SIZE, EMBEDDING_DIM), jnp.float32)
    emb = emb.at[0].set(0.0)                                        # padding_idx=0

    wih0 = u(ks[1], (4 * HIDDEN_DIM, EMBEDDING_DIM))
    whh0 = u(ks[2], (4 * HIDDEN_DIM, HIDDEN_DIM))
    b_ih0 = u(ks[3], (4 * HIDDEN_DIM,))
    b_hh0 = u(ks[4], (4 * HIDDEN_DIM,))
    wih1 = u(ks[5], (4 * HIDDEN_DIM, HIDDEN_DIM))
    whh1 = u(ks[6], (4 * HIDDEN_DIM, HIDDEN_DIM))
    b_ih1 = u(ks[7], (4 * HIDDEN_DIM,))
    b_hh1 = u(ks[8], (4 * HIDDEN_DIM,))
    kfc_w, kfc_b = jax.random.split(ks[9])
    wfc = u(kfc_w, (OUTPUT_DIM, HIDDEN_DIM))
    bfc = u(kfc_b, (OUTPUT_DIM,))

    # f32 copies (PyTorch layout, transposed for right-multiply) for the reference.
    ref = dict(
        wih0T=wih0.T, whh0T=whh0.T, b0=(b_ih0 + b_hh0).reshape(1, -1),
        wih1T=wih1.T, whh1T=whh1.T, b1=(b_ih1 + b_hh1).reshape(1, -1),
        wfcT=wfc.T, bfc=bfc.reshape(1, -1),
    )

    # Layer-0 input projection folded into the embedding table (f32 => exact
    # vs the reference).  At the real 40157 vocab this is ~82 MB; store bf16
    # there if table memory matters.
    table_gx = emb @ wih0.T + ref["b0"]                             # (VOCAB, 4H)

    # Wave-pipeline weights: one h0 matmul feeds both layer-0 (t+1) recurrent
    # gates and layer-1 (t) input gates.
    w0_big = jnp.concatenate([whh0.T, wih1.T], axis=1)              # (H, 8H)

    wfcT_pad = jnp.zeros((HIDDEN_DIM, O_PAD), jnp.float32)
    wfcT_pad = wfcT_pad.at[:, :OUTPUT_DIM].set(wfc.T)
    bfc_pad = jnp.zeros((1, O_PAD), jnp.float32)
    bfc_pad = bfc_pad.at[:, :OUTPUT_DIM].set(bfc.reshape(1, -1))

    return dict(
        embedding=emb,
        table_gx=table_gx,
        w0_big=w0_big.astype(jnp.bfloat16),
        whh1T=whh1.T.astype(jnp.bfloat16),
        b1=ref["b1"],
        wfcT=wfcT_pad.astype(jnp.bfloat16),
        bfc=bfc_pad,
        ref=ref,
    )


def reference_forward(token_ids, params):
    """Pure-JAX f32 reference mirroring PyTorch LSTM eval semantics."""
    r = params["ref"]
    emb = jnp.take(params["embedding"], token_ids, axis=0)          # (B, T, E)
    B = token_ids.shape[0]
    H = HIDDEN_DIM

    def run_layer(x_seq, wihT, whhT, b):
        def scan_step(carry, x_t):
            h, c = carry
            gates = x_t @ wihT + h @ whhT + b
            i = jax.nn.sigmoid(gates[:, 0 * H:1 * H])
            f = jax.nn.sigmoid(gates[:, 1 * H:2 * H])
            g = jnp.tanh(gates[:, 2 * H:3 * H])
            o = jax.nn.sigmoid(gates[:, 3 * H:4 * H])
            c = f * c + i * g
            h = o * jnp.tanh(c)
            return (h, c), h

        init = (jnp.zeros((B, H), jnp.float32), jnp.zeros((B, H), jnp.float32))
        _, hs = lax.scan(scan_step, init, jnp.transpose(x_seq, (1, 0, 2)))
        return jnp.transpose(hs, (1, 0, 2))

    h1 = run_layer(emb.astype(jnp.float32), r["wih0T"], r["whh0T"], r["b0"])
    h2 = run_layer(h1, r["wih1T"], r["whh1T"], r["b1"])
    last = h2[:, -1, :]
    return last @ r["wfcT"] + r["bfc"]


if __name__ == "__main__":
    key = jax.random.PRNGKey(0)
    k_param, k_tok = jax.random.split(key)
    params = init_params(k_param)
    token_ids = jax.random.randint(k_tok, (BATCH, SEQ), 0, VOCAB_SIZE, dtype=jnp.int32)

    logits = jax.block_until_ready(lstm_classifier_forward(token_ids, params))
    ref = jax.block_until_ready(reference_forward(token_ids, params))

    assert logits.shape == (BATCH, OUTPUT_DIM)
    # bf16 recurrent weights / hidden states with f32 accumulation: relaxed tol.
    assert jnp.allclose(logits, ref, atol=2e-2, rtol=2e-2), (logits, ref)

    print("KERNEL_OK")
</pallas_src>

<mosaic_0001>
module attributes {stable_mosaic.version = 11 : i64} {
  func.func @lstm_classifier_kernel(%arg0: memref<64x512xf32, #tpu.memory_space<vmem>>, %arg1: memref<128x1024xbf16, #tpu.memory_space<vmem>>, %arg2: memref<128x512xbf16, #tpu.memory_space<vmem>>, %arg3: memref<1x512xf32, #tpu.memory_space<vmem>>, %arg4: memref<128x128xbf16, #tpu.memory_space<vmem>>, %arg5: memref<1x128xf32, #tpu.memory_space<vmem>>, %arg6: memref<8x128xf32, #tpu.memory_space<vmem>>) attributes {dimension_semantics = [], scalar_prefetch = 0 : i64, scratch_operands = 0 : i64, tpu.core_type = #tpu.core_type<tc>} {
    %c0 = arith.constant 0 : index
    %c0_0 = arith.constant 0 : index
    %0 = vector.load %arg1[%c0, %c0_0] : memref<128x1024xbf16, #tpu.memory_space<vmem>>, vector<128x1024xbf16>
    %c0_1 = arith.constant 0 : index
    %c0_2 = arith.constant 0 : index
    %1 = vector.load %arg2[%c0_1, %c0_2] : memref<128x512xbf16, #tpu.memory_space<vmem>>, vector<128x512xbf16>
    %c0_3 = arith.constant 0 : index
    %c0_4 = arith.constant 0 : index
    %2 = vector.load %arg3[%c0_3, %c0_4] : memref<1x512xf32, #tpu.memory_space<vmem>>, vector<1x512xf32>
    %3 = vector.shape_cast %2 : vector<1x512xf32> to vector<1x512xf32>
    %4 = vector.broadcast %3 : vector<1x512xf32> to vector<8x512xf32>
    %cst = arith.constant 0.000000e+00 : f32
    %5 = vector.broadcast %cst : f32 to vector<8x128xf32>
    %c0_5 = arith.constant 0 : index
    %c0_6 = arith.constant 0 : index
    %6 = vector.load %arg0[%c0_5, %c0_6] : memref<64x512xf32, #tpu.memory_space<vmem>>, vector<8x512xf32>
    %7 = vector.extract_strided_slice %6 {offsets = [0, 0], sizes = [8, 128], strides = [1, 1]} : vector<8x512xf32> to vector<8x128xf32>
    %cst_7 = arith.constant 5.000000e-01 : f32
    %8 = vector.broadcast %cst_7 : f32 to vector<8x128xf32>
    %9 = arith.mulf %8, %7 : vector<8x128xf32>
    %10 = math.tanh %9 : vector<8x128xf32>
    %cst_8 = arith.constant 5.000000e-01 : f32
    %11 = vector.broadcast %cst_8 : f32 to vector<8x128xf32>
    %12 = arith.mulf %11, %10 : vector<8x128xf32>
    %cst_9 = arith.constant 5.000000e-01 : f32
    %13 = vector.broadcast %cst_9 : f32 to vector<8x128xf32>
    %14 = arith.addf %12, %13 : vector<8x128xf32>
    %15 = vector.extract_strided_slice %6 {offsets = [0, 128], sizes = [8, 128], strides = [1, 1]} : vector<8x512xf32> to vector<8x128xf32>
    %cst_10 = arith.constant 5.000000e-01 : f32
    %16 = vector.broadcast %cst_10 : f32 to vector<8x128xf32>
    %17 = arith.mulf %16, %15 : vector<8x128xf32>
    %18 = math.tanh %17 : vector<8x128xf32>
    %cst_11 = arith.constant 5.000000e-01 : f32
    %19 = vector.broadcast %cst_11 : f32 to vector<8x128xf32>
    %20 = arith.mulf %19, %18 : vector<8x128xf32>
    %cst_12 = arith.constant 5.000000e-01 : f32
    %21 = vector.broadcast %cst_12 : f32 to vector<8x128xf32>
    %22 = arith.addf %20, %21 : vector<8x128xf32>
    %23 = vector.extract_strided_slice %6 {offsets = [0, 256], sizes = [8, 128], strides = [1, 1]} : vector<8x512xf32> to vector<8x128xf32>
    %24 = math.tanh %23 : vector<8x128xf32>
    %25 = vector.extract_strided_slice %6 {offsets = [0, 384], sizes = [8, 128], strides = [1, 1]} : vector<8x512xf32> to vector<8x128xf32>
    %cst_13 = arith.constant 5.000000e-01 : f32
    %26 = vector.broadcast %cst_13 : f32 to vector<8x128xf32>
    %27 = arith.mulf %26, %25 : vector<8x128xf32>
    %28 = math.tanh %27 : vector<8x128xf32>
    %cst_14 = arith.constant 5.000000e-01 : f32
    %29 = vector.broadcast %cst_14 : f32 to vector<8x128xf32>
    %30 = arith.mulf %29, %28 : vector<8x128xf32>
    %cst_15 = arith.constant 5.000000e-01 : f32
    %31 = vector.broadcast %cst_15 : f32 to vector<8x128xf32>
    %32 = arith.addf %30, %31 : vector<8x128xf32>
    %33 = arith.mulf %22, %5 : vector<8x128xf32>
    %34 = arith.mulf %14, %24 : vector<8x128xf32>
    %35 = arith.addf %33, %34 : vector<8x128xf32>
    %36 = math.tanh %35 : vector<8x128xf32>
    %37 = arith.mulf %32, %36 : vector<8x128xf32>
    %38 = arith.truncf %37 : vector<8x128xf32> to vector<8x128xbf16>
    %39 = arith.truncf %5 : vector<8x128xf32> to vector<8x128xbf16>
    %c0_i32 = arith.constant 0 : i32
    %cst_16 = arith.constant dense<0.000000e+00> : vector<8x1024xf32>
    %40 = tpu.matmul %38, %0, %cst_16 {dimension_numbers = #tpu.dot_dimension_numbers<[1], [0], [0], [1], [0, 0, 1, 1], [], []>} : vector<8x128xbf16>, vector<128x1024xbf16>, vector<8x1024xf32> -> vector<8x1024xf32>
    %cst_17 = arith.constant dense<0.000000e+00> : vector<8x512xf32>
    %41 = tpu.matmul %39, %1, %cst_17 {dimension_numbers = #tpu.dot_dimension_numbers<[1], [0], [0], [1], [0, 0, 1, 1], [], []>} : vector<8x128xbf16>, vector<128x512xbf16>, vector<8x512xf32> -> vector<8x512xf32>
    %42 = vector.extract_strided_slice %40 {offsets = [0, 512], sizes = [8, 512], strides = [1, 1]} : vector<8x1024xf32> to vector<8x512xf32>
    %43 = arith.addf %42, %41 : vector<8x512xf32>
    %44 = arith.addf %43, %4 : vector<8x512xf32>
    %45 = vector.extract_strided_slice %44 {offsets = [0, 0], sizes = [8, 128], strides = [1, 1]} : vector<8x512xf32> to vector<8x128xf32>
    %cst_18 = arith.constant 5.000000e-01 : f32
    %46 = vector.broadcast %cst_18 : f32 to vector<8x128xf32>
    %47 = arith.mulf %46, %45 : vector<8x128xf32>
    %48 = math.tanh %47 : vector<8x128xf32>
    %cst_19 = arith.constant 5.000000e-01 : f32
    %49 = vector.broadcast %cst_19 : f32 to vector<8x128xf32>
    %50 = arith.mulf %49, %48 : vector<8x128xf32>
    %cst_20 = arith.constant 5.000000e-01 : f32
    %51 = vector.broadcast %cst_20 : f32 to vector<8x128xf32>
    %52 = arith.addf %50, %51 : vector<8x128xf32>
    %53 = vector.extract_strided_slice %44 {offsets = [0, 128], sizes = [8, 128], strides = [1, 1]} : vector<8x512xf32> to vector<8x128xf32>
    %cst_21 = arith.constant 5.000000e-01 : f32
    %54 = vector.broadcast %cst_21 : f32 to vector<8x128xf32>
    %55 = arith.mulf %54, %53 : vector<8x128xf32>
    %56 = math.tanh %55 : vector<8x128xf32>
    %cst_22 = arith.constant 5.000000e-01 : f32
    %57 = vector.broadcast %cst_22 : f32 to vector<8x128xf32>
    %58 = arith.mulf %57, %56 : vector<8x128xf32>
    %cst_23 = arith.constant 5.000000e-01 : f32
    %59 = vector.broadcast %cst_23 : f32 to vector<8x128xf32>
    %60 = arith.addf %58, %59 : vector<8x128xf32>
    %61 = vector.extract_strided_slice %44 {offsets = [0, 256], sizes = [8, 128], strides = [1, 1]} : vector<8x512xf32> to vector<8x128xf32>
    %62 = math.tanh %61 : vector<8x128xf32>
    %63 = vector.extract_strided_slice %44 {offsets = [0, 384], sizes = [8, 128], strides = [1, 1]} : vector<8x512xf32> to vector<8x128xf32>
    %cst_24 = arith.constant 5.000000e-01 : f32
    %64 = vector.broadcast %cst_24 : f32 to vector<8x128xf32>
    %65 = arith.mulf %64, %63 : vector<8x128xf32>
    %66 = math.tanh %65 : vector<8x128xf32>
    %cst_25 = arith.constant 5.000000e-01 : f32
    %67 = vector.broadcast %cst_25 : f32 to vector<8x128xf32>
    %68 = arith.mulf %67, %66 : vector<8x128xf32>
    %cst_26 = arith.constant 5.000000e-01 : f32
    %69 = vector.broadcast %cst_26 : f32 to vector<8x128xf32>
    %70 = arith.addf %68, %69 : vector<8x128xf32>
    %71 = arith.mulf %60, %5 : vector<8x128xf32>
    %72 = arith.mulf %52, %62 : vector<8x128xf32>
    %73 = arith.addf %71, %72 : vector<8x128xf32>
    %74 = math.tanh %73 : vector<8x128xf32>
    %75 = arith.mulf %70, %74 : vector<8x128xf32>
    %76 = arith.truncf %75 : vector<8x128xf32> to vector<8x128xbf16>
    %c1_i32 = arith.constant 1 : i32
    %77 = arith.addi %c0_i32, %c1_i32 : i32
    %c8_i32 = arith.constant 8 : i32
    %78 = arith.muli %77, %c8_i32 : i32
    %79 = tpu.assume_multiple %78, 8 : i32
    %80 = arith.index_cast %79 : i32 to index
    %c0_27 = arith.constant 0 : index
    %81 = vector.load %arg0[%80, %c0_27] : memref<64x512xf32, #tpu.memory_space<vmem>>, vector<8x512xf32>
    %82 = vector.extract_strided_slice %40 {offsets = [0, 0], sizes = [8, 512], strides = [1, 1]} : vector<8x1024xf32> to vector<8x512xf32>
    %83 = arith.addf %81, %82 : vector<8x512xf32>
    %84 = vector.extract_strided_slice %83 {offsets = [0, 0], sizes = [8, 128], strides = [1, 1]} : vector<8x512xf32> to vector<8x128xf32>
    %cst_28 = arith.constant 5.000000e-01 : f32
    %85 = vector.broadcast %cst_28 : f32 to vector<8x128xf32>
    %86 = arith.mulf %85, %84 : vector<8x128xf32>
    %87 = math.tanh %86 : vector<8x128xf32>
    %cst_29 = arith.constant 5.000000e-01 : f32
    %88 = vector.broadcast %cst_29 : f32 to vector<8x128xf32>
    %89 = arith.mulf %88, %87 : vector<8x128xf32>
    %cst_30 = arith.constant 5.000000e-01 : f32
    %90 = vector.broadcast %cst_30 : f32 to vector<8x128xf32>
    %91 = arith.addf %89, %90 : vector<8x128xf32>
    %92 = vector.extract_strided_slice %83 {offsets = [0, 128], sizes = [8, 128], strides = [1, 1]} : vector<8x512xf32> to vector<8x128xf32>
    %cst_31 = arith.constant 5.000000e-01 : f32
    %93 = vector.broadcast %cst_31 : f32 to vector<8x128xf32>
    %94 = arith.mulf %93, %92 : vector<8x128xf32>
    %95 = math.tanh %94 : vector<8x128xf32>
    %cst_32 = arith.constant 5.000000e-01 : f32
    %96 = vector.broadcast %cst_32 : f32 to vector<8x128xf32>
    %97 = arith.mulf %96, %95 : vector<8x128xf32>
    %cst_33 = arith.constant 5.000000e-01 : f32
    %98 = vector.broadcast %cst_33 : f32 to vector<8x128xf32>
    %99 = arith.addf %97, %98 : vector<8x128xf32>
    %100 = vector.extract_strided_slice %83 {offsets = [0, 256], sizes = [8, 128], strides = [1, 1]} : vector<8x512xf32> to vector<8x128xf32>
    %101 = math.tanh %100 : vector<8x128xf32>
    %102 = vector.extract_strided_slice %83 {offsets = [0, 384], sizes = [8, 128], strides = [1, 1]} : vector<8x512xf32> to vector<8x128xf32>
    %cst_34 = arith.constant 5.000000e-01 : f32
    %103 = vector.broadcast %cst_34 : f32 to vector<8x128xf32>
    %104 = arith.mulf %103, %102 : vector<8x128xf32>
    %105 = math.tanh %104 : vector<8x128xf32>
    %cst_35 = arith.constant 5.000000e-01 : f32
    %106 = vector.broadcast %cst_35 : f32 to vector<8x128xf32>
    %107 = arith.mulf %106, %105 : vector<8x128xf32>
    %cst_36 = arith.constant 5.000000e-01 : f32
    %108 = vector.broadcast %cst_36 : f32 to vector<8x128xf32>
    %109 = arith.addf %107, %108 : vector<8x128xf32>
    %110 = arith.mulf %99, %35 : vector<8x128xf32>
    %111 = arith.mulf %91, %101 : vector<8x128xf32>
    %112 = arith.addf %110, %111 : vector<8x128xf32>
    %113 = math.tanh %112 : vector<8x128xf32>
    %114 = arith.mulf %109, %113 : vector<8x128xf32>
    %115 = arith.truncf %114 : vector<8x128xf32> to vector<8x128xbf16>
    %c1_i32_37 = arith.constant 1 : i32
    %cst_38 = arith.constant dense<0.000000e+00> : vector<8x1024xf32>
    %116 = tpu.matmul %115, %0, %cst_38 {dimension_numbers = #tpu.dot_dimension_numbers<[1], [0], [0], [1], [0, 0, 1, 1], [], []>} : vector<8x128xbf16>, vector<128x1024xbf16>, vector<8x1024xf32> -> vector<8x1024xf32>
    %cst_39 = arith.constant dense<0.000000e+00> : vector<8x512xf32>
    %117 = tpu.matmul %76, %1, %cst_39 {dimension_numbers = #tpu.dot_dimension_numbers<[1], [0], [0], [1], [0, 0, 1, 1], [], []>} : vector<8x128xbf16>, vector<128x512xbf16>, vector<8x512xf32> -> vector<8x512xf32>
    %118 = vector.extract_strided_slice %116 {offsets = [0, 512], sizes = [8, 512], strides = [1, 1]} : vector<8x1024xf32> to vector<8x512xf32>
    %119 = arith.addf %118, %117 : vector<8x512xf32>
    %120 = arith.addf %119, %4 : vector<8x512xf32>
    %121 = vector.extract_strided_slice %120 {offsets = [0, 0], sizes = [8, 128], strides = [1, 1]} : vector<8x512xf32> to vector<8x128xf32>
    %cst_40 = arith.constant 5.000000e-01 : f32
    %122 = vector.broadcast %cst_40 : f32 to vector<8x128xf32>
    %123 = arith.mulf %122, %121 : vector<8x128xf32>
    %124 = math.tanh %123 : vector<8x128xf32>
    %cst_41 = arith.constant 5.000000e-01 : f32
    %125 = vector.broadcast %cst_41 : f32 to vector<8x128xf32>
    %126 = arith.mulf %125, %124 : vector<8x128xf32>
    %cst_42 = arith.constant 5.000000e-01 : f32
    %127 = vector.broadcast %cst_42 : f32 to vector<8x128xf32>
    %128 = arith.addf %126, %127 : vector<8x128xf32>
    %129 = vector.extract_strided_slice %120 {offsets = [0, 128], sizes = [8, 128], strides = [1, 1]} : vector<8x512xf32> to vector<8x128xf32>
    %cst_43 = arith.constant 5.000000e-01 : f32
    %130 = vector.broadcast %cst_43 : f32 to vector<8x128xf32>
    %131 = arith.mulf %130, %129 : vector<8x128xf32>
    %132 = math.tanh %131 : vector<8x128xf32>
    %cst_44 = arith.constant 5.000000e-01 : f32
    %133 = vector.broadcast %cst_44 : f32 to vector<8x128xf32>
    %134 = arith.mulf %133, %132 : vector<8x128xf32>
    %cst_45 = arith.constant 5.000000e-01 : f32
    %135 = vector.broadcast %cst_45 : f32 to vector<8x128xf32>
    %136 = arith.addf %134, %135 : vector<8x128xf32>
    %137 = vector.extract_strided_slice %120 {offsets = [0, 256], sizes = [8, 128], strides = [1, 1]} : vector<8x512xf32> to vector<8x128xf32>
    %138 = math.tanh %137 : vector<8x128xf32>
    %139 = vector.extract_strided_slice %120 {offsets = [0, 384], sizes = [8, 128], strides = [1, 1]} : vector<8x512xf32> to vector<8x128xf32>
    %cst_46 = arith.constant 5.000000e-01 : f32
    %140 = vector.broadcast %cst_46 : f32 to vector<8x128xf32>
    %141 = arith.mulf %140, %139 : vector<8x128xf32>
    %142 = math.tanh %141 : vector<8x128xf32>
    %cst_47 = arith.constant 5.000000e-01 : f32
    %143 = vector.broadcast %cst_47 : f32 to vector<8x128xf32>
    %144 = arith.mulf %143, %142 : vector<8x128xf32>
    %cst_48 = arith.constant 5.000000e-01 : f32
    %145 = vector.broadcast %cst_48 : f32 to vector<8x128xf32>
    %146 = arith.addf %144, %145 : vector<8x128xf32>
    %147 = arith.mulf %136, %73 : vector<8x128xf32>
    %148 = arith.mulf %128, %138 : vector<8x128xf32>
    %149 = arith.addf %147, %148 : vector<8x128xf32>
    %150 = math.tanh %149 : vector<8x128xf32>
    %151 = arith.mulf %146, %150 : vector<8x128xf32>
    %152 = arith.truncf %151 : vector<8x128xf32> to vector<8x128xbf16>
    %c1_i32_49 = arith.constant 1 : i32
    %153 = arith.addi %c1_i32_37, %c1_i32_49 : i32
    %c8_i32_50 = arith.constant 8 : i32
    %154 = arith.muli %153, %c8_i32_50 : i32
    %155 = tpu.assume_multiple %154, 8 : i32
    %156 = arith.index_cast %155 : i32 to index
    %c0_51 = arith.constant 0 : index
    %157 = vector.load %arg0[%156, %c0_51] : memref<64x512xf32, #tpu.memory_space<vmem>>, vector<8x512xf32>
    %158 = vector.extract_strided_slice %116 {offsets = [0, 0], sizes = [8, 512], strides = [1, 1]} : vector<8x1024xf32> to vector<8x512xf32>
    %159 = arith.addf %157, %158 : vector<8x512xf32>
    %160 = vector.extract_strided_slice %159 {offsets = [0, 0], sizes = [8, 128], strides = [1, 1]} : vector<8x512xf32> to vector<8x128xf32>
    %cst_52 = arith.constant 5.000000e-01 : f32
    %161 = vector.broadcast %cst_52 : f32 to vector<8x128xf32>
    %162 = arith.mulf %161, %160 : vector<8x128xf32>
    %163 = math.tanh %162 : vector<8x128xf32>
    %cst_53 = arith.constant 5.000000e-01 : f32
    %164 = vector.broadcast %cst_53 : f32 to vector<8x128xf32>
    %165 = arith.mulf %164, %163 : vector<8x128xf32>
    %cst_54 = arith.constant 5.000000e-01 : f32
    %166 = vector.broadcast %cst_54 : f32 to vector<8x128xf32>
    %167 = arith.addf %165, %166 : vector<8x128xf32>
    %168 = vector.extract_strided_slice %159 {offsets = [0, 128], sizes = [8, 128], strides = [1, 1]} : vector<8x512xf32> to vector<8x128xf32>
    %cst_55 = arith.constant 5.000000e-01 : f32
    %169 = vector.broadcast %cst_55 : f32 to vector<8x128xf32>
    %170 = arith.mulf %169, %168 : vector<8x128xf32>
    %171 = math.tanh %170 : vector<8x128xf32>
    %cst_56 = arith.constant 5.000000e-01 : f32
    %172 = vector.broadcast %cst_56 : f32 to vector<8x128xf32>
    %173 = arith.mulf %172, %171 : vector<8x128xf32>
    %cst_57 = arith.constant 5.000000e-01 : f32
    %174 = vector.broadcast %cst_57 : f32 to vector<8x128xf32>
    %175 = arith.addf %173, %174 : vector<8x128xf32>
    %176 = vector.extract_strided_slice %159 {offsets = [0, 256], sizes = [8, 128], strides = [1, 1]} : vector<8x512xf32> to vector<8x128xf32>
    %177 = math.tanh %176 : vector<8x128xf32>
    %178 = vector.extract_strided_slice %159 {offsets = [0, 384], sizes = [8, 128], strides = [1, 1]} : vector<8x512xf32> to vector<8x128xf32>
    %cst_58 = arith.constant 5.000000e-01 : f32
    %179 = vector.broadcast %cst_58 : f32 to vector<8x128xf32>
    %180 = arith.mulf %179, %178 : vector<8x128xf32>
    %181 = math.tanh %180 : vector<8x128xf32>
    %cst_59 = arith.constant 5.000000e-01 : f32
    %182 = vector.broadcast %cst_59 : f32 to vector<8x128xf32>
    %183 = arith.mulf %182, %181 : vector<8x128xf32>
    %cst_60 = arith.constant 5.000000e-01 : f32
    %184 = vector.broadcast %cst_60 : f32 to vector<8x128xf32>
    %185 = arith.addf %183, %184 : vector<8x128xf32>
    %186 = arith.mulf %175, %112 : vector<8x128xf32>
    %187 = arith.mulf %167, %177 : vector<8x128xf32>
    %188 = arith.addf %186, %187 : vector<8x128xf32>
    %189 = math.tanh %188 : vector<8x128xf32>
    %190 = arith.mulf %185, %189 : vector<8x128xf32>
    %191 = arith.truncf %190 : vector<8x128xf32> to vector<8x128xbf16>
    %c2_i32 = arith.constant 2 : i32
    %cst_61 = arith.constant dense<0.000000e+00> : vector<8x1024xf32>
    %192 = tpu.matmul %191, %0, %cst_61 {dimension_numbers = #tpu.dot_dimension_numbers<[1], [0], [0], [1], [0, 0, 1, 1], [], []>} : vector<8x128xbf16>, vector<128x1024xbf16>, vector<8x1024xf32> -> vector<8x1024xf32>
    %cst_62 = arith.constant dense<0.000000e+00> : vector<8x512xf32>
    %193 = tpu.matmul %152, %1, %cst_62 {dimension_numbers = #tpu.dot_dimension_numbers<[1], [0], [0], [1], [0, 0, 1, 1], [], []>} : vector<8x128xbf16>, vector<128x512xbf16>, vector<8x512xf32> -> vector<8x512xf32>
    %194 = vector.extract_strided_slice %192 {offsets = [0, 512], sizes = [8, 512], strides = [1, 1]} : vector<8x1024xf32> to vector<8x512xf32>
    %195 = arith.addf %194, %193 : vector<8x512xf32>
    %196 = arith.addf %195, %4 : vector<8x512xf32>
    %197 = vector.extract_strided_slice %196 {offsets = [0, 0], sizes = [8, 128], strides = [1, 1]} : vector<8x512xf32> to vector<8x128xf32>
    %cst_63 = arith.constant 5.000000e-01 : f32
    %198 = vector.broadcast %cst_63 : f32 to vector<8x128xf32>
    %199 = arith.mulf %198, %197 : vector<8x128xf32>
    %200 = math.tanh %199 : vector<8x128xf32>
    %cst_64 = arith.constant 5.000000e-01 : f32
    %201 = vector.broadcast %cst_64 : f32 to vector<8x128xf32>
    %202 = arith.mulf %201, %200 : vector<8x128xf32>
    %cst_65 = arith.constant 5.000000e-01 : f32
    %203 = vector.broadcast %cst_65 : f32 to vector<8x128xf32>
    %204 = arith.addf %202, %203 : vector<8x128xf32>
    %205 = vector.extract_strided_slice %196 {offsets = [0, 128], sizes = [8, 128], strides = [1, 1]} : vector<8x512xf32> to vector<8x128xf32>
    %cst_66 = arith.constant 5.000000e-01 : f32
    %206 = vector.broadcast %cst_66 : f32 to vector<8x128xf32>
    %207 = arith.mulf %206, %205 : vector<8x128xf32>
    %208 = math.tanh %207 : vector<8x128xf32>
    %cst_67 = arith.constant 5.000000e-01 : f32
    %209 = vector.broadcast %cst_67 : f32 to vector<8x128xf32>
    %210 = arith.mulf %209, %208 : vector<8x128xf32>
    %cst_68 = arith.constant 5.000000e-01 : f32
    %211 = vector.broadcast %cst_68 : f32 to vector<8x128xf32>
    %212 = arith.addf %210, %211 : vector<8x128xf32>
    %213 = vector.extract_strided_slice %196 {offsets = [0, 256], sizes = [8, 128], strides = [1, 1]} : vector<8x512xf32> to vector<8x128xf32>
    %214 = math.tanh %213 : vector<8x128xf32>
    %215 = vector.extract_strided_slice %196 {offsets = [0, 384], sizes = [8, 128], strides = [1, 1]} : vector<8x512xf32> to vector<8x128xf32>
    %cst_69 = arith.constant 5.000000e-01 : f32
    %216 = vector.broadcast %cst_69 : f32 to vector<8x128xf32>
    %217 = arith.mulf %216, %215 : vector<8x128xf32>
    %218 = math.tanh %217 : vector<8x128xf32>
    %cst_70 = arith.constant 5.000000e-01 : f32
    %219 = vector.broadcast %cst_70 : f32 to vector<8x128xf32>
    %220 = arith.mulf %219, %218 : vector<8x128xf32>
    %cst_71 = arith.constant 5.000000e-01 : f32
    %221 = vector.broadcast %cst_71 : f32 to vector<8x128xf32>
    %222 = arith.addf %220, %221 : vector<8x128xf32>
    %223 = arith.mulf %212, %149 : vector<8x128xf32>
    %224 = arith.mulf %204, %214 : vector<8x128xf32>
    %225 = arith.addf %223, %224 : vector<8x128xf32>
    %226 = math.tanh %225 : vector<8x128xf32>
    %227 = arith.mulf %222, %226 : vector<8x128xf32>
    %228 = arith.truncf %227 : vector<8x128xf32> to vector<8x128xbf16>
    %c1_i32_72 = arith.constant 1 : i32
    %229 = arith.addi %c2_i32, %c1_i32_72 : i32
    %c8_i32_73 = arith.constant 8 : i32
    %230 = arith.muli %229, %c8_i32_73 : i32
    %231 = tpu.assume_multiple %230, 8 : i32
    %232 = arith.index_cast %231 : i32 to index
    %c0_74 = arith.constant 0 : index
    %233 = vector.load %arg0[%232, %c0_74] : memref<64x512xf32, #tpu.memory_space<vmem>>, vector<8x512xf32>
    %234 = vector.extract_strided_slice %192 {offsets = [0, 0], sizes = [8, 512], strides = [1, 1]} : vector<8x1024xf32> to vector<8x512xf32>
    %235 = arith.addf %233, %234 : vector<8x512xf32>
    %236 = vector.extract_strided_slice %235 {offsets = [0, 0], sizes = [8, 128], strides = [1, 1]} : vector<8x512xf32> to vector<8x128xf32>
    %cst_75 = arith.constant 5.000000e-01 : f32
    %237 = vector.broadcast %cst_75 : f32 to vector<8x128xf32>
    %238 = arith.mulf %237, %236 : vector<8x128xf32>
    %239 = math.tanh %238 : vector<8x128xf32>
    %cst_76 = arith.constant 5.000000e-01 : f32
    %240 = vector.broadcast %cst_76 : f32 to vector<8x128xf32>
    %241 = arith.mulf %240, %239 : vector<8x128xf32>
    %cst_77 = arith.constant 5.000000e-01 : f32
    %242 = vector.broadcast %cst_77 : f32 to vector<8x128xf32>
    %243 = arith.addf %241, %242 : vector<8x128xf32>
    %244 = vector.extract_strided_slice %235 {offsets = [0, 128], sizes = [8, 128], strides = [1, 1]} : vector<8x512xf32> to vector<8x128xf32>
    %cst_78 = arith.constant 5.000000e-01 : f32
    %245 = vector.broadcast %cst_78 : f32 to vector<8x128xf32>
    %246 = arith.mulf %245, %244 : vector<8x128xf32>
    %247 = math.tanh %246 : vector<8x128xf32>
    %cst_79 = arith.constant 5.000000e-01 : f32
    %248 = vector.broadcast %cst_79 : f32 to vector<8x128xf32>
    %249 = arith.mulf %248, %247 : vector<8x128xf32>
    %cst_80 = arith.constant 5.000000e-01 : f32
    %250 = vector.broadcast %cst_80 : f32 to vector<8x128xf32>
    %251 = arith.addf %249, %250 : vector<8x128xf32>
    %252 = vector.extract_strided_slice %235 {offsets = [0, 256], sizes = [8, 128], strides = [1, 1]} : vector<8x512xf32> to vector<8x128xf32>
    %253 = math.tanh %252 : vector<8x128xf32>
    %254 = vector.extract_strided_slice %235 {offsets = [0, 384], sizes = [8, 128], strides = [1, 1]} : vector<8x512xf32> to vector<8x128xf32>
    %cst_81 = arith.constant 5.000000e-01 : f32
    %255 = vector.broadcast %cst_81 : f32 to vector<8x128xf32>
    %256 = arith.mulf %255, %254 : vector<8x128xf32>
    %257 = math.tanh %256 : vector<8x128xf32>
    %cst_82 = arith.constant 5.000000e-01 : f32
    %258 = vector.broadcast %cst_82 : f32 to vector<8x128xf32>
    %259 = arith.mulf %258, %257 : vector<8x128xf32>
    %cst_83 = arith.constant 5.000000e-01 : f32
    %260 = vector.broadcast %cst_83 : f32 to vector<8x128xf32>
    %261 = arith.addf %259, %260 : vector<8x128xf32>
    %262 = arith.mulf %251, %188 : vector<8x128xf32>
    %263 = arith.mulf %243, %253 : vector<8x128xf32>
    %264 = arith.addf %262, %263 : vector<8x128xf32>
    %265 = math.tanh %264 : vector<8x128xf32>
    %266 = arith.mulf %261, %265 : vector<8x128xf32>
    %267 = arith.truncf %266 : vector<8x128xf32> to vector<8x128xbf16>
    %c3_i32 = arith.constant 3 : i32
    %cst_84 = arith.constant dense<0.000000e+00> : vector<8x1024xf32>
    %268 = tpu.matmul %267, %0, %cst_84 {dimension_numbers = #tpu.dot_dimension_numbers<[1], [0], [0], [1], [0, 0, 1, 1], [], []>} : vector<8x128xbf16>, vector<128x1024xbf16>, vector<8x1024xf32> -> vector<8x1024xf32>
    %cst_85 = arith.constant dense<0.000000e+00> : vector<8x512xf32>
    %269 = tpu.matmul %228, %1, %cst_85 {dimension_numbers = #tpu.dot_dimension_numbers<[1], [0], [0], [1], [0, 0, 1, 1], [], []>} : vector<8x128xbf16>, vector<128x512xbf16>, vector<8x512xf32> -> vector<8x512xf32>
    %270 = vector.extract_strided_slice %268 {offsets = [0, 512], sizes = [8, 512], strides = [1, 1]} : vector<8x1024xf32> to vector<8x512xf32>
    %271 = arith.addf %270, %269 : vector<8x512xf32>
    %272 = arith.addf %271, %4 : vector<8x512xf32>
    %273 = vector.extract_strided_slice %272 {offsets = [0, 0], sizes = [8, 128], strides = [1, 1]} : vector<8x512xf32> to vector<8x128xf32>
    %cst_86 = arith.constant 5.000000e-01 : f32
    %274 = vector.broadcast %cst_86 : f32 to vector<8x128xf32>
    %275 = arith.mulf %274, %273 : vector<8x128xf32>
    %276 = math.tanh %275 : vector<8x128xf32>
    %cst_87 = arith.constant 5.000000e-01 : f32
    %277 = vector.broadcast %cst_87 : f32 to vector<8x128xf32>
    %278 = arith.mulf %277, %276 : vector<8x128xf32>
    %cst_88 = arith.constant 5.000000e-01 : f32
    %279 = vector.broadcast %cst_88 : f32 to vector<8x128xf32>
    %280 = arith.addf %278, %279 : vector<8x128xf32>
    %281 = vector.extract_strided_slice %272 {offsets = [0, 128], sizes = [8, 128], strides = [1, 1]} : vector<8x512xf32> to vector<8x128xf32>
    %cst_89 = arith.constant 5.000000e-01 : f32
    %282 = vector.broadcast %cst_89 : f32 to vector<8x128xf32>
    %283 = arith.mulf %282, %281 : vector<8x128xf32>
    %284 = math.tanh %283 : vector<8x128xf32>
    %cst_90 = arith.constant 5.000000e-01 : f32
    %285 = vector.broadcast %cst_90 : f32 to vector<8x128xf32>
    %286 = arith.mulf %285, %284 : vector<8x128xf32>
    %cst_91 = arith.constant 5.000000e-01 : f32
    %287 = vector.broadcast %cst_91 : f32 to vector<8x128xf32>
    %288 = arith.addf %286, %287 : vector<8x128xf32>
    %289 = vector.extract_strided_slice %272 {offsets = [0, 256], sizes = [8, 128], strides = [1, 1]} : vector<8x512xf32> to vector<8x128xf32>
    %290 = math.tanh %289 : vector<8x128xf32>
    %291 = vector.extract_strided_slice %272 {offsets = [0, 384], sizes = [8, 128], strides = [1, 1]} : vector<8x512xf32> to vector<8x128xf32>
    %cst_92 = arith.constant 5.000000e-01 : f32
    %292 = vector.broadcast %cst_92 : f32 to vector<8x128xf32>
    %293 = arith.mulf %292, %291 : vector<8x128xf32>
    %294 = math.tanh %293 : vector<8x128xf32>
    %cst_93 = arith.constant 5.000000e-01 : f32
    %295 = vector.broadcast %cst_93 : f32 to vector<8x128xf32>
    %296 = arith.mulf %295, %294 : vector<8x128xf32>
    %cst_94 = arith.constant 5.000000e-01 : f32
    %297 = vector.broadcast %cst_94 : f32 to vector<8x128xf32>
    %298 = arith.addf %296, %297 : vector<8x128xf32>
    %299 = arith.mulf %288, %225 : vector<8x128xf32>
    %300 = arith.mulf %280, %290 : vector<8x128xf32>
    %301 = arith.addf %299, %300 : vector<8x128xf32>
    %302 = math.tanh %301 : vector<8x128xf32>
    %303 = arith.mulf %298, %302 : vector<8x128xf32>
    %304 = arith.truncf %303 : vector<8x128xf32> to vector<8x128xbf16>
    %c1_i32_95 = arith.constant 1 : i32
    %305 = arith.addi %c3_i32, %c1_i32_95 : i32
    %c8_i32_96 = arith.constant 8 : i32
    %306 = arith.muli %305, %c8_i32_96 : i32
    %307 = tpu.assume_multiple %306, 8 : i32
    %308 = arith.index_cast %307 : i32 to index
    %c0_97 = arith.constant 0 : index
    %309 = vector.load %arg0[%308, %c0_97] : memref<64x512xf32, #tpu.memory_space<vmem>>, vector<8x512xf32>
    %310 = vector.extract_strided_slice %268 {offsets = [0, 0], sizes = [8, 512], strides = [1, 1]} : vector<8x1024xf32> to vector<8x512xf32>
    %311 = arith.addf %309, %310 : vector<8x512xf32>
    %312 = vector.extract_strided_slice %311 {offsets = [0, 0], sizes = [8, 128], strides = [1, 1]} : vector<8x512xf32> to vector<8x128xf32>
    %cst_98 = arith.constant 5.000000e-01 : f32
    %313 = vector.broadcast %cst_98 : f32 to vector<8x128xf32>
    %314 = arith.mulf %313, %312 : vector<8x128xf32>
    %315 = math.tanh %314 : vector<8x128xf32>
    %cst_99 = arith.constant 5.000000e-01 : f32
    %316 = vector.broadcast %cst_99 : f32 to vector<8x128xf32>
    %317 = arith.mulf %316, %315 : vector<8x128xf32>
    %cst_100 = arith.constant 5.000000e-01 : f32
    %318 = vector.broadcast %cst_100 : f32 to vector<8x128xf32>
    %319 = arith.addf %317, %318 : vector<8x128xf32>
    %320 = vector.extract_strided_slice %311 {offsets = [0, 128], sizes = [8, 128], strides = [1, 1]} : vector<8x512xf32> to vector<8x128xf32>
    %cst_101 = arith.constant 5.000000e-01 : f32
    %321 = vector.broadcast %cst_101 : f32 to vector<8x128xf32>
    %322 = arith.mulf %321, %320 : vector<8x128xf32>
    %323 = math.tanh %322 : vector<8x128xf32>
    %cst_102 = arith.constant 5.000000e-01 : f32
    %324 = vector.broadcast %cst_102 : f32 to vector<8x128xf32>
    %325 = arith.mulf %324, %323 : vector<8x128xf32>
    %cst_103 = arith.constant 5.000000e-01 : f32
    %326 = vector.broadcast %cst_103 : f32 to vector<8x128xf32>
    %327 = arith.addf %325, %326 : vector<8x128xf32>
    %328 = vector.extract_strided_slice %311 {offsets = [0, 256], sizes = [8, 128], strides = [1, 1]} : vector<8x512xf32> to vector<8x128xf32>
    %329 = math.tanh %328 : vector<8x128xf32>
    %330 = vector.extract_strided_slice %311 {offsets = [0, 384], sizes = [8, 128], strides = [1, 1]} : vector<8x512xf32> to vector<8x128xf32>
    %cst_104 = arith.constant 5.000000e-01 : f32
    %331 = vector.broadcast %cst_104 : f32 to vector<8x128xf32>
    %332 = arith.mulf %331, %330 : vector<8x128xf32>
    %333 = math.tanh %332 : vector<8x128xf32>
    %cst_105 = arith.constant 5.000000e-01 : f32
    %334 = vector.broadcast %cst_105 : f32 to vector<8x128xf32>
    %335 = arith.mulf %334, %333 : vector<8x128xf32>
    %cst_106 = arith.constant 5.000000e-01 : f32
    %336 = vector.broadcast %cst_106 : f32 to vector<8x128xf32>
    %337 = arith.addf %335, %336 : vector<8x128xf32>
    %338 = arith.mulf %327, %264 : vector<8x128xf32>
    %339 = arith.mulf %319, %329 : vector<8x128xf32>
    %340 = arith.addf %338, %339 : vector<8x128xf32>
    %341 = math.tanh %340 : vector<8x128xf32>
    %342 = arith.mulf %337, %341 : vector<8x128xf32>
    %343 = arith.truncf %342 : vector<8x128xf32> to vector<8x128xbf16>
    %c4_i32 = arith.constant 4 : i32
    %cst_107 = arith.constant dense<0.000000e+00> : vector<8x1024xf32>
    %344 = tpu.matmul %343, %0, %cst_107 {dimension_numbers = #tpu.dot_dimension_numbers<[1], [0], [0], [1], [0, 0, 1, 1], [], []>} : vector<8x128xbf16>, vector<128x1024xbf16>, vector<8x1024xf32> -> vector<8x1024xf32>
    %cst_108 = arith.constant dense<0.000000e+00> : vector<8x512xf32>
    %345 = tpu.matmul %304, %1, %cst_108 {dimension_numbers = #tpu.dot_dimension_numbers<[1], [0], [0], [1], [0, 0, 1, 1], [], []>} : vector<8x128xbf16>, vector<128x512xbf16>, vector<8x512xf32> -> vector<8x512xf32>
    %346 = vector.extract_strided_slice %344 {offsets = [0, 512], sizes = [8, 512], strides = [1, 1]} : vector<8x1024xf32> to vector<8x512xf32>
    %347 = arith.addf %346, %345 : vector<8x512xf32>
    %348 = arith.addf %347, %4 : vector<8x512xf32>
    %349 = vector.extract_strided_slice %348 {offsets = [0, 0], sizes = [8, 128], strides = [1, 1]} : vector<8x512xf32> to vector<8x128xf32>
    %cst_109 = arith.constant 5.000000e-01 : f32
    %350 = vector.broadcast %cst_109 : f32 to vector<8x128xf32>
    %351 = arith.mulf %350, %349 : vector<8x128xf32>
    %352 = math.tanh %351 : vector<8x128xf32>
    %cst_110 = arith.constant 5.000000e-01 : f32
    %353 = vector.broadcast %cst_110 : f32 to vector<8x128xf32>
    %354 = arith.mulf %353, %352 : vector<8x128xf32>
    %cst_111 = arith.constant 5.000000e-01 : f32
    %355 = vector.broadcast %cst_111 : f32 to vector<8x128xf32>
    %356 = arith.addf %354, %355 : vector<8x128xf32>
    %357 = vector.extract_strided_slice %348 {offsets = [0, 128], sizes = [8, 128], strides = [1, 1]} : vector<8x512xf32> to vector<8x128xf32>
    %cst_112 = arith.constant 5.000000e-01 : f32
    %358 = vector.broadcast %cst_112 : f32 to vector<8x128xf32>
    %359 = arith.mulf %358, %357 : vector<8x128xf32>
    %360 = math.tanh %359 : vector<8x128xf32>
    %cst_113 = arith.constant 5.000000e-01 : f32
    %361 = vector.broadcast %cst_113 : f32 to vector<8x128xf32>
    %362 = arith.mulf %361, %360 : vector<8x128xf32>
    %cst_114 = arith.constant 5.000000e-01 : f32
    %363 = vector.broadcast %cst_114 : f32 to vector<8x128xf32>
    %364 = arith.addf %362, %363 : vector<8x128xf32>
    %365 = vector.extract_strided_slice %348 {offsets = [0, 256], sizes = [8, 128], strides = [1, 1]} : vector<8x512xf32> to vector<8x128xf32>
    %366 = math.tanh %365 : vector<8x128xf32>
    %367 = vector.extract_strided_slice %348 {offsets = [0, 384], sizes = [8, 128], strides = [1, 1]} : vector<8x512xf32> to vector<8x128xf32>
    %cst_115 = arith.constant 5.000000e-01 : f32
    %368 = vector.broadcast %cst_115 : f32 to vector<8x128xf32>
    %369 = arith.mulf %368, %367 : vector<8x128xf32>
    %370 = math.tanh %369 : vector<8x128xf32>
    %cst_116 = arith.constant 5.000000e-01 : f32
    %371 = vector.broadcast %cst_116 : f32 to vector<8x128xf32>
    %372 = arith.mulf %371, %370 : vector<8x128xf32>
    %cst_117 = arith.constant 5.000000e-01 : f32
    %373 = vector.broadcast %cst_117 : f32 to vector<8x128xf32>
    %374 = arith.addf %372, %373 : vector<8x128xf32>
    %375 = arith.mulf %364, %301 : vector<8x128xf32>
    %376 = arith.mulf %356, %366 : vector<8x128xf32>
    %377 = arith.addf %375, %376 : vector<8x128xf32>
    %378 = math.tanh %377 : vector<8x128xf32>
    %379 = arith.mulf %374, %378 : vector<8x128xf32>
    %380 = arith.truncf %379 : vector<8x128xf32> to vector<8x128xbf16>
    %c1_i32_118 = arith.constant 1 : i32
    %381 = arith.addi %c4_i32, %c1_i32_118 : i32
    %c8_i32_119 = arith.constant 8 : i32
    %382 = arith.muli %381, %c8_i32_119 : i32
    %383 = tpu.assume_multiple %382, 8 : i32
    %384 = arith.index_cast %383 : i32 to index
    %c0_120 = arith.constant 0 : index
    %385 = vector.load %arg0[%384, %c0_120] : memref<64x512xf32, #tpu.memory_space<vmem>>, vector<8x512xf32>
    %386 = vector.extract_strided_slice %344 {offsets = [0, 0], sizes = [8, 512], strides = [1, 1]} : vector<8x1024xf32> to vector<8x512xf32>
    %387 = arith.addf %385, %386 : vector<8x512xf32>
    %388 = vector.extract_strided_slice %387 {offsets = [0, 0], sizes = [8, 128], strides = [1, 1]} : vector<8x512xf32> to vector<8x128xf32>
    %cst_121 = arith.constant 5.000000e-01 : f32
    %389 = vector.broadcast %cst_121 : f32 to vector<8x128xf32>
    %390 = arith.mulf %389, %388 : vector<8x128xf32>
    %391 = math.tanh %390 : vector<8x128xf32>
    %cst_122 = arith.constant 5.000000e-01 : f32
    %392 = vector.broadcast %cst_122 : f32 to vector<8x128xf32>
    %393 = arith.mulf %392, %391 : vector<8x128xf32>
    %cst_123 = arith.constant 5.000000e-01 : f32
    %394 = vector.broadcast %cst_123 : f32 to vector<8x128xf32>
    %395 = arith.addf %393, %394 : vector<8x128xf32>
    %396 = vector.extract_strided_slice %387 {offsets = [0, 128], sizes = [8, 128], strides = [1, 1]} : vector<8x512xf32> to vector<8x128xf32>
    %cst_124 = arith.constant 5.000000e-01 : f32
    %397 = vector.broadcast %cst_124 : f32 to vector<8x128xf32>
    %398 = arith.mulf %397, %396 : vector<8x128xf32>
    %399 = math.tanh %398 : vector<8x128xf32>
    %cst_125 = arith.constant 5.000000e-01 : f32
    %400 = vector.broadcast %cst_125 : f32 to vector<8x128xf32>
    %401 = arith.mulf %400, %399 : vector<8x128xf32>
    %cst_126 = arith.constant 5.000000e-01 : f32
    %402 = vector.broadcast %cst_126 : f32 to vector<8x128xf32>
    %403 = arith.addf %401, %402 : vector<8x128xf32>
    %404 = vector.extract_strided_slice %387 {offsets = [0, 256], sizes = [8, 128], strides = [1, 1]} : vector<8x512xf32> to vector<8x128xf32>
    %405 = math.tanh %404 : vector<8x128xf32>
    %406 = vector.extract_strided_slice %387 {offsets = [0, 384], sizes = [8, 128], strides = [1, 1]} : vector<8x512xf32> to vector<8x128xf32>
    %cst_127 = arith.constant 5.000000e-01 : f32
    %407 = vector.broadcast %cst_127 : f32 to vector<8x128xf32>
    %408 = arith.mulf %407, %406 : vector<8x128xf32>
    %409 = math.tanh %408 : vector<8x128xf32>
    %cst_128 = arith.constant 5.000000e-01 : f32
    %410 = vector.broadcast %cst_128 : f32 to vector<8x128xf32>
    %411 = arith.mulf %410, %409 : vector<8x128xf32>
    %cst_129 = arith.constant 5.000000e-01 : f32
    %412 = vector.broadcast %cst_129 : f32 to vector<8x128xf32>
    %413 = arith.addf %411, %412 : vector<8x128xf32>
    %414 = arith.mulf %403, %340 : vector<8x128xf32>
    %415 = arith.mulf %395, %405 : vector<8x128xf32>
    %416 = arith.addf %414, %415 : vector<8x128xf32>
    %417 = math.tanh %416 : vector<8x128xf32>
    %418 = arith.mulf %413, %417 : vector<8x128xf32>
    %419 = arith.truncf %418 : vector<8x128xf32> to vector<8x128xbf16>
    %c5_i32 = arith.constant 5 : i32
    %cst_130 = arith.constant dense<0.000000e+00> : vector<8x1024xf32>
    %420 = tpu.matmul %419, %0, %cst_130 {dimension_numbers = #tpu.dot_dimension_numbers<[1], [0], [0], [1], [0, 0, 1, 1], [], []>} : vector<8x128xbf16>, vector<128x1024xbf16>, vector<8x1024xf32> -> vector<8x1024xf32>
    %cst_131 = arith.constant dense<0.000000e+00> : vector<8x512xf32>
    %421 = tpu.matmul %380, %1, %cst_131 {dimension_numbers = #tpu.dot_dimension_numbers<[1], [0], [0], [1], [0, 0, 1, 1], [], []>} : vector<8x128xbf16>, vector<128x512xbf16>, vector<8x512xf32> -> vector<8x512xf32>
    %422 = vector.extract_strided_slice %420 {offsets = [0, 512], sizes = [8, 512], strides = [1, 1]} : vector<8x1024xf32> to vector<8x512xf32>
    %423 = arith.addf %422, %421 : vector<8x512xf32>
    %424 = arith.addf %423, %4 : vector<8x512xf32>
    %425 = vector.extract_strided_slice %424 {offsets = [0, 0], sizes = [8, 128], strides = [1, 1]} : vector<8x512xf32> to vector<8x128xf32>
    %cst_132 = arith.constant 5.000000e-01 : f32
    %426 = vector.broadcast %cst_132 : f32 to vector<8x128xf32>
    %427 = arith.mulf %426, %425 : vector<8x128xf32>
    %428 = math.tanh %427 : vector<8x128xf32>
    %cst_133 = arith.constant 5.000000e-01 : f32
    %429 = vector.broadcast %cst_133 : f32 to vector<8x128xf32>
    %430 = arith.mulf %429, %428 : vector<8x128xf32>
    %cst_134 = arith.constant 5.000000e-01 : f32
    %431 = vector.broadcast %cst_134 : f32 to vector<8x128xf32>
    %432 = arith.addf %430, %431 : vector<8x128xf32>
    %433 = vector.extract_strided_slice %424 {offsets = [0, 128], sizes = [8, 128], strides = [1, 1]} : vector<8x512xf32> to vector<8x128xf32>
    %cst_135 = arith.constant 5.000000e-01 : f32
    %434 = vector.broadcast %cst_135 : f32 to vector<8x128xf32>
    %435 = arith.mulf %434, %433 : vector<8x128xf32>
    %436 = math.tanh %435 : vector<8x128xf32>
    %cst_136 = arith.constant 5.000000e-01 : f32
    %437 = vector.broadcast %cst_136 : f32 to vector<8x128xf32>
    %438 = arith.mulf %437, %436 : vector<8x128xf32>
    %cst_137 = arith.constant 5.000000e-01 : f32
    %439 = vector.broadcast %cst_137 : f32 to vector<8x128xf32>
    %440 = arith.addf %438, %439 : vector<8x128xf32>
    %441 = vector.extract_strided_slice %424 {offsets = [0, 256], sizes = [8, 128], strides = [1, 1]} : vector<8x512xf32> to vector<8x128xf32>
    %442 = math.tanh %441 : vector<8x128xf32>
    %443 = vector.extract_strided_slice %424 {offsets = [0, 384], sizes = [8, 128], strides = [1, 1]} : vector<8x512xf32> to vector<8x128xf32>
    %cst_138 = arith.constant 5.000000e-01 : f32
    %444 = vector.broadcast %cst_138 : f32 to vector<8x128xf32>
    %445 = arith.mulf %444, %443 : vector<8x128xf32>
    %446 = math.tanh %445 : vector<8x128xf32>
    %cst_139 = arith.constant 5.000000e-01 : f32
    %447 = vector.broadcast %cst_139 : f32 to vector<8x128xf32>
    %448 = arith.mulf %447, %446 : vector<8x128xf32>
    %cst_140 = arith.constant 5.000000e-01 : f32
    %449 = vector.broadcast %cst_140 : f32 to vector<8x128xf32>
    %450 = arith.addf %448, %449 : vector<8x128xf32>
    %451 = arith.mulf %440, %377 : vector<8x128xf32>
    %452 = arith.mulf %432, %442 : vector<8x128xf32>
    %453 = arith.addf %451, %452 : vector<8x128xf32>
    %454 = math.tanh %453 : vector<8x128xf32>
    %455 = arith.mulf %450, %454 : vector<8x128xf32>
    %456 = arith.truncf %455 : vector<8x128xf32> to vector<8x128xbf16>
    %c1_i32_141 = arith.constant 1 : i32
    %457 = arith.addi %c5_i32, %c1_i32_141 : i32
    %c8_i32_142 = arith.constant 8 : i32
    %458 = arith.muli %457, %c8_i32_142 : i32
    %459 = tpu.assume_multiple %458, 8 : i32
    %460 = arith.index_cast %459 : i32 to index
    %c0_143 = arith.constant 0 : index
    %461 = vector.load %arg0[%460, %c0_143] : memref<64x512xf32, #tpu.memory_space<vmem>>, vector<8x512xf32>
    %462 = vector.extract_strided_slice %420 {offsets = [0, 0], sizes = [8, 512], strides = [1, 1]} : vector<8x1024xf32> to vector<8x512xf32>
    %463 = arith.addf %461, %462 : vector<8x512xf32>
    %464 = vector.extract_strided_slice %463 {offsets = [0, 0], sizes = [8, 128], strides = [1, 1]} : vector<8x512xf32> to vector<8x128xf32>
    %cst_144 = arith.constant 5.000000e-01 : f32
    %465 = vector.broadcast %cst_144 : f32 to vector<8x128xf32>
    %466 = arith.mulf %465, %464 : vector<8x128xf32>
    %467 = math.tanh %466 : vector<8x128xf32>
    %cst_145 = arith.constant 5.000000e-01 : f32
    %468 = vector.broadcast %cst_145 : f32 to vector<8x128xf32>
    %469 = arith.mulf %468, %467 : vector<8x128xf32>
    %cst_146 = arith.constant 5.000000e-01 : f32
    %470 = vector.broadcast %cst_146 : f32 to vector<8x128xf32>
    %471 = arith.addf %469, %470 : vector<8x128xf32>
    %472 = vector.extract_strided_slice %463 {offsets = [0, 128], sizes = [8, 128], strides = [1, 1]} : vector<8x512xf32> to vector<8x128xf32>
    %cst_147 = arith.constant 5.000000e-01 : f32
    %473 = vector.broadcast %cst_147 : f32 to vector<8x128xf32>
    %474 = arith.mulf %473, %472 : vector<8x128xf32>
    %475 = math.tanh %474 : vector<8x128xf32>
    %cst_148 = arith.constant 5.000000e-01 : f32
    %476 = vector.broadcast %cst_148 : f32 to vector<8x128xf32>
    %477 = arith.mulf %476, %475 : vector<8x128xf32>
    %cst_149 = arith.constant 5.000000e-01 : f32
    %478 = vector.broadcast %cst_149 : f32 to vector<8x128xf32>
    %479 = arith.addf %477, %478 : vector<8x128xf32>
    %480 = vector.extract_strided_slice %463 {offsets = [0, 256], sizes = [8, 128], strides = [1, 1]} : vector<8x512xf32> to vector<8x128xf32>
    %481 = math.tanh %480 : vector<8x128xf32>
    %482 = vector.extract_strided_slice %463 {offsets = [0, 384], sizes = [8, 128], strides = [1, 1]} : vector<8x512xf32> to vector<8x128xf32>
    %cst_150 = arith.constant 5.000000e-01 : f32
    %483 = vector.broadcast %cst_150 : f32 to vector<8x128xf32>
    %484 = arith.mulf %483, %482 : vector<8x128xf32>
    %485 = math.tanh %484 : vector<8x128xf32>
    %cst_151 = arith.constant 5.000000e-01 : f32
    %486 = vector.broadcast %cst_151 : f32 to vector<8x128xf32>
    %487 = arith.mulf %486, %485 : vector<8x128xf32>
    %cst_152 = arith.constant 5.000000e-01 : f32
    %488 = vector.broadcast %cst_152 : f32 to vector<8x128xf32>
    %489 = arith.addf %487, %488 : vector<8x128xf32>
    %490 = arith.mulf %479, %416 : vector<8x128xf32>
    %491 = arith.mulf %471, %481 : vector<8x128xf32>
    %492 = arith.addf %490, %491 : vector<8x128xf32>
    %493 = math.tanh %492 : vector<8x128xf32>
    %494 = arith.mulf %489, %493 : vector<8x128xf32>
    %495 = arith.truncf %494 : vector<8x128xf32> to vector<8x128xbf16>
    %c6_i32 = arith.constant 6 : i32
    %cst_153 = arith.constant dense<0.000000e+00> : vector<8x1024xf32>
    %496 = tpu.matmul %495, %0, %cst_153 {dimension_numbers = #tpu.dot_dimension_numbers<[1], [0], [0], [1], [0, 0, 1, 1], [], []>} : vector<8x128xbf16>, vector<128x1024xbf16>, vector<8x1024xf32> -> vector<8x1024xf32>
    %cst_154 = arith.constant dense<0.000000e+00> : vector<8x512xf32>
    %497 = tpu.matmul %456, %1, %cst_154 {dimension_numbers = #tpu.dot_dimension_numbers<[1], [0], [0], [1], [0, 0, 1, 1], [], []>} : vector<8x128xbf16>, vector<128x512xbf16>, vector<8x512xf32> -> vector<8x512xf32>
    %498 = vector.extract_strided_slice %496 {offsets = [0, 512], sizes = [8, 512], strides = [1, 1]} : vector<8x1024xf32> to vector<8x512xf32>
    %499 = arith.addf %498, %497 : vector<8x512xf32>
    %500 = arith.addf %499, %4 : vector<8x512xf32>
    %501 = vector.extract_strided_slice %500 {offsets = [0, 0], sizes = [8, 128], strides = [1, 1]} : vector<8x512xf32> to vector<8x128xf32>
    %cst_155 = arith.constant 5.000000e-01 : f32
    %502 = vector.broadcast %cst_155 : f32 to vector<8x128xf32>
    %503 = arith.mulf %502, %501 : vector<8x128xf32>
    %504 = math.tanh %503 : vector<8x128xf32>
    %cst_156 = arith.constant 5.000000e-01 : f32
    %505 = vector.broadcast %cst_156 : f32 to vector<8x128xf32>
    %506 = arith.mulf %505, %504 : vector<8x128xf32>
    %cst_157 = arith.constant 5.000000e-01 : f32
    %507 = vector.broadcast %cst_157 : f32 to vector<8x128xf32>
    %508 = arith.addf %506, %507 : vector<8x128xf32>
    %509 = vector.extract_strided_slice %500 {offsets = [0, 128], sizes = [8, 128], strides = [1, 1]} : vector<8x512xf32> to vector<8x128xf32>
    %cst_158 = arith.constant 5.000000e-01 : f32
    %510 = vector.broadcast %cst_158 : f32 to vector<8x128xf32>
    %511 = arith.mulf %510, %509 : vector<8x128xf32>
    %512 = math.tanh %511 : vector<8x128xf32>
    %cst_159 = arith.constant 5.000000e-01 : f32
    %513 = vector.broadcast %cst_159 : f32 to vector<8x128xf32>
    %514 = arith.mulf %513, %512 : vector<8x128xf32>
    %cst_160 = arith.constant 5.000000e-01 : f32
    %515 = vector.broadcast %cst_160 : f32 to vector<8x128xf32>
    %516 = arith.addf %514, %515 : vector<8x128xf32>
    %517 = vector.extract_strided_slice %500 {offsets = [0, 256], sizes = [8, 128], strides = [1, 1]} : vector<8x512xf32> to vector<8x128xf32>
    %518 = math.tanh %517 : vector<8x128xf32>
    %519 = vector.extract_strided_slice %500 {offsets = [0, 384], sizes = [8, 128], strides = [1, 1]} : vector<8x512xf32> to vector<8x128xf32>
    %cst_161 = arith.constant 5.000000e-01 : f32
    %520 = vector.broadcast %cst_161 : f32 to vector<8x128xf32>
    %521 = arith.mulf %520, %519 : vector<8x128xf32>
    %522 = math.tanh %521 : vector<8x128xf32>
    %cst_162 = arith.constant 5.000000e-01 : f32
    %523 = vector.broadcast %cst_162 : f32 to vector<8x128xf32>
    %524 = arith.mulf %523, %522 : vector<8x128xf32>
    %cst_163 = arith.constant 5.000000e-01 : f32
    %525 = vector.broadcast %cst_163 : f32 to vector<8x128xf32>
    %526 = arith.addf %524, %525 : vector<8x128xf32>
    %527 = arith.mulf %516, %453 : vector<8x128xf32>
    %528 = arith.mulf %508, %518 : vector<8x128xf32>
    %529 = arith.addf %527, %528 : vector<8x128xf32>
    %530 = math.tanh %529 : vector<8x128xf32>
    %531 = arith.mulf %526, %530 : vector<8x128xf32>
    %532 = arith.truncf %531 : vector<8x128xf32> to vector<8x128xbf16>
    %c1_i32_164 = arith.constant 1 : i32
    %533 = arith.addi %c6_i32, %c1_i32_164 : i32
    %c8_i32_165 = arith.constant 8 : i32
    %534 = arith.muli %533, %c8_i32_165 : i32
    %535 = tpu.assume_multiple %534, 8 : i32
    %536 = arith.index_cast %535 : i32 to index
    %c0_166 = arith.constant 0 : index
    %537 = vector.load %arg0[%536, %c0_166] : memref<64x512xf32, #tpu.memory_space<vmem>>, vector<8x512xf32>
    %538 = vector.extract_strided_slice %496 {offsets = [0, 0], sizes = [8, 512], strides = [1, 1]} : vector<8x1024xf32> to vector<8x512xf32>
    %539 = arith.addf %537, %538 : vector<8x512xf32>
    %540 = vector.extract_strided_slice %539 {offsets = [0, 0], sizes = [8, 128], strides = [1, 1]} : vector<8x512xf32> to vector<8x128xf32>
    %cst_167 = arith.constant 5.000000e-01 : f32
    %541 = vector.broadcast %cst_167 : f32 to vector<8x128xf32>
    %542 = arith.mulf %541, %540 : vector<8x128xf32>
    %543 = math.tanh %542 : vector<8x128xf32>
    %cst_168 = arith.constant 5.000000e-01 : f32
    %544 = vector.broadcast %cst_168 : f32 to vector<8x128xf32>
    %545 = arith.mulf %544, %543 : vector<8x128xf32>
    %cst_169 = arith.constant 5.000000e-01 : f32
    %546 = vector.broadcast %cst_169 : f32 to vector<8x128xf32>
    %547 = arith.addf %545, %546 : vector<8x128xf32>
    %548 = vector.extract_strided_slice %539 {offsets = [0, 128], sizes = [8, 128], strides = [1, 1]} : vector<8x512xf32> to vector<8x128xf32>
    %cst_170 = arith.constant 5.000000e-01 : f32
    %549 = vector.broadcast %cst_170 : f32 to vector<8x128xf32>
    %550 = arith.mulf %549, %548 : vector<8x128xf32>
    %551 = math.tanh %550 : vector<8x128xf32>
    %cst_171 = arith.constant 5.000000e-01 : f32
    %552 = vector.broadcast %cst_171 : f32 to vector<8x128xf32>
    %553 = arith.mulf %552, %551 : vector<8x128xf32>
    %cst_172 = arith.constant 5.000000e-01 : f32
    %554 = vector.broadcast %cst_172 : f32 to vector<8x128xf32>
    %555 = arith.addf %553, %554 : vector<8x128xf32>
    %556 = vector.extract_strided_slice %539 {offsets = [0, 256], sizes = [8, 128], strides = [1, 1]} : vector<8x512xf32> to vector<8x128xf32>
    %557 = math.tanh %556 : vector<8x128xf32>
    %558 = vector.extract_strided_slice %539 {offsets = [0, 384], sizes = [8, 128], strides = [1, 1]} : vector<8x512xf32> to vector<8x128xf32>
    %cst_173 = arith.constant 5.000000e-01 : f32
    %559 = vector.broadcast %cst_173 : f32 to vector<8x128xf32>
    %560 = arith.mulf %559, %558 : vector<8x128xf32>
    %561 = math.tanh %560 : vector<8x128xf32>
    %cst_174 = arith.constant 5.000000e-01 : f32
    %562 = vector.broadcast %cst_174 : f32 to vector<8x128xf32>
    %563 = arith.mulf %562, %561 : vector<8x128xf32>
    %cst_175 = arith.constant 5.000000e-01 : f32
    %564 = vector.broadcast %cst_175 : f32 to vector<8x128xf32>
    %565 = arith.addf %563, %564 : vector<8x128xf32>
    %566 = arith.mulf %555, %492 : vector<8x128xf32>
    %567 = arith.mulf %547, %557 : vector<8x128xf32>
    %568 = arith.addf %566, %567 : vector<8x128xf32>
    %569 = math.tanh %568 : vector<8x128xf32>
    %570 = arith.mulf %565, %569 : vector<8x128xf32>
    %571 = arith.truncf %570 : vector<8x128xf32> to vector<8x128xbf16>
    %c7_i32 = arith.constant 7 : i32
    %572 = vector.extract_strided_slice %0 {offsets = [0, 512], sizes = [128, 512], strides = [1, 1]} : vector<128x1024xbf16> to vector<128x512xbf16>
    %cst_176 = arith.constant dense<0.000000e+00> : vector<8x512xf32>
    %573 = tpu.matmul %571, %572, %cst_176 {dimension_numbers = #tpu.dot_dimension_numbers<[1], [0], [0], [1], [0, 0, 1, 1], [], []>} : vector<8x128xbf16>, vector<128x512xbf16>, vector<8x512xf32> -> vector<8x512xf32>
    %cst_177 = arith.constant dense<0.000000e+00> : vector<8x512xf32>
    %574 = tpu.matmul %532, %1, %cst_177 {dimension_numbers = #tpu.dot_dimension_numbers<[1], [0], [0], [1], [0, 0, 1, 1], [], []>} : vector<8x128xbf16>, vector<128x512xbf16>, vector<8x512xf32> -> vector<8x512xf32>
    %575 = arith.addf %573, %574 : vector<8x512xf32>
    %576 = arith.addf %575, %4 : vector<8x512xf32>
    %577 = vector.extract_strided_slice %576 {offsets = [0, 0], sizes = [8, 128], strides = [1, 1]} : vector<8x512xf32> to vector<8x128xf32>
    %cst_178 = arith.constant 5.000000e-01 : f32
    %578 = vector.broadcast %cst_178 : f32 to vector<8x128xf32>
    %579 = arith.mulf %578, %577 : vector<8x128xf32>
    %580 = math.tanh %579 : vector<8x128xf32>
    %cst_179 = arith.constant 5.000000e-01 : f32
    %581 = vector.broadcast %cst_179 : f32 to vector<8x128xf32>
    %582 = arith.mulf %581, %580 : vector<8x128xf32>
    %cst_180 = arith.constant 5.000000e-01 : f32
    %583 = vector.broadcast %cst_180 : f32 to vector<8x128xf32>
    %584 = arith.addf %582, %583 : vector<8x128xf32>
    %585 = vector.extract_strided_slice %576 {offsets = [0, 128], sizes = [8, 128], strides = [1, 1]} : vector<8x512xf32> to vector<8x128xf32>
    %cst_181 = arith.constant 5.000000e-01 : f32
    %586 = vector.broadcast %cst_181 : f32 to vector<8x128xf32>
    %587 = arith.mulf %586, %585 : vector<8x128xf32>
    %588 = math.tanh %587 : vector<8x128xf32>
    %cst_182 = arith.constant 5.000000e-01 : f32
    %589 = vector.broadcast %cst_182 : f32 to vector<8x128xf32>
    %590 = arith.mulf %589, %588 : vector<8x128xf32>
    %cst_183 = arith.constant 5.000000e-01 : f32
    %591 = vector.broadcast %cst_183 : f32 to vector<8x128xf32>
    %592 = arith.addf %590, %591 : vector<8x128xf32>
    %593 = vector.extract_strided_slice %576 {offsets = [0, 256], sizes = [8, 128], strides = [1, 1]} : vector<8x512xf32> to vector<8x128xf32>
    %594 = math.tanh %593 : vector<8x128xf32>
    %595 = vector.extract_strided_slice %576 {offsets = [0, 384], sizes = [8, 128], strides = [1, 1]} : vector<8x512xf32> to vector<8x128xf32>
    %cst_184 = arith.constant 5.000000e-01 : f32
    %596 = vector.broadcast %cst_184 : f32 to vector<8x128xf32>
    %597 = arith.mulf %596, %595 : vector<8x128xf32>
    %598 = math.tanh %597 : vector<8x128xf32>
    %cst_185 = arith.constant 5.000000e-01 : f32
    %599 = vector.broadcast %cst_185 : f32 to vector<8x128xf32>
    %600 = arith.mulf %599, %598 : vector<8x128xf32>
    %cst_186 = arith.constant 5.000000e-01 : f32
    %601 = vector.broadcast %cst_186 : f32 to vector<8x128xf32>
    %602 = arith.addf %600, %601 : vector<8x128xf32>
    %603 = arith.mulf %592, %529 : vector<8x128xf32>
    %604 = arith.mulf %584, %594 : vector<8x128xf32>
    %605 = arith.addf %603, %604 : vector<8x128xf32>
    %606 = math.tanh %605 : vector<8x128xf32>
    %607 = arith.mulf %602, %606 : vector<8x128xf32>
    %608 = arith.truncf %607 : vector<8x128xf32> to vector<8x128xbf16>
    %c0_187 = arith.constant 0 : index
    %c0_188 = arith.constant 0 : index
    %609 = vector.load %arg4[%c0_187, %c0_188] : memref<128x128xbf16, #tpu.memory_space<vmem>>, vector<128x128xbf16>
    %cst_189 = arith.constant dense<0.000000e+00> : vector<8x128xf32>
    %610 = tpu.matmul %608, %609, %cst_189 {dimension_numbers = #tpu.dot_dimension_numbers<[1], [0], [0], [1], [0, 0, 1, 1], [], []>} : vector<8x128xbf16>, vector<128x128xbf16>, vector<8x128xf32> -> vector<8x128xf32>
    %c0_190 = arith.constant 0 : index
    %c0_191 = arith.constant 0 : index
    %611 = vector.load %arg5[%c0_190, %c0_191] : memref<1x128xf32, #tpu.memory_space<vmem>>, vector<1x128xf32>
    %612 = vector.broadcast %611 : vector<1x128xf32> to vector<8x128xf32>
    %613 = arith.addf %610, %612 : vector<8x128xf32>
    %c0_192 = arith.constant 0 : index
    %c0_193 = arith.constant 0 : index
    %614 = vector.load %arg6[%c0_192, %c0_193] : memref<8x128xf32, #tpu.memory_space<vmem>>, vector<8x128xf32>
    tpu.vector_store %arg6[%c0_192, %c0_193], %613 {strides = array<i32>} : memref<8x128xf32, #tpu.memory_space<vmem>>, vector<8x128xf32>,
    return
  }
}

</mosaic_0001>

<llo_original>
// kernel: lstm_classifier_forward.1
$region0: #{lstm_classifier_forward.1}
  #allocation0 [shape = 'u32[]', space=smem, size = 0x4, offset = 0x4, fixed_abs, tag = 'smem constant byte address 0x4 - core index']
  #allocation1 [shape = 'u32[72,128]{1,0:T(1,128)}', space=vmem, size = 0x9000, scoped, tag = 'internal scratch']
  %s0 = inlined_call_operand.vmem [shape: f32[64,512], index: 0, kind: input, shape index: {}]
  %s1 = inlined_call_operand.vmem [shape: bf16[128,1024], index: 1, kind: input, shape index: {}]
  %s2 = inlined_call_operand.vmem [shape: bf16[128,512], index: 2, kind: input, shape index: {}]
  %s3 = inlined_call_operand.vmem [shape: f32[1,512], index: 3, kind: input, shape index: {}]
  %s4 = inlined_call_operand.vmem [shape: bf16[128,128], index: 4, kind: input, shape index: {}]
  %s5 = inlined_call_operand.vmem [shape: f32[1,128], index: 5, kind: input, shape index: {}]
  %s6 = inlined_call_operand.vmem [shape: f32[8,128], index: 6, kind: output, shape index: {}]
  %s7 = sld [smem:[#allocation0]]
  $region34: #{lstm_classifier_forward.1} parent=0
    _
  %s9 = ssub.s32 1, %s7
  %s10 = scalar_select 0, %s9, %s7
  // Predicated region
  $region2: #{lstm_classifier_forward.1} parent=0 // pred_check
    _
  $region3: #{lstm_classifier_forward.1} parent=0 // pred_check_branch
    %12 = sbr.rel (0) target = $region5
  $region4: #{lstm_classifier_forward.1} parent=0 // pred_region
    _
  $region5: #{lstm_classifier_forward.1} parent=0 // pred_fallthru
    _
  // Predicated region
  $region6: #{lstm_classifier_forward.1} parent=0 // pred_check
    _
  $region7: #{lstm_classifier_forward.1} parent=0 // pred_check_branch
    %14 = sbr.rel (0) target = $region9
  $region8: #{lstm_classifier_forward.1} parent=0 // pred_region
    _
  $region9: #{lstm_classifier_forward.1} parent=0 // pred_fallthru
    _
  // Predicated region
  $region10: #{lstm_classifier_forward.1} parent=0 // pred_check
    _
  $region11: #{lstm_classifier_forward.1} parent=0 // pred_check_branch
    %16 = sbr.rel (0) target = $region13
  $region12: #{lstm_classifier_forward.1} parent=0 // pred_region
    _
  $region13: #{lstm_classifier_forward.1} parent=0 // pred_fallthru
    _
  // Predicated region
  $region14: #{lstm_classifier_forward.1} parent=0 // pred_check
    _
  $region15: #{lstm_classifier_forward.1} parent=0 // pred_check_branch
    %18 = sbr.rel (0) target = $region17
  $region16: #{lstm_classifier_forward.1} parent=0 // pred_region
    _
  $region17: #{lstm_classifier_forward.1} parent=0 // pred_fallthru
    _
  // Predicated region
  $region18: #{lstm_classifier_forward.1} parent=0 // pred_check
    _
  $region19: #{lstm_classifier_forward.1} parent=0 // pred_check_branch
    %20 = sbr.rel (0) target = $region21
  $region20: #{lstm_classifier_forward.1} parent=0 // pred_region
    _
  $region21: #{lstm_classifier_forward.1} parent=0 // pred_fallthru
    _
  // Predicated region
  $region22: #{lstm_classifier_forward.1} parent=0 // pred_check
    _
  $region23: #{lstm_classifier_forward.1} parent=0 // pred_check_branch
    %22 = sbr.rel (0) target = $region25
  $region24: #{lstm_classifier_forward.1} parent=0 // pred_region
    _
  $region25: #{lstm_classifier_forward.1} parent=0 // pred_fallthru
    _
  %v24 = vld [vmem:[%s1] sm:$0xff]
  %v25 = vld [vmem:[%s1 + $0x8] sm:$0xff]
  %v26 = vld [vmem:[%s1 + $0x10] sm:$0xff]
  %v27 = vld [vmem:[%s1 + $0x18] sm:$0xff]
  %v28 = vld [vmem:[%s1 + $0x20] sm:$0xff]
  %v29 = vld [vmem:[%s1 + $0x28] sm:$0xff]
  %v30 = vld [vmem:[%s1 + $0x30] sm:$0xff]
  %v31 = vld [vmem:[%s1 + $0x38] sm:$0xff]
  %v32 = vld [vmem:[%s1 + $0x40] sm:$0xff]
  %v33 = vld [vmem:[%s1 + $0x48] sm:$0xff]
  %v34 = vld [vmem:[%s1 + $0x50] sm:$0xff]
  %v35 = vld [vmem:[%s1 + $0x58] sm:$0xff]
  %v36 = vld [vmem:[%s1 + $0x60] sm:$0xff]
  %v37 = vld [vmem:[%s1 + $0x68] sm:$0xff]
  %v38 = vld [vmem:[%s1 + $0x70] sm:$0xff]
  %v39 = vld [vmem:[%s1 + $0x78] sm:$0xff]
  %v40 = vld [vmem:[%s1 + $0x80] sm:$0xff]
  %v41 = vld [vmem:[%s1 + $0x88] sm:$0xff]
  %v42 = vld [vmem:[%s1 + $0x90] sm:$0xff]
  %v43 = vld [vmem:[%s1 + $0x98] sm:$0xff]
  %v44 = vld [vmem:[%s1 + $0xa0] sm:$0xff]
  %v45 = vld [vmem:[%s1 + $0xa8] sm:$0xff]
  %v46 = vld [vmem:[%s1 + $0xb0] sm:$0xff]
  %v47 = vld [vmem:[%s1 + $0xb8] sm:$0xff]
  %v48 = vld [vmem:[%s1 + $0xc0] sm:$0xff]
  %v49 = vld [vmem:[%s1 + $0xc8] sm:$0xff]
  %v50 = vld [vmem:[%s1 + $0xd0] sm:$0xff]
  %v51 = vld [vmem:[%s1 + $0xd8] sm:$0xff]
  %v52 = vld [vmem:[%s1 + $0xe0] sm:$0xff]
  %v53 = vld [vmem:[%s1 + $0xe8] sm:$0xff]
  %v54 = vld [vmem:[%s1 + $0xf0] sm:$0xff]
  %v55 = vld [vmem:[%s1 + $0xf8] sm:$0xff]
  %v56 = vld [vmem:[%s1 + $0x100] sm:$0xff]
  %v57 = vld [vmem:[%s1 + $0x108] sm:$0xff]
  %v58 = vld [vmem:[%s1 + $0x110] sm:$0xff]
  %v59 = vld [vmem:[%s1 + $0x118] sm:$0xff]
  %v60 = vld [vmem:[%s1 + $0x120] sm:$0xff]
  %v61 = vld [vmem:[%s1 + $0x128] sm:$0xff]
  %v62 = vld [vmem:[%s1 + $0x130] sm:$0xff]
  %v63 = vld [vmem:[%s1 + $0x138] sm:$0xff]
  %v64 = vld [vmem:[%s1 + $0x140] sm:$0xff]
  %v65 = vld [vmem:[%s1 + $0x148] sm:$0xff]
  %v66 = vld [vmem:[%s1 + $0x150] sm:$0xff]
  %v67 = vld [vmem:[%s1 + $0x158] sm:$0xff]
  %v68 = vld [vmem:[%s1 + $0x160] sm:$0xff]
  %v69 = vld [vmem:[%s1 + $0x168] sm:$0xff]
  %v70 = vld [vmem:[%s1 + $0x170] sm:$0xff]
  %v71 = vld [vmem:[%s1 + $0x178] sm:$0xff]
  %v72 = vld [vmem:[%s1 + $0x180] sm:$0xff]
  %v73 = vld [vmem:[%s1 + $0x188] sm:$0xff]
  %v74 = vld [vmem:[%s1 + $0x190] sm:$0xff]
  %v75 = vld [vmem:[%s1 + $0x198] sm:$0xff]
  %v76 = vld [vmem:[%s1 + $0x1a0] sm:$0xff]
  %v77 = vld [vmem:[%s1 + $0x1a8] sm:$0xff]
  %v78 = vld [vmem:[%s1 + $0x1b0] sm:$0xff]
  %v79 = vld [vmem:[%s1 + $0x1b8] sm:$0xff]
  %v80 = vld [vmem:[%s1 + $0x1c0] sm:$0xff]
  %v81 = vld [vmem:[%s1 + $0x1c8] sm:$0xff]
  %v82 = vld [vmem:[%s1 + $0x1d0] sm:$0xff]
  %v83 = vld [vmem:[%s1 + $0x1d8] sm:$0xff]
  %v84 = vld [vmem:[%s1 + $0x1e0] sm:$0xff]
  %v85 = vld [vmem:[%s1 + $0x1e8] sm:$0xff]
  %v86 = vld [vmem:[%s1 + $0x1f0] sm:$0xff]
  %v87 = vld [vmem:[%s1 + $0x1f8] sm:$0xff]
  %v88 = vld [vmem:[%s2] sm:$0xff]
  %v89 = vld [vmem:[%s2 + $0x8] sm:$0xff]
  %v90 = vld [vmem:[%s2 + $0x10] sm:$0xff]
  %v91 = vld [vmem:[%s2 + $0x18] sm:$0xff]
  %v92 = vld [vmem:[%s2 + $0x20] sm:$0xff]
  %v93 = vld [vmem:[%s2 + $0x28] sm:$0xff]
  %v94 = vld [vmem:[%s2 + $0x30] sm:$0xff]
  %v95 = vld [vmem:[%s2 + $0x38] sm:$0xff]
  %v96 = vld [vmem:[%s2 + $0x40] sm:$0xff]
  %v97 = vld [vmem:[%s2 + $0x48] sm:$0xff]
  %v98 = vld [vmem:[%s2 + $0x50] sm:$0xff]
  %v99 = vld [vmem:[%s2 + $0x58] sm:$0xff]
  %v100 = vld [vmem:[%s2 + $0x60] sm:$0xff]
  %v101 = vld [vmem:[%s2 + $0x68] sm:$0xff]
  %v102 = vld [vmem:[%s2 + $0x70] sm:$0xff]
  %v103 = vld [vmem:[%s2 + $0x78] sm:$0xff]
  %v104 = vld [vmem:[%s2 + $0x80] sm:$0xff]
  %v105 = vld [vmem:[%s2 + $0x88] sm:$0xff]
  %v106 = vld [vmem:[%s2 + $0x90] sm:$0xff]
  %v107 = vld [vmem:[%s2 + $0x98] sm:$0xff]
  %v108 = vld [vmem:[%s2 + $0xa0] sm:$0xff]
  %v109 = vld [vmem:[%s2 + $0xa8] sm:$0xff]
  %v110 = vld [vmem:[%s2 + $0xb0] sm:$0xff]
  %v111 = vld [vmem:[%s2 + $0xb8] sm:$0xff]
  %v112 = vld [vmem:[%s2 + $0xc0] sm:$0xff]
  %v113 = vld [vmem:[%s2 + $0xc8] sm:$0xff]
  %v114 = vld [vmem:[%s2 + $0xd0] sm:$0xff]
  %v115 = vld [vmem:[%s2 + $0xd8] sm:$0xff]
  %v116 = vld [vmem:[%s2 + $0xe0] sm:$0xff]
  %v117 = vld [vmem:[%s2 + $0xe8] sm:$0xff]
  %v118 = vld [vmem:[%s2 + $0xf0] sm:$0xff]
  %v119 = vld [vmem:[%s2 + $0xf8] sm:$0xff]
  %v120 = vld [vmem:[%s3] sm:$0xf]
  %v122 = vperm.slane %v120, 0
  %v123 = vperm.slane %v120, 1
  %v124 = vperm.slane %v120, 2
  %v125 = vperm.slane %v120, 3
  %v130 = vld [vmem:[%s0] sm:$0xff]
  %v131 = vld [vmem:[%s0 + $0x8] sm:$0xff]
  %v132 = vld [vmem:[%s0 + $0x10] sm:$0xff]
  %v133 = vld [vmem:[%s0 + $0x18] sm:$0xff]
  %v134 = vmul.f32 %v130, 0.5
  %v135 = vtanh.pop %v134
  %v136 = vmul.f32 %v135, 0.5
  %v137 = vadd.f32 %v136, 0.5
  %v138 = vmul.f32 %v131, 0.5
  %v139 = vtanh.pop %v138
  %v140 = vmul.f32 %v139, 0.5
  %v141 = vadd.f32 %v140, 0.5
  %v142 = vtanh.pop %v132
  %v143 = vmul.f32 %v133, 0.5
  %v144 = vtanh.pop %v143
  %v145 = vmul.f32 %v144, 0.5
  %v146 = vadd.f32 %v145, 0.5
  %v147 = vmul.f32 %v141, 0.0
  %v148 = vmul.f32 %v137, %v142
  %v149 = vadd.f32 %v147, %v148
  %v150 = vtanh.pop %v149
  %v151 = vmul.f32 %v146, %v150
  %v152 = vpack.c.bf16 %v151, %v151
  %v217 = vunpack.c.l.b16 %v24
  %v218 = vunpack.c.h.b16 %v24
  %v219 = vunpack.c.l.b16 %v25
  %v220 = vunpack.c.h.b16 %v25
  %v221 = vunpack.c.l.b16 %v26
  %v222 = vunpack.c.h.b16 %v26
  %v223 = vunpack.c.l.b16 %v27
  %v224 = vunpack.c.h.b16 %v27
  %v225 = vunpack.c.l.b16 %v28
  %v226 = vunpack.c.h.b16 %v28
  %v227 = vunpack.c.l.b16 %v29
  %v228 = vunpack.c.h.b16 %v29
  %v229 = vunpack.c.l.b16 %v30
  %v230 = vunpack.c.h.b16 %v30
  %v231 = vunpack.c.l.b16 %v31
  %v232 = vunpack.c.h.b16 %v31
  %v233 = vunpack.c.l.b16 %v32
  %v234 = vunpack.c.h.b16 %v32
  %v235 = vunpack.c.l.b16 %v33
  %v236 = vunpack.c.h.b16 %v33
  %v237 = vunpack.c.l.b16 %v34
  %v238 = vunpack.c.h.b16 %v34
  %v239 = vunpack.c.l.b16 %v35
  %v240 = vunpack.c.h.b16 %v35
  %v241 = vunpack.c.l.b16 %v36
  %v242 = vunpack.c.h.b16 %v36
  %v243 = vunpack.c.l.b16 %v37
  %v244 = vunpack.c.h.b16 %v37
  %v245 = vunpack.c.l.b16 %v38
  %v246 = vunpack.c.h.b16 %v38
  %v247 = vunpack.c.l.b16 %v39
  %v248 = vunpack.c.h.b16 %v39
  %v249 = vunpack.c.l.b16 %v40
  %v250 = vunpack.c.h.b16 %v40
  %v251 = vunpack.c.l.b16 %v41
  %v252 = vunpack.c.h.b16 %v41
  %v253 = vunpack.c.l.b16 %v42
  %v254 = vunpack.c.h.b16 %v42
  %v255 = vunpack.c.l.b16 %v43
  %v256 = vunpack.c.h.b16 %v43
  %v257 = vunpack.c.l.b16 %v44
  %v258 = vunpack.c.h.b16 %v44
  %v259 = vunpack.c.l.b16 %v45
  %v260 = vunpack.c.h.b16 %v45
  %v261 = vunpack.c.l.b16 %v46
  %v262 = vunpack.c.h.b16 %v46
  %v263 = vunpack.c.l.b16 %v47
  %v264 = vunpack.c.h.b16 %v47
  %v265 = vunpack.c.l.b16 %v48
  %v266 = vunpack.c.h.b16 %v48
  %v267 = vunpack.c.l.b16 %v49
  %v268 = vunpack.c.h.b16 %v49
  %v269 = vunpack.c.l.b16 %v50
  %v270 = vunpack.c.h.b16 %v50
  %v271 = vunpack.c.l.b16 %v51
  %v272 = vunpack.c.h.b16 %v51
  %v273 = vunpack.c.l.b16 %v52
  %v274 = vunpack.c.h.b16 %v52
  %v275 = vunpack.c.l.b16 %v53
  %v276 = vunpack.c.h.b16 %v53
  %v277 = vunpack.c.l.b16 %v54
  %v278 = vunpack.c.h.b16 %v54
  %v279 = vunpack.c.l.b16 %v55
  %v280 = vunpack.c.h.b16 %v55
  %v281 = vunpack.c.l.b16 %v56
  %v282 = vunpack.c.h.b16 %v56
  %v283 = vunpack.c.l.b16 %v57
  %v284 = vunpack.c.h.b16 %v57
  %v285 = vunpack.c.l.b16 %v58
  %v286 = vunpack.c.h.b16 %v58
  %v287 = vunpack.c.l.b16 %v59
  %v288 = vunpack.c.h.b16 %v59
  %v289 = vunpack.c.l.b16 %v60
  %v290 = vunpack.c.h.b16 %v60
  %v291 = vunpack.c.l.b16 %v61
  %v292 = vunpack.c.h.b16 %v61
  %v293 = vunpack.c.l.b16 %v62
  %v294 = vunpack.c.h.b16 %v62
  %v295 = vunpack.c.l.b16 %v63
  %v296 = vunpack.c.h.b16 %v63
  %v297 = vunpack.c.l.b16 %v64
  %v298 = vunpack.c.h.b16 %v64
  %v299 = vunpack.c.l.b16 %v65
  %v300 = vunpack.c.h.b16 %v65
  %v301 = vunpack.c.l.b16 %v66
  %v302 = vunpack.c.h.b16 %v66
  %v303 = vunpack.c.l.b16 %v67
  %v304 = vunpack.c.h.b16 %v67
  %v305 = vunpack.c.l.b16 %v68
  %v306 = vunpack.c.h.b16 %v68
  %v307 = vunpack.c.l.b16 %v69
  %v308 = vunpack.c.h.b16 %v69
  %v309 = vunpack.c.l.b16 %v70
  %v310 = vunpack.c.h.b16 %v70
  %v311 = vunpack.c.l.b16 %v71
  %v312 = vunpack.c.h.b16 %v71
  %v313 = vunpack.c.l.b16 %v72
  %v314 = vunpack.c.h.b16 %v72
  %v315 = vunpack.c.l.b16 %v73
  %v316 = vunpack.c.h.b16 %v73
  %v317 = vunpack.c.l.b16 %v74
  %v318 = vunpack.c.h.b16 %v74
  %v319 = vunpack.c.l.b16 %v75
  %v320 = vunpack.c.h.b16 %v75
  %v321 = vunpack.c.l.b16 %v76
  %v322 = vunpack.c.h.b16 %v76
  %v323 = vunpack.c.l.b16 %v77
  %v324 = vunpack.c.h.b16 %v77
  %v325 = vunpack.c.l.b16 %v78
  %v326 = vunpack.c.h.b16 %v78
  %v327 = vunpack.c.l.b16 %v79
  %v328 = vunpack.c.h.b16 %v79
  %v329 = vunpack.c.l.b16 %v80
  %v330 = vunpack.c.h.b16 %v80
  %v331 = vunpack.c.l.b16 %v81
  %v332 = vunpack.c.h.b16 %v81
  %v333 = vunpack.c.l.b16 %v82
  %v334 = vunpack.c.h.b16 %v82
  %v335 = vunpack.c.l.b16 %v83
  %v336 = vunpack.c.h.b16 %v83
  %v337 = vunpack.c.l.b16 %v84
  %v338 = vunpack.c.h.b16 %v84
  %v339 = vunpack.c.l.b16 %v85
  %v340 = vunpack.c.h.b16 %v85
  %v341 = vunpack.c.l.b16 %v86
  %v342 = vunpack.c.h.b16 %v86
  %v343 = vunpack.c.l.b16 %v87
  %v344 = vunpack.c.h.b16 %v87
  %v345 = vpack.c.b16 %v225, %v217
  %v346 = vpack.c.b16 %v226, %v218
  %v347 = vpack.c.b16 %v227, %v219
  %v348 = vpack.c.b16 %v228, %v220
  %v349 = vpack.c.b16 %v229, %v221
  %v350 = vpack.c.b16 %v230, %v222
  %v351 = vpack.c.b16 %v231, %v223
  %v352 = vpack.c.b16 %v232, %v224
  %v353 = vpack.c.b16 %v241, %v233
  %v354 = vpack.c.b16 %v242, %v234
  %v355 = vpack.c.b16 %v243, %v235
  %v356 = vpack.c.b16 %v244, %v236
  %v357 = vpack.c.b16 %v245, %v237
  %v358 = vpack.c.b16 %v246, %v238
  %v359 = vpack.c.b16 %v247, %v239
  %v360 = vpack.c.b16 %v248, %v240
  %v361 = vpack.c.b16 %v257, %v249
  %v362 = vpack.c.b16 %v258, %v250
  %v363 = vpack.c.b16 %v259, %v251
  %v364 = vpack.c.b16 %v260, %v252
  %v365 = vpack.c.b16 %v261, %v253
  %v366 = vpack.c.b16 %v262, %v254
  %v367 = vpack.c.b16 %v263, %v255
  %v368 = vpack.c.b16 %v264, %v256
  %v369 = vpack.c.b16 %v273, %v265
  %v370 = vpack.c.b16 %v274, %v266
  %v371 = vpack.c.b16 %v275, %v267
  %v372 = vpack.c.b16 %v276, %v268
  %v373 = vpack.c.b16 %v277, %v269
  %v374 = vpack.c.b16 %v278, %v270
  %v375 = vpack.c.b16 %v279, %v271
  %v376 = vpack.c.b16 %v280, %v272
  %v377 = vpack.c.b16 %v289, %v281
  %v378 = vpack.c.b16 %v290, %v282
  %v379 = vpack.c.b16 %v291, %v283
  %v380 = vpack.c.b16 %v292, %v284
  %v381 = vpack.c.b16 %v293, %v285
  %v382 = vpack.c.b16 %v294, %v286
  %v383 = vpack.c.b16 %v295, %v287
  %v384 = vpack.c.b16 %v296, %v288
  %v385 = vpack.c.b16 %v305, %v297
  %v386 = vpack.c.b16 %v306, %v298
  %v387 = vpack.c.b16 %v307, %v299
  %v388 = vpack.c.b16 %v308, %v300
  %v389 = vpack.c.b16 %v309, %v301
  %v390 = vpack.c.b16 %v310, %v302
  %v391 = vpack.c.b16 %v311, %v303
  %v392 = vpack.c.b16 %v312, %v304
  %v393 = vpack.c.b16 %v321, %v313
  %v394 = vpack.c.b16 %v322, %v314
  %v395 = vpack.c.b16 %v323, %v315
  %v396 = vpack.c.b16 %v324, %v316
  %v397 = vpack.c.b16 %v325, %v317
  %v398 = vpack.c.b16 %v326, %v318
  %v399 = vpack.c.b16 %v327, %v319
  %v400 = vpack.c.b16 %v328, %v320
  %v401 = vpack.c.b16 %v337, %v329
  %v402 = vpack.c.b16 %v338, %v330
  %v403 = vpack.c.b16 %v339, %v331
  %v404 = vpack.c.b16 %v340, %v332
  %v405 = vpack.c.b16 %v341, %v333
  %v406 = vpack.c.b16 %v342, %v334
  %v407 = vpack.c.b16 %v343, %v335
  %v408 = vpack.c.b16 %v344, %v336
  %473 = vmatpush.bf16.msra.mxu0 %v401
  %474 = vmatpush.bf16.msra.mxu0 %v393
  %475 = vmatpush.bf16.msra.mxu0 %v385
  %476 = vmatpush.bf16.msra.mxu0 %v377
  %477 = vmatpush.bf16.msra.mxu0 %v369
  %478 = vmatpush.bf16.msra.mxu0 %v361
  %479 = vmatpush.bf16.msra.mxu0 %v353
  %480 = vmatpush.bf16.msra.mxu0 %v345
  %481 = vmatmul.bf16.gmra.mxu0 %v152
  %v482 = vpop.f32.mrf.mxu0
  %v483 = vadd.f32 0.0, %v482
  %v484 = vpop.f32.mrf.mxu0
  %485 = vdwg.mxu0
  %486 = vmatpush.bf16.msra.mxu0 %v402
  %487 = vmatpush.bf16.msra.mxu0 %v394
  %488 = vmatpush.bf16.msra.mxu0 %v386
  %489 = vmatpush.bf16.msra.mxu0 %v378
  %490 = vmatpush.bf16.msra.mxu0 %v370
  %491 = vmatpush.bf16.msra.mxu0 %v362
  %492 = vmatpush.bf16.msra.mxu0 %v354
  %493 = vmatpush.bf16.msra.mxu0 %v346
  %494 = vmatmul.bf16.gmra.mxu0 %v152
  %v495 = vpop.f32.mrf.mxu0
  %v496 = vadd.f32 0.0, %v495
  %v497 = vpop.f32.mrf.mxu0
  %498 = vdwg.mxu0
  %499 = vmatpush.bf16.msra.mxu0 %v403
  %500 = vmatpush.bf16.msra.mxu0 %v395
  %501 = vmatpush.bf16.msra.mxu0 %v387
  %502 = vmatpush.bf16.msra.mxu0 %v379
  %503 = vmatpush.bf16.msra.mxu0 %v371
  %504 = vmatpush.bf16.msra.mxu0 %v363
  %505 = vmatpush.bf16.msra.mxu0 %v355
  %506 = vmatpush.bf16.msra.mxu0 %v347
  %507 = vmatmul.bf16.gmra.mxu0 %v152
  %v508 = vpop.f32.mrf.mxu0
  %v509 = vadd.f32 0.0, %v508
  %v510 = vpop.f32.mrf.mxu0
  %511 = vdwg.mxu0
  %512 = vmatpush.bf16.msra.mxu0 %v404
  %513 = vmatpush.bf16.msra.mxu0 %v396
  %514 = vmatpush.bf16.msra.mxu0 %v388
  %515 = vmatpush.bf16.msra.mxu0 %v380
  %516 = vmatpush.bf16.msra.mxu0 %v372
  %517 = vmatpush.bf16.msra.mxu0 %v364
  %518 = vmatpush.bf16.msra.mxu0 %v356
  %519 = vmatpush.bf16.msra.mxu0 %v348
  %520 = vmatmul.bf16.gmra.mxu0 %v152
  %v521 = vpop.f32.mrf.mxu0
  %v522 = vadd.f32 0.0, %v521
  %v523 = vpop.f32.mrf.mxu0
  %524 = vdwg.mxu0
  %525 = vmatpush.bf16.msra.mxu0 %v405
  %526 = vmatpush.bf16.msra.mxu0 %v397
  %527 = vmatpush.bf16.msra.mxu0 %v389
  %528 = vmatpush.bf16.msra.mxu0 %v381
  %529 = vmatpush.bf16.msra.mxu0 %v373
  %530 = vmatpush.bf16.msra.mxu0 %v365
  %531 = vmatpush.bf16.msra.mxu0 %v357
  %532 = vmatpush.bf16.msra.mxu0 %v349
  %533 = vmatmul.bf16.gmra.mxu0 %v152
  %v534 = vpop.f32.mrf.mxu0
  %v535 = vadd.f32 0.0, %v534
  %v536 = vpop.f32.mrf.mxu0
  %537 = vdwg.mxu0
  %538 = vmatpush.bf16.msra.mxu0 %v406
  %539 = vmatpush.bf16.msra.mxu0 %v398
  %540 = vmatpush.bf16.msra.mxu0 %v390
  %541 = vmatpush.bf16.msra.mxu0 %v382
  %542 = vmatpush.bf16.msra.mxu0 %v374
  %543 = vmatpush.bf16.msra.mxu0 %v366
  %544 = vmatpush.bf16.msra.mxu0 %v358
  %545 = vmatpush.bf16.msra.mxu0 %v350
  %546 = vmatmul.bf16.gmra.mxu0 %v152
  %v547 = vpop.f32.mrf.mxu0
  %v548 = vadd.f32 0.0, %v547
  %v549 = vpop.f32.mrf.mxu0
  %550 = vdwg.mxu0
  %551 = vmatpush.bf16.msra.mxu0 %v407
  %552 = vmatpush.bf16.msra.mxu0 %v399
  %553 = vmatpush.bf16.msra.mxu0 %v391
  %554 = vmatpush.bf16.msra.mxu0 %v383
  %555 = vmatpush.bf16.msra.mxu0 %v375
  %556 = vmatpush.bf16.msra.mxu0 %v367
  %557 = vmatpush.bf16.msra.mxu0 %v359
  %558 = vmatpush.bf16.msra.mxu0 %v351
  %559 = vmatmul.bf16.gmra.mxu0 %v152
  %v560 = vpop.f32.mrf.mxu0
  %v561 = vadd.f32 0.0, %v560
  %v562 = vpop.f32.mrf.mxu0
  %563 = vdwg.mxu0
  %564 = vmatpush.bf16.msra.mxu0 %v408
  %565 = vmatpush.bf16.msra.mxu0 %v400
  %566 = vmatpush.bf16.msra.mxu0 %v392
  %567 = vmatpush.bf16.msra.mxu0 %v384
  %568 = vmatpush.bf16.msra.mxu0 %v376
  %569 = vmatpush.bf16.msra.mxu0 %v368
  %570 = vmatpush.bf16.msra.mxu0 %v360
  %571 = vmatpush.bf16.msra.mxu0 %v352
  %572 = vmatmul.bf16.gmra.mxu0 %v152
  %v573 = vpop.f32.mrf.mxu0
  %v574 = vadd.f32 0.0, %v573
  %v575 = vpop.f32.mrf.mxu0
  %576 = vdwg.mxu0
  %v609 = vunpack.c.l.b16 %v88
  %v610 = vunpack.c.h.b16 %v88
  %v611 = vunpack.c.l.b16 %v89
  %v612 = vunpack.c.h.b16 %v89
  %v613 = vunpack.c.l.b16 %v90
  %v614 = vunpack.c.h.b16 %v90
  %v615 = vunpack.c.l.b16 %v91
  %v616 = vunpack.c.h.b16 %v91
  %v617 = vunpack.c.l.b16 %v92
  %v618 = vunpack.c.h.b16 %v92
  %v619 = vunpack.c.l.b16 %v93
  %v620 = vunpack.c.h.b16 %v93
  %v621 = vunpack.c.l.b16 %v94
  %v622 = vunpack.c.h.b16 %v94
  %v623 = vunpack.c.l.b16 %v95
  %v624 = vunpack.c.h.b16 %v95
  %v625 = vunpack.c.l.b16 %v96
  %v626 = vunpack.c.h.b16 %v96
  %v627 = vunpack.c.l.b16 %v97
  %v628 = vunpack.c.h.b16 %v97
  %v629 = vunpack.c.l.b16 %v98
  %v630 = vunpack.c.h.b16 %v98
  %v631 = vunpack.c.l.b16 %v99
  %v632 = vunpack.c.h.b16 %v99
  %v633 = vunpack.c.l.b16 %v100
  %v634 = vunpack.c.h.b16 %v100
  %v635 = vunpack.c.l.b16 %v101
  %v636 = vunpack.c.h.b16 %v101
  %v637 = vunpack.c.l.b16 %v102
  %v638 = vunpack.c.h.b16 %v102
  %v639 = vunpack.c.l.b16 %v103
  %v640 = vunpack.c.h.b16 %v103
  %v641 = vunpack.c.l.b16 %v104
  %v642 = vunpack.c.h.b16 %v104
  %v643 = vunpack.c.l.b16 %v105
  %v644 = vunpack.c.h.b16 %v105
  %v645 = vunpack.c.l.b16 %v106
  %v646 = vunpack.c.h.b16 %v106
  %v647 = vunpack.c.l.b16 %v107
  %v648 = vunpack.c.h.b16 %v107
  %v649 = vunpack.c.l.b16 %v108
  %v650 = vunpack.c.h.b16 %v108
  %v651 = vunpack.c.l.b16 %v109
  %v652 = vunpack.c.h.b16 %v109
  %v653 = vunpack.c.l.b16 %v110
  %v654 = vunpack.c.h.b16 %v110
  %v655 = vunpack.c.l.b16 %v111
  %v656 = vunpack.c.h.b16 %v111
  %v657 = vunpack.c.l.b16 %v112
  %v658 = vunpack.c.h.b16 %v112
  %v659 = vunpack.c.l.b16 %v113
  %v660 = vunpack.c.h.b16 %v113
  %v661 = vunpack.c.l.b16 %v114
  %v662 = vunpack.c.h.b16 %v114
  %v663 = vunpack.c.l.b16 %v115
  %v664 = vunpack.c.h.b16 %v115
  %v665 = vunpack.c.l.b16 %v116
  %v666 = vunpack.c.h.b16 %v116
  %v667 = vunpack.c.l.b16 %v117
  %v668 = vunpack.c.h.b16 %v117
  %v669 = vunpack.c.l.b16 %v118
  %v670 = vunpack.c.h.b16 %v118
  %v671 = vunpack.c.l.b16 %v119
  %v672 = vunpack.c.h.b16 %v119
  %v673 = vpack.c.b16 %v613, %v609
  %v674 = vpack.c.b16 %v614, %v610
  %v675 = vpack.c.b16 %v615, %v611
  %v676 = vpack.c.b16 %v616, %v612
  %v677 = vpack.c.b16 %v621, %v617
  %v678 = vpack.c.b16 %v622, %v618
  %v679 = vpack.c.b16 %v623, %v619
  %v680 = vpack.c.b16 %v624, %v620
  %v681 = vpack.c.b16 %v629, %v625
  %v682 = vpack.c.b16 %v630, %v626
  %v683 = vpack.c.b16 %v631, %v627
  %v684 = vpack.c.b16 %v632, %v628
  %v685 = vpack.c.b16 %v637, %v633
  %v686 = vpack.c.b16 %v638, %v634
  %v687 = vpack.c.b16 %v639, %v635
  %v688 = vpack.c.b16 %v640, %v636
  %v689 = vpack.c.b16 %v645, %v641
  %v690 = vpack.c.b16 %v646, %v642
  %v691 = vpack.c.b16 %v647, %v643
  %v692 = vpack.c.b16 %v648, %v644
  %v693 = vpack.c.b16 %v653, %v649
  %v694 = vpack.c.b16 %v654, %v650
  %v695 = vpack.c.b16 %v655, %v651
  %v696 = vpack.c.b16 %v656, %v652
  %v697 = vpack.c.b16 %v661, %v657
  %v698 = vpack.c.b16 %v662, %v658
  %v699 = vpack.c.b16 %v663, %v659
  %v700 = vpack.c.b16 %v664, %v660
  %v701 = vpack.c.b16 %v669, %v665
  %v702 = vpack.c.b16 %v670, %v666
  %v703 = vpack.c.b16 %v671, %v667
  %v704 = vpack.c.b16 %v672, %v668
  %737 = vmatpush.bf16.msra.mxu0 %v701
  %738 = vmatpush.bf16.msra.mxu0 %v697
  %739 = vmatpush.bf16.msra.mxu0 %v693
  %740 = vmatpush.bf16.msra.mxu0 %v689
  %741 = vmatpush.bf16.msra.mxu0 %v685
  %742 = vmatpush.bf16.msra.mxu0 %v681
  %743 = vmatpush.bf16.msra.mxu0 %v677
  %744 = vmatpush.bf16.msra.mxu0 %v673
  %745 = vmatmul.bf16.gmra.mxu0 0
  %v746 = vpop.f32.mrf.mxu0
  %v747 = vadd.f32 0.0, %v746
  %v748 = vpop.f32.mrf.mxu0
  %749 = vdwg.mxu0
  %750 = vmatpush.bf16.msra.mxu0 %v702
  %751 = vmatpush.bf16.msra.mxu0 %v698
  %752 = vmatpush.bf16.msra.mxu0 %v694
  %753 = vmatpush.bf16.msra.mxu0 %v690
  %754 = vmatpush.bf16.msra.mxu0 %v686
  %755 = vmatpush.bf16.msra.mxu0 %v682
  %756 = vmatpush.bf16.msra.mxu0 %v678
  %757 = vmatpush.bf16.msra.mxu0 %v674
  %758 = vmatmul.bf16.gmra.mxu0 0
  %v759 = vpop.f32.mrf.mxu0
  %v760 = vadd.f32 0.0, %v759
  %v761 = vpop.f32.mrf.mxu0
  %762 = vdwg.mxu0
  %763 = vmatpush.bf16.msra.mxu0 %v703
  %764 = vmatpush.bf16.msra.mxu0 %v699
  %765 = vmatpush.bf16.msra.mxu0 %v695
  %766 = vmatpush.bf16.msra.mxu0 %v691
  %767 = vmatpush.bf16.msra.mxu0 %v687
  %768 = vmatpush.bf16.msra.mxu0 %v683
  %769 = vmatpush.bf16.msra.mxu0 %v679
  %770 = vmatpush.bf16.msra.mxu0 %v675
  %771 = vmatmul.bf16.gmra.mxu0 0
  %v772 = vpop.f32.mrf.mxu0
  %v773 = vadd.f32 0.0, %v772
  %v774 = vpop.f32.mrf.mxu0
  %775 = vdwg.mxu0
  %776 = vmatpush.bf16.msra.mxu0 %v704
  %777 = vmatpush.bf16.msra.mxu0 %v700
  %778 = vmatpush.bf16.msra.mxu0 %v696
  %779 = vmatpush.bf16.msra.mxu0 %v692
  %780 = vmatpush.bf16.msra.mxu0 %v688
  %781 = vmatpush.bf16.msra.mxu0 %v684
  %782 = vmatpush.bf16.msra.mxu0 %v680
  %783 = vmatpush.bf16.msra.mxu0 %v676
  %784 = vmatmul.bf16.gmra.mxu0 0
  %v785 = vpop.f32.mrf.mxu0
  %v786 = vadd.f32 0.0, %v785
  %v787 = vpop.f32.mrf.mxu0
  %788 = vdwg.mxu0
  %v789 = vadd.f32 %v535, %v747
  %v790 = vadd.f32 %v548, %v760
  %v791 = vadd.f32 %v561, %v773
  %v792 = vadd.f32 %v574, %v786
  %v793 = vadd.f32 %v789, %v122
  %v794 = vadd.f32 %v790, %v123
  %v795 = vadd.f32 %v791, %v124
  %v796 = vadd.f32 %v792, %v125
  %v797 = vmul.f32 %v793, 0.5
  %v798 = vtanh.pop %v797
  %v799 = vmul.f32 %v798, 0.5
  %v800 = vadd.f32 %v799, 0.5
  %v801 = vmul.f32 %v794, 0.5
  %v802 = vtanh.pop %v801
  %v803 = vmul.f32 %v802, 0.5
  %v804 = vadd.f32 %v803, 0.5
  %v805 = vtanh.pop %v795
  %v806 = vmul.f32 %v796, 0.5
  %v807 = vtanh.pop %v806
  %v808 = vmul.f32 %v807, 0.5
  %v809 = vadd.f32 %v808, 0.5
  %v810 = vmul.f32 %v804, 0.0
  %v811 = vmul.f32 %v800, %v805
  %v812 = vadd.f32 %v810, %v811
  %v813 = vtanh.pop %v812
  %v814 = vmul.f32 %v809, %v813
  %v815 = vpack.c.bf16 %v814, %v814
  %s816 = smul.u32 1, 4
  %s817 = smul.addr %s816, 8
  %s818 = scalar_lea.vmem %s0, %s817
  %v819 = vld [vmem:[%s818] sm:$0xff]
  %v820 = vld [vmem:[%s818 + $0x8] sm:$0xff]
  %v821 = vld [vmem:[%s818 + $0x10] sm:$0xff]
  %v822 = vld [vmem:[%s818 + $0x18] sm:$0xff]
  %v823 = vadd.f32 %v819, %v483
  %v824 = vadd.f32 %v820, %v496
  %v825 = vadd.f32 %v821, %v509
  %v826 = vadd.f32 %v822, %v522
  %v827 = vmul.f32 %v823, 0.5
  %v828 = vtanh.pop %v827
  %v829 = vmul.f32 %v828, 0.5
  %v830 = vadd.f32 %v829, 0.5
  %v831 = vmul.f32 %v824, 0.5
  %v832 = vtanh.pop %v831
  %v833 = vmul.f32 %v832, 0.5
  %v834 = vadd.f32 %v833, 0.5
  %v835 = vtanh.pop %v825
  %v836 = vmul.f32 %v826, 0.5
  %v837 = vtanh.pop %v836
  %v838 = vmul.f32 %v837, 0.5
  %v839 = vadd.f32 %v838, 0.5
  %v840 = vmul.f32 %v834, %v149
  %v841 = vmul.f32 %v830, %v835
  %v842 = vadd.f32 %v840, %v841
  %v843 = vtanh.pop %v842
  %v844 = vmul.f32 %v839, %v843
  %v845 = vpack.c.bf16 %v844, %v844
  %846 = vmatpush.bf16.msra.mxu0 %v401
  %847 = vmatpush.bf16.msra.mxu0 %v393
  %848 = vmatpush.bf16.msra.mxu0 %v385
  %849 = vmatpush.bf16.msra.mxu0 %v377
  %850 = vmatpush.bf16.msra.mxu0 %v369
  %851 = vmatpush.bf16.msra.mxu0 %v361
  %852 = vmatpush.bf16.msra.mxu0 %v353
  %853 = vmatpush.bf16.msra.mxu0 %v345
  %854 = vmatmul.bf16.gmra.mxu0 %v845
  %v855 = vpop.f32.mrf.mxu0
  %v856 = vadd.f32 0.0, %v855
  %v857 = vpop.f32.mrf.mxu0
  %858 = vdwg.mxu0
  %859 = vmatpush.bf16.msra.mxu0 %v402
  %860 = vmatpush.bf16.msra.mxu0 %v394
  %861 = vmatpush.bf16.msra.mxu0 %v386
  %862 = vmatpush.bf16.msra.mxu0 %v378
  %863 = vmatpush.bf16.msra.mxu0 %v370
  %864 = vmatpush.bf16.msra.mxu0 %v362
  %865 = vmatpush.bf16.msra.mxu0 %v354
  %866 = vmatpush.bf16.msra.mxu0 %v346
  %867 = vmatmul.bf16.gmra.mxu0 %v845
  %v868 = vpop.f32.mrf.mxu0
  %v869 = vadd.f32 0.0, %v868
  %v870 = vpop.f32.mrf.mxu0
  %871 = vdwg.mxu0
  %872 = vmatpush.bf16.msra.mxu0 %v403
  %873 = vmatpush.bf16.msra.mxu0 %v395
  %874 = vmatpush.bf16.msra.mxu0 %v387
  %875 = vmatpush.bf16.msra.mxu0 %v379
  %876 = vmatpush.bf16.msra.mxu0 %v371
  %877 = vmatpush.bf16.msra.mxu0 %v363
  %878 = vmatpush.bf16.msra.mxu0 %v355
  %879 = vmatpush.bf16.msra.mxu0 %v347
  %880 = vmatmul.bf16.gmra.mxu0 %v845
  %v881 = vpop.f32.mrf.mxu0
  %v882 = vadd.f32 0.0, %v881
  %v883 = vpop.f32.mrf.mxu0
  %884 = vdwg.mxu0
  %885 = vmatpush.bf16.msra.mxu0 %v404
  %886 = vmatpush.bf16.msra.mxu0 %v396
  %887 = vmatpush.bf16.msra.mxu0 %v388
  %888 = vmatpush.bf16.msra.mxu0 %v380
  %889 = vmatpush.bf16.msra.mxu0 %v372
  %890 = vmatpush.bf16.msra.mxu0 %v364
  %891 = vmatpush.bf16.msra.mxu0 %v356
  %892 = vmatpush.bf16.msra.mxu0 %v348
  %893 = vmatmul.bf16.gmra.mxu0 %v845
  %v894 = vpop.f32.mrf.mxu0
  %v895 = vadd.f32 0.0, %v894
  %v896 = vpop.f32.mrf.mxu0
  %897 = vdwg.mxu0
  %898 = vmatpush.bf16.msra.mxu0 %v405
  %899 = vmatpush.bf16.msra.mxu0 %v397
  %900 = vmatpush.bf16.msra.mxu0 %v389
  %901 = vmatpush.bf16.msra.mxu0 %v381
  %902 = vmatpush.bf16.msra.mxu0 %v373
  %903 = vmatpush.bf16.msra.mxu0 %v365
  %904 = vmatpush.bf16.msra.mxu0 %v357
  %905 = vmatpush.bf16.msra.mxu0 %v349
  %906 = vmatmul.bf16.gmra.mxu0 %v845
  %v907 = vpop.f32.mrf.mxu0
  %v908 = vadd.f32 0.0, %v907
  %v909 = vpop.f32.mrf.mxu0
  %910 = vdwg.mxu0
  %911 = vmatpush.bf16.msra.mxu0 %v406
  %912 = vmatpush.bf16.msra.mxu0 %v398
  %913 = vmatpush.bf16.msra.mxu0 %v390
  %914 = vmatpush.bf16.msra.mxu0 %v382
  %915 = vmatpush.bf16.msra.mxu0 %v374
  %916 = vmatpush.bf16.msra.mxu0 %v366
  %917 = vmatpush.bf16.msra.mxu0 %v358
  %918 = vmatpush.bf16.msra.mxu0 %v350
  %919 = vmatmul.bf16.gmra.mxu0 %v845
  %v920 = vpop.f32.mrf.mxu0
  %v921 = vadd.f32 0.0, %v920
  %v922 = vpop.f32.mrf.mxu0
  %923 = vdwg.mxu0
  %924 = vmatpush.bf16.msra.mxu0 %v407
  %925 = vmatpush.bf16.msra.mxu0 %v399
  %926 = vmatpush.bf16.msra.mxu0 %v391
  %927 = vmatpush.bf16.msra.mxu0 %v383
  %928 = vmatpush.bf16.msra.mxu0 %v375
  %929 = vmatpush.bf16.msra.mxu0 %v367
  %930 = vmatpush.bf16.msra.mxu0 %v359
  %931 = vmatpush.bf16.msra.mxu0 %v351
  %932 = vmatmul.bf16.gmra.mxu0 %v845
  %v933 = vpop.f32.mrf.mxu0
  %v934 = vadd.f32 0.0, %v933
  %v935 = vpop.f32.mrf.mxu0
  %936 = vdwg.mxu0
  %937 = vmatpush.bf16.msra.mxu0 %v408
  %938 = vmatpush.bf16.msra.mxu0 %v400
  %939 = vmatpush.bf16.msra.mxu0 %v392
  %940 = vmatpush.bf16.msra.mxu0 %v384
  %941 = vmatpush.bf16.msra.mxu0 %v376
  %942 = vmatpush.bf16.msra.mxu0 %v368
  %943 = vmatpush.bf16.msra.mxu0 %v360
  %944 = vmatpush.bf16.msra.mxu0 %v352
  %945 = vmatmul.bf16.gmra.mxu0 %v845
  %v946 = vpop.f32.mrf.mxu0
  %v947 = vadd.f32 0.0, %v946
  %v948 = vpop.f32.mrf.mxu0
  %949 = vdwg.mxu0
  %950 = vmatpush.bf16.msra.mxu0 %v701
  %951 = vmatpush.bf16.msra.mxu0 %v697
  %952 = vmatpush.bf16.msra.mxu0 %v693
  %953 = vmatpush.bf16.msra.mxu0 %v689
  %954 = vmatpush.bf16.msra.mxu0 %v685
  %955 = vmatpush.bf16.msra.mxu0 %v681
  %956 = vmatpush.bf16.msra.mxu0 %v677
  %957 = vmatpush.bf16.msra.mxu0 %v673
  %958 = vmatmul.bf16.gmra.mxu0 %v815
  %v959 = vpop.f32.mrf.mxu0
  %v960 = vadd.f32 0.0, %v959
  %v961 = vpop.f32.mrf.mxu0
  %962 = vdwg.mxu0
  %963 = vmatpush.bf16.msra.mxu0 %v702
  %964 = vmatpush.bf16.msra.mxu0 %v698
  %965 = vmatpush.bf16.msra.mxu0 %v694
  %966 = vmatpush.bf16.msra.mxu0 %v690
  %967 = vmatpush.bf16.msra.mxu0 %v686
  %968 = vmatpush.bf16.msra.mxu0 %v682
  %969 = vmatpush.bf16.msra.mxu0 %v678
  %970 = vmatpush.bf16.msra.mxu0 %v674
  %971 = vmatmul.bf16.gmra.mxu0 %v815
  %v972 = vpop.f32.mrf.mxu0
  %v973 = vadd.f32 0.0, %v972
  %v974 = vpop.f32.mrf.mxu0
  %975 = vdwg.mxu0
  %976 = vmatpush.bf16.msra.mxu0 %v703
  %977 = vmatpush.bf16.msra.mxu0 %v699
  %978 = vmatpush.bf16.msra.mxu0 %v695
  %979 = vmatpush.bf16.msra.mxu0 %v691
  %980 = vmatpush.bf16.msra.mxu0 %v687
  %981 = vmatpush.bf16.msra.mxu0 %v683
  %982 = vmatpush.bf16.msra.mxu0 %v679
  %983 = vmatpush.bf16.msra.mxu0 %v675
  %984 = vmatmul.bf16.gmra.mxu0 %v815
  %v985 = vpop.f32.mrf.mxu0
  %v986 = vadd.f32 0.0, %v985
  %v987 = vpop.f32.mrf.mxu0
  %988 = vdwg.mxu0
  %989 = vmatpush.bf16.msra.mxu0 %v704
  %990 = vmatpush.bf16.msra.mxu0 %v700
  %991 = vmatpush.bf16.msra.mxu0 %v696
  %992 = vmatpush.bf16.msra.mxu0 %v692
  %993 = vmatpush.bf16.msra.mxu0 %v688
  %994 = vmatpush.bf16.msra.mxu0 %v684
  %995 = vmatpush.bf16.msra.mxu0 %v680
  %996 = vmatpush.bf16.msra.mxu0 %v676
  %997 = vmatmul.bf16.gmra.mxu0 %v815
  %v998 = vpop.f32.mrf.mxu0
  %v999 = vadd.f32 0.0, %v998
  %v1000 = vpop.f32.mrf.mxu0
  %1001 = vdwg.mxu0
  %v1002 = vadd.f32 %v908, %v960
  %v1003 = vadd.f32 %v921, %v973
  %v1004 = vadd.f32 %v934, %v986
  %v1005 = vadd.f32 %v947, %v999
  %v1006 = vadd.f32 %v1002, %v122
  %v1007 = vadd.f32 %v1003, %v123
  %v1008 = vadd.f32 %v1004, %v124
  %v1009 = vadd.f32 %v1005, %v125
  %v1010 = vmul.f32 %v1006, 0.5
  %v1011 = vtanh.pop %v1010
  %v1012 = vmul.f32 %v1011, 0.5
  %v1013 = vadd.f32 %v1012, 0.5
  %v1014 = vmul.f32 %v1007, 0.5
  %v1015 = vtanh.pop %v1014
  %v1016 = vmul.f32 %v1015, 0.5
  %v1017 = vadd.f32 %v1016, 0.5
  %v1018 = vtanh.pop %v1008
  %v1019 = vmul.f32 %v1009, 0.5
  %v1020 = vtanh.pop %v1019
  %v1021 = vmul.f32 %v1020, 0.5
  %v1022 = vadd.f32 %v1021, 0.5
  %v1023 = vmul.f32 %v1017, %v812
  %v1024 = vmul.f32 %v1013, %v1018
  %v1025 = vadd.f32 %v1023, %v1024
  %v1026 = vtanh.pop %v1025
  %v1027 = vmul.f32 %v1022, %v1026
  %v1028 = vpack.c.bf16 %v1027, %v1027
  %s1029 = smul.u32 2, 4
  %s1030 = smul.addr %s1029, 8
  %s1031 = scalar_lea.vmem %s0, %s1030
  %v1032 = vld [vmem:[%s1031] sm:$0xff]
  %v1033 = vld [vmem:[%s1031 + $0x8] sm:$0xff]
  %v1034 = vld [vmem:[%s1031 + $0x10] sm:$0xff]
  %v1035 = vld [vmem:[%s1031 + $0x18] sm:$0xff]
  %v1036 = vadd.f32 %v1032, %v856
  %v1037 = vadd.f32 %v1033, %v869
  %v1038 = vadd.f32 %v1034, %v882
  %v1039 = vadd.f32 %v1035, %v895
  %v1040 = vmul.f32 %v1036, 0.5
  %v1041 = vtanh.pop %v1040
  %v1042 = vmul.f32 %v1041, 0.5
  %v1043 = vadd.f32 %v1042, 0.5
  %v1044 = vmul.f32 %v1037, 0.5
  %v1045 = vtanh.pop %v1044
  %v1046 = vmul.f32 %v1045, 0.5
  %v1047 = vadd.f32 %v1046, 0.5
  %v1048 = vtanh.pop %v1038
  %v1049 = vmul.f32 %v1039, 0.5
  %v1050 = vtanh.pop %v1049
  %v1051 = vmul.f32 %v1050, 0.5
  %v1052 = vadd.f32 %v1051, 0.5
  %v1053 = vmul.f32 %v1047, %v842
  %v1054 = vmul.f32 %v1043, %v1048
  %v1055 = vadd.f32 %v1053, %v1054
  %v1056 = vtanh.pop %v1055
  %v1057 = vmul.f32 %v1052, %v1056
  %v1058 = vpack.c.bf16 %v1057, %v1057
  %1059 = vmatpush.bf16.msra.mxu0 %v401
  %1060 = vmatpush.bf16.msra.mxu0 %v393
  %1061 = vmatpush.bf16.msra.mxu0 %v385
  %1062 = vmatpush.bf16.msra.mxu0 %v377
  %1063 = vmatpush.bf16.msra.mxu0 %v369
  %1064 = vmatpush.bf16.msra.mxu0 %v361
  %1065 = vmatpush.bf16.msra.mxu0 %v353
  %1066 = vmatpush.bf16.msra.mxu0 %v345
  %1067 = vmatmul.bf16.gmra.mxu0 %v1058
  %v1068 = vpop.f32.mrf.mxu0
  %v1069 = vadd.f32 0.0, %v1068
  %v1070 = vpop.f32.mrf.mxu0
  %1071 = vdwg.mxu0
  %1072 = vmatpush.bf16.msra.mxu0 %v402
  %1073 = vmatpush.bf16.msra.mxu0 %v394
  %1074 = vmatpush.bf16.msra.mxu0 %v386
  %1075 = vmatpush.bf16.msra.mxu0 %v378
  %1076 = vmatpush.bf16.msra.mxu0 %v370
  %1077 = vmatpush.bf16.msra.mxu0 %v362
  %1078 = vmatpush.bf16.msra.mxu0 %v354
  %1079 = vmatpush.bf16.msra.mxu0 %v346
  %1080 = vmatmul.bf16.gmra.mxu0 %v1058
  %v1081 = vpop.f32.mrf.mxu0
  %v1082 = vadd.f32 0.0, %v1081
  %v1083 = vpop.f32.mrf.mxu0
  %1084 = vdwg.mxu0
  %1085 = vmatpush.bf16.msra.mxu0 %v403
  %1086 = vmatpush.bf16.msra.mxu0 %v395
  %1087 = vmatpush.bf16.msra.mxu0 %v387
  %1088 = vmatpush.bf16.msra.mxu0 %v379
  %1089 = vmatpush.bf16.msra.mxu0 %v371
  %1090 = vmatpush.bf16.msra.mxu0 %v363
  %1091 = vmatpush.bf16.msra.mxu0 %v355
  %1092 = vmatpush.bf16.msra.mxu0 %v347
  %1093 = vmatmul.bf16.gmra.mxu0 %v1058
  %v1094 = vpop.f32.mrf.mxu0
  %v1095 = vadd.f32 0.0, %v1094
  %v1096 = vpop.f32.mrf.mxu0
  %1097 = vdwg.mxu0
  %1098 = vmatpush.bf16.msra.mxu0 %v404
  %1099 = vmatpush.bf16.msra.mxu0 %v396
  %1100 = vmatpush.bf16.msra.mxu0 %v388
  %1101 = vmatpush.bf16.msra.mxu0 %v380
  %1102 = vmatpush.bf16.msra.mxu0 %v372
  %1103 = vmatpush.bf16.msra.mxu0 %v364
  %1104 = vmatpush.bf16.msra.mxu0 %v356
  %1105 = vmatpush.bf16.msra.mxu0 %v348
  %1106 = vmatmul.bf16.gmra.mxu0 %v1058
  %v1107 = vpop.f32.mrf.mxu0
  %v1108 = vadd.f32 0.0, %v1107
  %v1109 = vpop.f32.mrf.mxu0
  %1110 = vdwg.mxu0
  %1111 = vmatpush.bf16.msra.mxu0 %v405
  %1112 = vmatpush.bf16.msra.mxu0 %v397
  %1113 = vmatpush.bf16.msra.mxu0 %v389
  %1114 = vmatpush.bf16.msra.mxu0 %v381
  %1115 = vmatpush.bf16.msra.mxu0 %v373
  %1116 = vmatpush.bf16.msra.mxu0 %v365
  %1117 = vmatpush.bf16.msra.mxu0 %v357
  %1118 = vmatpush.bf16.msra.mxu0 %v349
  %1119 = vmatmul.bf16.gmra.mxu0 %v1058
  %v1120 = vpop.f32.mrf.mxu0
  %v1121 = vadd.f32 0.0, %v1120
  %v1122 = vpop.f32.mrf.mxu0
  %1123 = vdwg.mxu0
  %1124 = vmatpush.bf16.msra.mxu0 %v406
  %1125 = vmatpush.bf16.msra.mxu0 %v398
  %1126 = vmatpush.bf16.msra.mxu0 %v390
  %1127 = vmatpush.bf16.msra.mxu0 %v382
  %1128 = vmatpush.bf16.msra.mxu0 %v374
  %1129 = vmatpush.bf16.msra.mxu0 %v366
  %1130 = vmatpush.bf16.msra.mxu0 %v358
  %1131 = vmatpush.bf16.msra.mxu0 %v350
  %1132 = vmatmul.bf16.gmra.mxu0 %v1058
  %v1133 = vpop.f32.mrf.mxu0
  %v1134 = vadd.f32 0.0, %v1133
  %v1135 = vpop.f32.mrf.mxu0
  %1136 = vdwg.mxu0
  %1137 = vmatpush.bf16.msra.mxu0 %v407
  %1138 = vmatpush.bf16.msra.mxu0 %v399
  %1139 = vmatpush.bf16.msra.mxu0 %v391
  %1140 = vmatpush.bf16.msra.mxu0 %v383
  %1141 = vmatpush.bf16.msra.mxu0 %v375
  %1142 = vmatpush.bf16.msra.mxu0 %v367
  %1143 = vmatpush.bf16.msra.mxu0 %v359
  %1144 = vmatpush.bf16.msra.mxu0 %v351
  %1145 = vmatmul.bf16.gmra.mxu0 %v1058
  %v1146 = vpop.f32.mrf.mxu0
  %v1147 = vadd.f32 0.0, %v1146
  %v1148 = vpop.f32.mrf.mxu0
  %1149 = vdwg.mxu0
  %1150 = vmatpush.bf16.msra.mxu0 %v408
  %1151 = vmatpush.bf16.msra.mxu0 %v400
  %1152 = vmatpush.bf16.msra.mxu0 %v392
  %1153 = vmatpush.bf16.msra.mxu0 %v384
  %1154 = vmatpush.bf16.msra.mxu0 %v376
  %1155 = vmatpush.bf16.msra.mxu0 %v368
  %1156 = vmatpush.bf16.msra.mxu0 %v360
  %1157 = vmatpush.bf16.msra.mxu0 %v352
  %1158 = vmatmul.bf16.gmra.mxu0 %v1058
  %v1159 = vpop.f32.mrf.mxu0
  %v1160 = vadd.f32 0.0, %v1159
  %v1161 = vpop.f32.mrf.mxu0
  %1162 = vdwg.mxu0
  %1163 = vmatpush.bf16.msra.mxu0 %v701
  %1164 = vmatpush.bf16.msra.mxu0 %v697
  %1165 = vmatpush.bf16.msra.mxu0 %v693
  %1166 = vmatpush.bf16.msra.mxu0 %v689
  %1167 = vmatpush.bf16.msra.mxu0 %v685
  %1168 = vmatpush.bf16.msra.mxu0 %v681
  %1169 = vmatpush.bf16.msra.mxu0 %v677
  %1170 = vmatpush.bf16.msra.mxu0 %v673
  %1171 = vmatmul.bf16.gmra.mxu0 %v1028
  %v1172 = vpop.f32.mrf.mxu0
  %v1173 = vadd.f32 0.0, %v1172
  %v1174 = vpop.f32.mrf.mxu0
  %1175 = vdwg.mxu0
  %1176 = vmatpush.bf16.msra.mxu0 %v702
  %1177 = vmatpush.bf16.msra.mxu0 %v698
  %1178 = vmatpush.bf16.msra.mxu0 %v694
  %1179 = vmatpush.bf16.msra.mxu0 %v690
  %1180 = vmatpush.bf16.msra.mxu0 %v686
  %1181 = vmatpush.bf16.msra.mxu0 %v682
  %1182 = vmatpush.bf16.msra.mxu0 %v678
  %1183 = vmatpush.bf16.msra.mxu0 %v674
  %1184 = vmatmul.bf16.gmra.mxu0 %v1028
  %v1185 = vpop.f32.mrf.mxu0
  %v1186 = vadd.f32 0.0, %v1185
  %v1187 = vpop.f32.mrf.mxu0
  %1188 = vdwg.mxu0
  %1189 = vmatpush.bf16.msra.mxu0 %v703
  %1190 = vmatpush.bf16.msra.mxu0 %v699
  %1191 = vmatpush.bf16.msra.mxu0 %v695
  %1192 = vmatpush.bf16.msra.mxu0 %v691
  %1193 = vmatpush.bf16.msra.mxu0 %v687
  %1194 = vmatpush.bf16.msra.mxu0 %v683
  %1195 = vmatpush.bf16.msra.mxu0 %v679
  %1196 = vmatpush.bf16.msra.mxu0 %v675
  %1197 = vmatmul.bf16.gmra.mxu0 %v1028
  %v1198 = vpop.f32.mrf.mxu0
  %v1199 = vadd.f32 0.0, %v1198
  %v1200 = vpop.f32.mrf.mxu0
  %1201 = vdwg.mxu0
  %1202 = vmatpush.bf16.msra.mxu0 %v704
  %1203 = vmatpush.bf16.msra.mxu0 %v700
  %1204 = vmatpush.bf16.msra.mxu0 %v696
  %1205 = vmatpush.bf16.msra.mxu0 %v692
  %1206 = vmatpush.bf16.msra.mxu0 %v688
  %1207 = vmatpush.bf16.msra.mxu0 %v684
  %1208 = vmatpush.bf16.msra.mxu0 %v680
  %1209 = vmatpush.bf16.msra.mxu0 %v676
  %1210 = vmatmul.bf16.gmra.mxu0 %v1028
  %v1211 = vpop.f32.mrf.mxu0
  %v1212 = vadd.f32 0.0, %v1211
  %v1213 = vpop.f32.mrf.mxu0
  %1214 = vdwg.mxu0
  %v1215 = vadd.f32 %v1121, %v1173
  %v1216 = vadd.f32 %v1134, %v1186
  %v1217 = vadd.f32 %v1147, %v1199
  %v1218 = vadd.f32 %v1160, %v1212
  %v1219 = vadd.f32 %v1215, %v122
  %v1220 = vadd.f32 %v1216, %v123
  %v1221 = vadd.f32 %v1217, %v124
  %v1222 = vadd.f32 %v1218, %v125
  %v1223 = vmul.f32 %v1219, 0.5
  %v1224 = vtanh.pop %v1223
  %v1225 = vmul.f32 %v1224, 0.5
  %v1226 = vadd.f32 %v1225, 0.5
  %v1227 = vmul.f32 %v1220, 0.5
  %v1228 = vtanh.pop %v1227
  %v1229 = vmul.f32 %v1228, 0.5
  %v1230 = vadd.f32 %v1229, 0.5
  %v1231 = vtanh.pop %v1221
  %v1232 = vmul.f32 %v1222, 0.5
  %v1233 = vtanh.pop %v1232
  %v1234 = vmul.f32 %v1233, 0.5
  %v1235 = vadd.f32 %v1234, 0.5
  %v1236 = vmul.f32 %v1230, %v1025
  %v1237 = vmul.f32 %v1226, %v1231
  %v1238 = vadd.f32 %v1236, %v1237
  %v1239 = vtanh.pop %v1238
  %v1240 = vmul.f32 %v1235, %v1239
  %v1241 = vpack.c.bf16 %v1240, %v1240
  %s1242 = smul.u32 3, 4
  %s1243 = smul.addr %s1242, 8
  %s1244 = scalar_lea.vmem %s0, %s1243
  %v1245 = vld [vmem:[%s1244] sm:$0xff]
  %v1246 = vld [vmem:[%s1244 + $0x8] sm:$0xff]
  %v1247 = vld [vmem:[%s1244 + $0x10] sm:$0xff]
  %v1248 = vld [vmem:[%s1244 + $0x18] sm:$0xff]
  %v1249 = vadd.f32 %v1245, %v1069
  %v1250 = vadd.f32 %v1246, %v1082
  %v1251 = vadd.f32 %v1247, %v1095
  %v1252 = vadd.f32 %v1248, %v1108
  %v1253 = vmul.f32 %v1249, 0.5
  %v1254 = vtanh.pop %v1253
  %v1255 = vmul.f32 %v1254, 0.5
  %v1256 = vadd.f32 %v1255, 0.5
  %v1257 = vmul.f32 %v1250, 0.5
  %v1258 = vtanh.pop %v1257
  %v1259 = vmul.f32 %v1258, 0.5
  %v1260 = vadd.f32 %v1259, 0.5
  %v1261 = vtanh.pop %v1251
  %v1262 = vmul.f32 %v1252, 0.5
  %v1263 = vtanh.pop %v1262
  %v1264 = vmul.f32 %v1263, 0.5
  %v1265 = vadd.f32 %v1264, 0.5
  %v1266 = vmul.f32 %v1260, %v1055
  %v1267 = vmul.f32 %v1256, %v1261
  %v1268 = vadd.f32 %v1266, %v1267
  %v1269 = vtanh.pop %v1268
  %v1270 = vmul.f32 %v1265, %v1269
  %v1271 = vpack.c.bf16 %v1270, %v1270
  %1272 = vmatpush.bf16.msra.mxu0 %v401
  %1273 = vmatpush.bf16.msra.mxu0 %v393
  %1274 = vmatpush.bf16.msra.mxu0 %v385
  %1275 = vmatpush.bf16.msra.mxu0 %v377
  %1276 = vmatpush.bf16.msra.mxu0 %v369
  %1277 = vmatpush.bf16.msra.mxu0 %v361
  %1278 = vmatpush.bf16.msra.mxu0 %v353
  %1279 = vmatpush.bf16.msra.mxu0 %v345
  %1280 = vmatmul.bf16.gmra.mxu0 %v1271
  %v1281 = vpop.f32.mrf.mxu0
  %v1282 = vadd.f32 0.0, %v1281
  %v1283 = vpop.f32.mrf.mxu0
  %1284 = vdwg.mxu0
  %1285 = vmatpush.bf16.msra.mxu0 %v402
  %1286 = vmatpush.bf16.msra.mxu0 %v394
  %1287 = vmatpush.bf16.msra.mxu0 %v386
  %1288 = vmatpush.bf16.msra.mxu0 %v378
  %1289 = vmatpush.bf16.msra.mxu0 %v370
  %1290 = vmatpush.bf16.msra.mxu0 %v362
  %1291 = vmatpush.bf16.msra.mxu0 %v354
  %1292 = vmatpush.bf16.msra.mxu0 %v346
  %1293 = vmatmul.bf16.gmra.mxu0 %v1271
  %v1294 = vpop.f32.mrf.mxu0
  %v1295 = vadd.f32 0.0, %v1294
  %v1296 = vpop.f32.mrf.mxu0
  %1297 = vdwg.mxu0
  %1298 = vmatpush.bf16.msra.mxu0 %v403
  %1299 = vmatpush.bf16.msra.mxu0 %v395
  %1300 = vmatpush.bf16.msra.mxu0 %v387
  %1301 = vmatpush.bf16.msra.mxu0 %v379
  %1302 = vmatpush.bf16.msra.mxu0 %v371
  %1303 = vmatpush.bf16.msra.mxu0 %v363
  %1304 = vmatpush.bf16.msra.mxu0 %v355
  %1305 = vmatpush.bf16.msra.mxu0 %v347
  %1306 = vmatmul.bf16.gmra.mxu0 %v1271
  %v1307 = vpop.f32.mrf.mxu0
  %v1308 = vadd.f32 0.0, %v1307
  %v1309 = vpop.f32.mrf.mxu0
  %1310 = vdwg.mxu0
  %1311 = vmatpush.bf16.msra.mxu0 %v404
  %1312 = vmatpush.bf16.msra.mxu0 %v396
  %1313 = vmatpush.bf16.msra.mxu0 %v388
  %1314 = vmatpush.bf16.msra.mxu0 %v380
  %1315 = vmatpush.bf16.msra.mxu0 %v372
  %1316 = vmatpush.bf16.msra.mxu0 %v364
  %1317 = vmatpush.bf16.msra.mxu0 %v356
  %1318 = vmatpush.bf16.msra.mxu0 %v348
  %1319 = vmatmul.bf16.gmra.mxu0 %v1271
  %v1320 = vpop.f32.mrf.mxu0
  %v1321 = vadd.f32 0.0, %v1320
  %v1322 = vpop.f32.mrf.mxu0
  %1323 = vdwg.mxu0
  %1324 = vmatpush.bf16.msra.mxu0 %v405
  %1325 = vmatpush.bf16.msra.mxu0 %v397
  %1326 = vmatpush.bf16.msra.mxu0 %v389
  %1327 = vmatpush.bf16.msra.mxu0 %v381
  %1328 = vmatpush.bf16.msra.mxu0 %v373
  %1329 = vmatpush.bf16.msra.mxu0 %v365
  %1330 = vmatpush.bf16.msra.mxu0 %v357
  %1331 = vmatpush.bf16.msra.mxu0 %v349
  %1332 = vmatmul.bf16.gmra.mxu0 %v1271
  %v1333 = vpop.f32.mrf.mxu0
  %v1334 = vadd.f32 0.0, %v1333
  %v1335 = vpop.f32.mrf.mxu0
  %1336 = vdwg.mxu0
  %1337 = vmatpush.bf16.msra.mxu0 %v406
  %1338 = vmatpush.bf16.msra.mxu0 %v398
  %1339 = vmatpush.bf16.msra.mxu0 %v390
  %1340 = vmatpush.bf16.msra.mxu0 %v382
  %1341 = vmatpush.bf16.msra.mxu0 %v374
  %1342 = vmatpush.bf16.msra.mxu0 %v366
  %1343 = vmatpush.bf16.msra.mxu0 %v358
  %1344 = vmatpush.bf16.msra.mxu0 %v350
  %1345 = vmatmul.bf16.gmra.mxu0 %v1271
  %v1346 = vpop.f32.mrf.mxu0
  %v1347 = vadd.f32 0.0, %v1346
  %v1348 = vpop.f32.mrf.mxu0
  %1349 = vdwg.mxu0
  %1350 = vmatpush.bf16.msra.mxu0 %v407
  %1351 = vmatpush.bf16.msra.mxu0 %v399
  %1352 = vmatpush.bf16.msra.mxu0 %v391
  %1353 = vmatpush.bf16.msra.mxu0 %v383
  %1354 = vmatpush.bf16.msra.mxu0 %v375
  %1355 = vmatpush.bf16.msra.mxu0 %v367
  %1356 = vmatpush.bf16.msra.mxu0 %v359
  %1357 = vmatpush.bf16.msra.mxu0 %v351
  %1358 = vmatmul.bf16.gmra.mxu0 %v1271
  %v1359 = vpop.f32.mrf.mxu0
  %v1360 = vadd.f32 0.0, %v1359
  %v1361 = vpop.f32.mrf.mxu0
  %1362 = vdwg.mxu0
  %1363 = vmatpush.bf16.msra.mxu0 %v408
  %1364 = vmatpush.bf16.msra.mxu0 %v400
  %1365 = vmatpush.bf16.msra.mxu0 %v392
  %1366 = vmatpush.bf16.msra.mxu0 %v384
  %1367 = vmatpush.bf16.msra.mxu0 %v376
  %1368 = vmatpush.bf16.msra.mxu0 %v368
  %1369 = vmatpush.bf16.msra.mxu0 %v360
  %1370 = vmatpush.bf16.msra.mxu0 %v352
  %1371 = vmatmul.bf16.gmra.mxu0 %v1271
  %v1372 = vpop.f32.mrf.mxu0
  %v1373 = vadd.f32 0.0, %v1372
  %v1374 = vpop.f32.mrf.mxu0
  %1375 = vdwg.mxu0
  %1376 = vmatpush.bf16.msra.mxu0 %v701
  %1377 = vmatpush.bf16.msra.mxu0 %v697
  %1378 = vmatpush.bf16.msra.mxu0 %v693
  %1379 = vmatpush.bf16.msra.mxu0 %v689
  %1380 = vmatpush.bf16.msra.mxu0 %v685
  %1381 = vmatpush.bf16.msra.mxu0 %v681
  %1382 = vmatpush.bf16.msra.mxu0 %v677
  %1383 = vmatpush.bf16.msra.mxu0 %v673
  %1384 = vmatmul.bf16.gmra.mxu0 %v1241
  %v1385 = vpop.f32.mrf.mxu0
  %v1386 = vadd.f32 0.0, %v1385
  %v1387 = vpop.f32.mrf.mxu0
  %1388 = vdwg.mxu0
  %1389 = vmatpush.bf16.msra.mxu0 %v702
  %1390 = vmatpush.bf16.msra.mxu0 %v698
  %1391 = vmatpush.bf16.msra.mxu0 %v694
  %1392 = vmatpush.bf16.msra.mxu0 %v690
  %1393 = vmatpush.bf16.msra.mxu0 %v686
  %1394 = vmatpush.bf16.msra.mxu0 %v682
  %1395 = vmatpush.bf16.msra.mxu0 %v678
  %1396 = vmatpush.bf16.msra.mxu0 %v674
  %1397 = vmatmul.bf16.gmra.mxu0 %v1241
  %v1398 = vpop.f32.mrf.mxu0
  %v1399 = vadd.f32 0.0, %v1398
  %v1400 = vpop.f32.mrf.mxu0
  %1401 = vdwg.mxu0
  %1402 = vmatpush.bf16.msra.mxu0 %v703
  %1403 = vmatpush.bf16.msra.mxu0 %v699
  %1404 = vmatpush.bf16.msra.mxu0 %v695
  %1405 = vmatpush.bf16.msra.mxu0 %v691
  %1406 = vmatpush.bf16.msra.mxu0 %v687
  %1407 = vmatpush.bf16.msra.mxu0 %v683
  %1408 = vmatpush.bf16.msra.mxu0 %v679
  %1409 = vmatpush.bf16.msra.mxu0 %v675
  %1410 = vmatmul.bf16.gmra.mxu0 %v1241
  %v1411 = vpop.f32.mrf.mxu0
  %v1412 = vadd.f32 0.0, %v1411
  %v1413 = vpop.f32.mrf.mxu0
  %1414 = vdwg.mxu0
  %1415 = vmatpush.bf16.msra.mxu0 %v704
  %1416 = vmatpush.bf16.msra.mxu0 %v700
  %1417 = vmatpush.bf16.msra.mxu0 %v696
  %1418 = vmatpush.bf16.msra.mxu0 %v692
  %1419 = vmatpush.bf16.msra.mxu0 %v688
  %1420 = vmatpush.bf16.msra.mxu0 %v684
  %1421 = vmatpush.bf16.msra.mxu0 %v680
  %1422 = vmatpush.bf16.msra.mxu0 %v676
  %1423 = vmatmul.bf16.gmra.mxu0 %v1241
  %v1424 = vpop.f32.mrf.mxu0
  %v1425 = vadd.f32 0.0, %v1424
  %v1426 = vpop.f32.mrf.mxu0
  %1427 = vdwg.mxu0
  %v1428 = vadd.f32 %v1334, %v1386
  %v1429 = vadd.f32 %v1347, %v1399
  %v1430 = vadd.f32 %v1360, %v1412
  %v1431 = vadd.f32 %v1373, %v1425
  %v1432 = vadd.f32 %v1428, %v122
  %v1433 = vadd.f32 %v1429, %v123
  %v1434 = vadd.f32 %v1430, %v124
  %v1435 = vadd.f32 %v1431, %v125
  %v1436 = vmul.f32 %v1432, 0.5
  %v1437 = vtanh.pop %v1436
  %v1438 = vmul.f32 %v1437, 0.5
  %v1439 = vadd.f32 %v1438, 0.5
  %v1440 = vmul.f32 %v1433, 0.5
  %v1441 = vtanh.pop %v1440
  %v1442 = vmul.f32 %v1441, 0.5
  %v1443 = vadd.f32 %v1442, 0.5
  %v1444 = vtanh.pop %v1434
  %v1445 = vmul.f32 %v1435, 0.5
  %v1446 = vtanh.pop %v1445
  %v1447 = vmul.f32 %v1446, 0.5
  %v1448 = vadd.f32 %v1447, 0.5
  %v1449 = vmul.f32 %v1443, %v1238
  %v1450 = vmul.f32 %v1439, %v1444
  %v1451 = vadd.f32 %v1449, %v1450
  %v1452 = vtanh.pop %v1451
  %v1453 = vmul.f32 %v1448, %v1452
  %v1454 = vpack.c.bf16 %v1453, %v1453
  %s1455 = smul.u32 4, 4
  %s1456 = smul.addr %s1455, 8
  %s1457 = scalar_lea.vmem %s0, %s1456
  %v1458 = vld [vmem:[%s1457] sm:$0xff]
  %v1459 = vld [vmem:[%s1457 + $0x8] sm:$0xff]
  %v1460 = vld [vmem:[%s1457 + $0x10] sm:$0xff]
  %v1461 = vld [vmem:[%s1457 + $0x18] sm:$0xff]
  %v1462 = vadd.f32 %v1458, %v1282
  %v1463 = vadd.f32 %v1459, %v1295
  %v1464 = vadd.f32 %v1460, %v1308
  %v1465 = vadd.f32 %v1461, %v1321
  %v1466 = vmul.f32 %v1462, 0.5
  %v1467 = vtanh.pop %v1466
  %v1468 = vmul.f32 %v1467, 0.5
  %v1469 = vadd.f32 %v1468, 0.5
  %v1470 = vmul.f32 %v1463, 0.5
  %v1471 = vtanh.pop %v1470
  %v1472 = vmul.f32 %v1471, 0.5
  %v1473 = vadd.f32 %v1472, 0.5
  %v1474 = vtanh.pop %v1464
  %v1475 = vmul.f32 %v1465, 0.5
  %v1476 = vtanh.pop %v1475
  %v1477 = vmul.f32 %v1476, 0.5
  %v1478 = vadd.f32 %v1477, 0.5
  %v1479 = vmul.f32 %v1473, %v1268
  %v1480 = vmul.f32 %v1469, %v1474
  %v1481 = vadd.f32 %v1479, %v1480
  %v1482 = vtanh.pop %v1481
  %v1483 = vmul.f32 %v1478, %v1482
  %v1484 = vpack.c.bf16 %v1483, %v1483
  %1485 = vmatpush.bf16.msra.mxu0 %v401
  %1486 = vmatpush.bf16.msra.mxu0 %v393
  %1487 = vmatpush.bf16.msra.mxu0 %v385
  %1488 = vmatpush.bf16.msra.mxu0 %v377
  %1489 = vmatpush.bf16.msra.mxu0 %v369
  %1490 = vmatpush.bf16.msra.mxu0 %v361
  %1491 = vmatpush.bf16.msra.mxu0 %v353
  %1492 = vmatpush.bf16.msra.mxu0 %v345
  %1493 = vmatmul.bf16.gmra.mxu0 %v1484
  %v1494 = vpop.f32.mrf.mxu0
  %v1495 = vadd.f32 0.0, %v1494
  %v1496 = vpop.f32.mrf.mxu0
  %1497 = vdwg.mxu0
  %1498 = vmatpush.bf16.msra.mxu0 %v402
  %1499 = vmatpush.bf16.msra.mxu0 %v394
  %1500 = vmatpush.bf16.msra.mxu0 %v386
  %1501 = vmatpush.bf16.msra.mxu0 %v378
  %1502 = vmatpush.bf16.msra.mxu0 %v370
  %1503 = vmatpush.bf16.msra.mxu0 %v362
  %1504 = vmatpush.bf16.msra.mxu0 %v354
  %1505 = vmatpush.bf16.msra.mxu0 %v346
  %1506 = vmatmul.bf16.gmra.mxu0 %v1484
  %v1507 = vpop.f32.mrf.mxu0
  %v1508 = vadd.f32 0.0, %v1507
  %v1509 = vpop.f32.mrf.mxu0
  %1510 = vdwg.mxu0
  %1511 = vmatpush.bf16.msra.mxu0 %v403
  %1512 = vmatpush.bf16.msra.mxu0 %v395
  %1513 = vmatpush.bf16.msra.mxu0 %v387
  %1514 = vmatpush.bf16.msra.mxu0 %v379
  %1515 = vmatpush.bf16.msra.mxu0 %v371
  %1516 = vmatpush.bf16.msra.mxu0 %v363
  %1517 = vmatpush.bf16.msra.mxu0 %v355
  %1518 = vmatpush.bf16.msra.mxu0 %v347
  %1519 = vmatmul.bf16.gmra.mxu0 %v1484
  %v1520 = vpop.f32.mrf.mxu0
  %v1521 = vadd.f32 0.0, %v1520
  %v1522 = vpop.f32.mrf.mxu0
  %1523 = vdwg.mxu0
  %1524 = vmatpush.bf16.msra.mxu0 %v404
  %1525 = vmatpush.bf16.msra.mxu0 %v396
  %1526 = vmatpush.bf16.msra.mxu0 %v388
  %1527 = vmatpush.bf16.msra.mxu0 %v380
  %1528 = vmatpush.bf16.msra.mxu0 %v372
  %1529 = vmatpush.bf16.msra.mxu0 %v364
  %1530 = vmatpush.bf16.msra.mxu0 %v356
  %1531 = vmatpush.bf16.msra.mxu0 %v348
  %1532 = vmatmul.bf16.gmra.mxu0 %v1484
  %v1533 = vpop.f32.mrf.mxu0
  %v1534 = vadd.f32 0.0, %v1533
  %v1535 = vpop.f32.mrf.mxu0
  %1536 = vdwg.mxu0
  %1537 = vmatpush.bf16.msra.mxu0 %v405
  %1538 = vmatpush.bf16.msra.mxu0 %v397
  %1539 = vmatpush.bf16.msra.mxu0 %v389
  %1540 = vmatpush.bf16.msra.mxu0 %v381
  %1541 = vmatpush.bf16.msra.mxu0 %v373
  %1542 = vmatpush.bf16.msra.mxu0 %v365
  %1543 = vmatpush.bf16.msra.mxu0 %v357
  %1544 = vmatpush.bf16.msra.mxu0 %v349
  %1545 = vmatmul.bf16.gmra.mxu0 %v1484
  %v1546 = vpop.f32.mrf.mxu0
  %v1547 = vadd.f32 0.0, %v1546
  %v1548 = vpop.f32.mrf.mxu0
  %1549 = vdwg.mxu0
  %1550 = vmatpush.bf16.msra.mxu0 %v406
  %1551 = vmatpush.bf16.msra.mxu0 %v398
  %1552 = vmatpush.bf16.msra.mxu0 %v390
  %1553 = vmatpush.bf16.msra.mxu0 %v382
  %1554 = vmatpush.bf16.msra.mxu0 %v374
  %1555 = vmatpush.bf16.msra.mxu0 %v366
  %1556 = vmatpush.bf16.msra.mxu0 %v358
  %1557 = vmatpush.bf16.msra.mxu0 %v350
  %1558 = vmatmul.bf16.gmra.mxu0 %v1484
  %v1559 = vpop.f32.mrf.mxu0
  %v1560 = vadd.f32 0.0, %v1559
  %v1561 = vpop.f32.mrf.mxu0
  %1562 = vdwg.mxu0
  %1563 = vmatpush.bf16.msra.mxu0 %v407
  %1564 = vmatpush.bf16.msra.mxu0 %v399
  %1565 = vmatpush.bf16.msra.mxu0 %v391
  %1566 = vmatpush.bf16.msra.mxu0 %v383
  %1567 = vmatpush.bf16.msra.mxu0 %v375
  %1568 = vmatpush.bf16.msra.mxu0 %v367
  %1569 = vmatpush.bf16.msra.mxu0 %v359
  %1570 = vmatpush.bf16.msra.mxu0 %v351
  %1571 = vmatmul.bf16.gmra.mxu0 %v1484
  %v1572 = vpop.f32.mrf.mxu0
  %v1573 = vadd.f32 0.0, %v1572
  %v1574 = vpop.f32.mrf.mxu0
  %1575 = vdwg.mxu0
  %1576 = vmatpush.bf16.msra.mxu0 %v408
  %1577 = vmatpush.bf16.msra.mxu0 %v400
  %1578 = vmatpush.bf16.msra.mxu0 %v392
  %1579 = vmatpush.bf16.msra.mxu0 %v384
  %1580 = vmatpush.bf16.msra.mxu0 %v376
  %1581 = vmatpush.bf16.msra.mxu0 %v368
  %1582 = vmatpush.bf16.msra.mxu0 %v360
  %1583 = vmatpush.bf16.msra.mxu0 %v352
  %1584 = vmatmul.bf16.gmra.mxu0 %v1484
  %v1585 = vpop.f32.mrf.mxu0
  %v1586 = vadd.f32 0.0, %v1585
  %v1587 = vpop.f32.mrf.mxu0
  %1588 = vdwg.mxu0
  %1589 = vmatpush.bf16.msra.mxu0 %v701
  %1590 = vmatpush.bf16.msra.mxu0 %v697
  %1591 = vmatpush.bf16.msra.mxu0 %v693
  %1592 = vmatpush.bf16.msra.mxu0 %v689
  %1593 = vmatpush.bf16.msra.mxu0 %v685
  %1594 = vmatpush.bf16.msra.mxu0 %v681
  %1595 = vmatpush.bf16.msra.mxu0 %v677
  %1596 = vmatpush.bf16.msra.mxu0 %v673
  %1597 = vmatmul.bf16.gmra.mxu0 %v1454
  %v1598 = vpop.f32.mrf.mxu0
  %v1599 = vadd.f32 0.0, %v1598
  %v1600 = vpop.f32.mrf.mxu0
  %1601 = vdwg.mxu0
  %1602 = vmatpush.bf16.msra.mxu0 %v702
  %1603 = vmatpush.bf16.msra.mxu0 %v698
  %1604 = vmatpush.bf16.msra.mxu0 %v694
  %1605 = vmatpush.bf16.msra.mxu0 %v690
  %1606 = vmatpush.bf16.msra.mxu0 %v686
  %1607 = vmatpush.bf16.msra.mxu0 %v682
  %1608 = vmatpush.bf16.msra.mxu0 %v678
  %1609 = vmatpush.bf16.msra.mxu0 %v674
  %1610 = vmatmul.bf16.gmra.mxu0 %v1454
  %v1611 = vpop.f32.mrf.mxu0
  %v1612 = vadd.f32 0.0, %v1611
  %v1613 = vpop.f32.mrf.mxu0
  %1614 = vdwg.mxu0
  %1615 = vmatpush.bf16.msra.mxu0 %v703
  %1616 = vmatpush.bf16.msra.mxu0 %v699
  %1617 = vmatpush.bf16.msra.mxu0 %v695
  %1618 = vmatpush.bf16.msra.mxu0 %v691
  %1619 = vmatpush.bf16.msra.mxu0 %v687
  %1620 = vmatpush.bf16.msra.mxu0 %v683
  %1621 = vmatpush.bf16.msra.mxu0 %v679
  %1622 = vmatpush.bf16.msra.mxu0 %v675
  %1623 = vmatmul.bf16.gmra.mxu0 %v1454
  %v1624 = vpop.f32.mrf.mxu0
  %v1625 = vadd.f32 0.0, %v1624
  %v1626 = vpop.f32.mrf.mxu0
  %1627 = vdwg.mxu0
  %1628 = vmatpush.bf16.msra.mxu0 %v704
  %1629 = vmatpush.bf16.msra.mxu0 %v700
  %1630 = vmatpush.bf16.msra.mxu0 %v696
  %1631 = vmatpush.bf16.msra.mxu0 %v692
  %1632 = vmatpush.bf16.msra.mxu0 %v688
  %1633 = vmatpush.bf16.msra.mxu0 %v684
  %1634 = vmatpush.bf16.msra.mxu0 %v680
  %1635 = vmatpush.bf16.msra.mxu0 %v676
  %1636 = vmatmul.bf16.gmra.mxu0 %v1454
  %v1637 = vpop.f32.mrf.mxu0
  %v1638 = vadd.f32 0.0, %v1637
  %v1639 = vpop.f32.mrf.mxu0
  %1640 = vdwg.mxu0
  %v1641 = vadd.f32 %v1547, %v1599
  %v1642 = vadd.f32 %v1560, %v1612
  %v1643 = vadd.f32 %v1573, %v1625
  %v1644 = vadd.f32 %v1586, %v1638
  %v1645 = vadd.f32 %v1641, %v122
  %v1646 = vadd.f32 %v1642, %v123
  %v1647 = vadd.f32 %v1643, %v124
  %v1648 = vadd.f32 %v1644, %v125
  %v1649 = vmul.f32 %v1645, 0.5
  %v1650 = vtanh.pop %v1649
  %v1651 = vmul.f32 %v1650, 0.5
  %v1652 = vadd.f32 %v1651, 0.5
  %v1653 = vmul.f32 %v1646, 0.5
  %v1654 = vtanh.pop %v1653
  %v1655 = vmul.f32 %v1654, 0.5
  %v1656 = vadd.f32 %v1655, 0.5
  %v1657 = vtanh.pop %v1647
  %v1658 = vmul.f32 %v1648, 0.5
  %v1659 = vtanh.pop %v1658
  %v1660 = vmul.f32 %v1659, 0.5
  %v1661 = vadd.f32 %v1660, 0.5
  %v1662 = vmul.f32 %v1656, %v1451
  %v1663 = vmul.f32 %v1652, %v1657
  %v1664 = vadd.f32 %v1662, %v1663
  %v1665 = vtanh.pop %v1664
  %v1666 = vmul.f32 %v1661, %v1665
  %v1667 = vpack.c.bf16 %v1666, %v1666
  %s1668 = smul.u32 5, 4
  %s1669 = smul.addr %s1668, 8
  %s1670 = scalar_lea.vmem %s0, %s1669
  %v1671 = vld [vmem:[%s1670] sm:$0xff]
  %v1672 = vld [vmem:[%s1670 + $0x8] sm:$0xff]
  %v1673 = vld [vmem:[%s1670 + $0x10] sm:$0xff]
  %v1674 = vld [vmem:[%s1670 + $0x18] sm:$0xff]
  %v1675 = vadd.f32 %v1671, %v1495
  %v1676 = vadd.f32 %v1672, %v1508
  %v1677 = vadd.f32 %v1673, %v1521
  %v1678 = vadd.f32 %v1674, %v1534
  %v1679 = vmul.f32 %v1675, 0.5
  %v1680 = vtanh.pop %v1679
  %v1681 = vmul.f32 %v1680, 0.5
  %v1682 = vadd.f32 %v1681, 0.5
  %v1683 = vmul.f32 %v1676, 0.5
  %v1684 = vtanh.pop %v1683
  %v1685 = vmul.f32 %v1684, 0.5
  %v1686 = vadd.f32 %v1685, 0.5
  %v1687 = vtanh.pop %v1677
  %v1688 = vmul.f32 %v1678, 0.5
  %v1689 = vtanh.pop %v1688
  %v1690 = vmul.f32 %v1689, 0.5
  %v1691 = vadd.f32 %v1690, 0.5
  %v1692 = vmul.f32 %v1686, %v1481
  %v1693 = vmul.f32 %v1682, %v1687
  %v1694 = vadd.f32 %v1692, %v1693
  %v1695 = vtanh.pop %v1694
  %v1696 = vmul.f32 %v1691, %v1695
  %v1697 = vpack.c.bf16 %v1696, %v1696
  %1698 = vmatpush.bf16.msra.mxu0 %v401
  %1699 = vmatpush.bf16.msra.mxu0 %v393
  %1700 = vmatpush.bf16.msra.mxu0 %v385
  %1701 = vmatpush.bf16.msra.mxu0 %v377
  %1702 = vmatpush.bf16.msra.mxu0 %v369
  %1703 = vmatpush.bf16.msra.mxu0 %v361
  %1704 = vmatpush.bf16.msra.mxu0 %v353
  %1705 = vmatpush.bf16.msra.mxu0 %v345
  %1706 = vmatmul.bf16.gmra.mxu0 %v1697
  %v1707 = vpop.f32.mrf.mxu0
  %v1708 = vadd.f32 0.0, %v1707
  %v1709 = vpop.f32.mrf.mxu0
  %1710 = vdwg.mxu0
  %1711 = vmatpush.bf16.msra.mxu0 %v402
  %1712 = vmatpush.bf16.msra.mxu0 %v394
  %1713 = vmatpush.bf16.msra.mxu0 %v386
  %1714 = vmatpush.bf16.msra.mxu0 %v378
  %1715 = vmatpush.bf16.msra.mxu0 %v370
  %1716 = vmatpush.bf16.msra.mxu0 %v362
  %1717 = vmatpush.bf16.msra.mxu0 %v354
  %1718 = vmatpush.bf16.msra.mxu0 %v346
  %1719 = vmatmul.bf16.gmra.mxu0 %v1697
  %v1720 = vpop.f32.mrf.mxu0
  %v1721 = vadd.f32 0.0, %v1720
  %v1722 = vpop.f32.mrf.mxu0
  %1723 = vdwg.mxu0
  %1724 = vmatpush.bf16.msra.mxu0 %v403
  %1725 = vmatpush.bf16.msra.mxu0 %v395
  %1726 = vmatpush.bf16.msra.mxu0 %v387
  %1727 = vmatpush.bf16.msra.mxu0 %v379
  %1728 = vmatpush.bf16.msra.mxu0 %v371
  %1729 = vmatpush.bf16.msra.mxu0 %v363
  %1730 = vmatpush.bf16.msra.mxu0 %v355
  %1731 = vmatpush.bf16.msra.mxu0 %v347
  %1732 = vmatmul.bf16.gmra.mxu0 %v1697
  %v1733 = vpop.f32.mrf.mxu0
  %v1734 = vadd.f32 0.0, %v1733
  %v1735 = vpop.f32.mrf.mxu0
  %1736 = vdwg.mxu0
  %1737 = vmatpush.bf16.msra.mxu0 %v404
  %1738 = vmatpush.bf16.msra.mxu0 %v396
  %1739 = vmatpush.bf16.msra.mxu0 %v388
  %1740 = vmatpush.bf16.msra.mxu0 %v380
  %1741 = vmatpush.bf16.msra.mxu0 %v372
  %1742 = vmatpush.bf16.msra.mxu0 %v364
  %1743 = vmatpush.bf16.msra.mxu0 %v356
  %1744 = vmatpush.bf16.msra.mxu0 %v348
  %1745 = vmatmul.bf16.gmra.mxu0 %v1697
  %v1746 = vpop.f32.mrf.mxu0
  %v1747 = vadd.f32 0.0, %v1746
  %v1748 = vpop.f32.mrf.mxu0
  %1749 = vdwg.mxu0
  %1750 = vmatpush.bf16.msra.mxu0 %v405
  %1751 = vmatpush.bf16.msra.mxu0 %v397
  %1752 = vmatpush.bf16.msra.mxu0 %v389
  %1753 = vmatpush.bf16.msra.mxu0 %v381
  %1754 = vmatpush.bf16.msra.mxu0 %v373
  %1755 = vmatpush.bf16.msra.mxu0 %v365
  %1756 = vmatpush.bf16.msra.mxu0 %v357
  %1757 = vmatpush.bf16.msra.mxu0 %v349
  %1758 = vmatmul.bf16.gmra.mxu0 %v1697
  %v1759 = vpop.f32.mrf.mxu0
  %v1760 = vadd.f32 0.0, %v1759
  %v1761 = vpop.f32.mrf.mxu0
  %1762 = vdwg.mxu0
  %1763 = vmatpush.bf16.msra.mxu0 %v406
  %1764 = vmatpush.bf16.msra.mxu0 %v398
  %1765 = vmatpush.bf16.msra.mxu0 %v390
  %1766 = vmatpush.bf16.msra.mxu0 %v382
  %1767 = vmatpush.bf16.msra.mxu0 %v374
  %1768 = vmatpush.bf16.msra.mxu0 %v366
  %1769 = vmatpush.bf16.msra.mxu0 %v358
  %1770 = vmatpush.bf16.msra.mxu0 %v350
  %1771 = vmatmul.bf16.gmra.mxu0 %v1697
  %v1772 = vpop.f32.mrf.mxu0
  %v1773 = vadd.f32 0.0, %v1772
  %v1774 = vpop.f32.mrf.mxu0
  %1775 = vdwg.mxu0
  %1776 = vmatpush.bf16.msra.mxu0 %v407
  %1777 = vmatpush.bf16.msra.mxu0 %v399
  %1778 = vmatpush.bf16.msra.mxu0 %v391
  %1779 = vmatpush.bf16.msra.mxu0 %v383
  %1780 = vmatpush.bf16.msra.mxu0 %v375
  %1781 = vmatpush.bf16.msra.mxu0 %v367
  %1782 = vmatpush.bf16.msra.mxu0 %v359
  %1783 = vmatpush.bf16.msra.mxu0 %v351
  %1784 = vmatmul.bf16.gmra.mxu0 %v1697
  %v1785 = vpop.f32.mrf.mxu0
  %v1786 = vadd.f32 0.0, %v1785
  %v1787 = vpop.f32.mrf.mxu0
  %1788 = vdwg.mxu0
  %1789 = vmatpush.bf16.msra.mxu0 %v408
  %1790 = vmatpush.bf16.msra.mxu0 %v400
  %1791 = vmatpush.bf16.msra.mxu0 %v392
  %1792 = vmatpush.bf16.msra.mxu0 %v384
  %1793 = vmatpush.bf16.msra.mxu0 %v376
  %1794 = vmatpush.bf16.msra.mxu0 %v368
  %1795 = vmatpush.bf16.msra.mxu0 %v360
  %1796 = vmatpush.bf16.msra.mxu0 %v352
  %1797 = vmatmul.bf16.gmra.mxu0 %v1697
  %v1798 = vpop.f32.mrf.mxu0
  %v1799 = vadd.f32 0.0, %v1798
  %v1800 = vpop.f32.mrf.mxu0
  %1801 = vdwg.mxu0
  %1802 = vmatpush.bf16.msra.mxu0 %v701
  %1803 = vmatpush.bf16.msra.mxu0 %v697
  %1804 = vmatpush.bf16.msra.mxu0 %v693
  %1805 = vmatpush.bf16.msra.mxu0 %v689
  %1806 = vmatpush.bf16.msra.mxu0 %v685
  %1807 = vmatpush.bf16.msra.mxu0 %v681
  %1808 = vmatpush.bf16.msra.mxu0 %v677
  %1809 = vmatpush.bf16.msra.mxu0 %v673
  %1810 = vmatmul.bf16.gmra.mxu0 %v1667
  %v1811 = vpop.f32.mrf.mxu0
  %v1812 = vadd.f32 0.0, %v1811
  %v1813 = vpop.f32.mrf.mxu0
  %1814 = vdwg.mxu0
  %1815 = vmatpush.bf16.msra.mxu0 %v702
  %1816 = vmatpush.bf16.msra.mxu0 %v698
  %1817 = vmatpush.bf16.msra.mxu0 %v694
  %1818 = vmatpush.bf16.msra.mxu0 %v690
  %1819 = vmatpush.bf16.msra.mxu0 %v686
  %1820 = vmatpush.bf16.msra.mxu0 %v682
  %1821 = vmatpush.bf16.msra.mxu0 %v678
  %1822 = vmatpush.bf16.msra.mxu0 %v674
  %1823 = vmatmul.bf16.gmra.mxu0 %v1667
  %v1824 = vpop.f32.mrf.mxu0
  %v1825 = vadd.f32 0.0, %v1824
  %v1826 = vpop.f32.mrf.mxu0
  %1827 = vdwg.mxu0
  %1828 = vmatpush.bf16.msra.mxu0 %v703
  %1829 = vmatpush.bf16.msra.mxu0 %v699
  %1830 = vmatpush.bf16.msra.mxu0 %v695
  %1831 = vmatpush.bf16.msra.mxu0 %v691
  %1832 = vmatpush.bf16.msra.mxu0 %v687
  %1833 = vmatpush.bf16.msra.mxu0 %v683
  %1834 = vmatpush.bf16.msra.mxu0 %v679
  %1835 = vmatpush.bf16.msra.mxu0 %v675
  %1836 = vmatmul.bf16.gmra.mxu0 %v1667
  %v1837 = vpop.f32.mrf.mxu0
  %v1838 = vadd.f32 0.0, %v1837
  %v1839 = vpop.f32.mrf.mxu0
  %1840 = vdwg.mxu0
  %1841 = vmatpush.bf16.msra.mxu0 %v704
  %1842 = vmatpush.bf16.msra.mxu0 %v700
  %1843 = vmatpush.bf16.msra.mxu0 %v696
  %1844 = vmatpush.bf16.msra.mxu0 %v692
  %1845 = vmatpush.bf16.msra.mxu0 %v688
  %1846 = vmatpush.bf16.msra.mxu0 %v684
  %1847 = vmatpush.bf16.msra.mxu0 %v680
  %1848 = vmatpush.bf16.msra.mxu0 %v676
  %1849 = vmatmul.bf16.gmra.mxu0 %v1667
  %v1850 = vpop.f32.mrf.mxu0
  %v1851 = vadd.f32 0.0, %v1850
  %v1852 = vpop.f32.mrf.mxu0
  %1853 = vdwg.mxu0
  %v1854 = vadd.f32 %v1760, %v1812
  %v1855 = vadd.f32 %v1773, %v1825
  %v1856 = vadd.f32 %v1786, %v1838
  %v1857 = vadd.f32 %v1799, %v1851
  %v1858 = vadd.f32 %v1854, %v122
  %v1859 = vadd.f32 %v1855, %v123
  %v1860 = vadd.f32 %v1856, %v124
  %v1861 = vadd.f32 %v1857, %v125
  %v1862 = vmul.f32 %v1858, 0.5
  %v1863 = vtanh.pop %v1862
  %v1864 = vmul.f32 %v1863, 0.5
  %v1865 = vadd.f32 %v1864, 0.5
  %v1866 = vmul.f32 %v1859, 0.5
  %v1867 = vtanh.pop %v1866
  %v1868 = vmul.f32 %v1867, 0.5
  %v1869 = vadd.f32 %v1868, 0.5
  %v1870 = vtanh.pop %v1860
  %v1871 = vmul.f32 %v1861, 0.5
  %v1872 = vtanh.pop %v1871
  %v1873 = vmul.f32 %v1872, 0.5
  %v1874 = vadd.f32 %v1873, 0.5
  %v1875 = vmul.f32 %v1869, %v1664
  %v1876 = vmul.f32 %v1865, %v1870
  %v1877 = vadd.f32 %v1875, %v1876
  %v1878 = vtanh.pop %v1877
  %v1879 = vmul.f32 %v1874, %v1878
  %v1880 = vpack.c.bf16 %v1879, %v1879
  %s1881 = smul.u32 6, 4
  %s1882 = smul.addr %s1881, 8
  %s1883 = scalar_lea.vmem %s0, %s1882
  %v1884 = vld [vmem:[%s1883] sm:$0xff]
  %v1885 = vld [vmem:[%s1883 + $0x8] sm:$0xff]
  %v1886 = vld [vmem:[%s1883 + $0x10] sm:$0xff]
  %v1887 = vld [vmem:[%s1883 + $0x18] sm:$0xff]
  %v1888 = vadd.f32 %v1884, %v1708
  %v1889 = vadd.f32 %v1885, %v1721
  %v1890 = vadd.f32 %v1886, %v1734
  %v1891 = vadd.f32 %v1887, %v1747
  %v1892 = vmul.f32 %v1888, 0.5
  %v1893 = vtanh.pop %v1892
  %v1894 = vmul.f32 %v1893, 0.5
  %v1895 = vadd.f32 %v1894, 0.5
  %v1896 = vmul.f32 %v1889, 0.5
  %v1897 = vtanh.pop %v1896
  %v1898 = vmul.f32 %v1897, 0.5
  %v1899 = vadd.f32 %v1898, 0.5
  %v1900 = vtanh.pop %v1890
  %v1901 = vmul.f32 %v1891, 0.5
  %v1902 = vtanh.pop %v1901
  %v1903 = vmul.f32 %v1902, 0.5
  %v1904 = vadd.f32 %v1903, 0.5
  %v1905 = vmul.f32 %v1899, %v1694
  %v1906 = vmul.f32 %v1895, %v1900
  %v1907 = vadd.f32 %v1905, %v1906
  %v1908 = vtanh.pop %v1907
  %v1909 = vmul.f32 %v1904, %v1908
  %v1910 = vpack.c.bf16 %v1909, %v1909
  %1911 = vmatpush.bf16.msra.mxu0 %v401
  %1912 = vmatpush.bf16.msra.mxu0 %v393
  %1913 = vmatpush.bf16.msra.mxu0 %v385
  %1914 = vmatpush.bf16.msra.mxu0 %v377
  %1915 = vmatpush.bf16.msra.mxu0 %v369
  %1916 = vmatpush.bf16.msra.mxu0 %v361
  %1917 = vmatpush.bf16.msra.mxu0 %v353
  %1918 = vmatpush.bf16.msra.mxu0 %v345
  %1919 = vmatmul.bf16.gmra.mxu0 %v1910
  %v1920 = vpop.f32.mrf.mxu0
  %v1921 = vadd.f32 0.0, %v1920
  %v1922 = vpop.f32.mrf.mxu0
  %1923 = vdwg.mxu0
  %1924 = vmatpush.bf16.msra.mxu0 %v402
  %1925 = vmatpush.bf16.msra.mxu0 %v394
  %1926 = vmatpush.bf16.msra.mxu0 %v386
  %1927 = vmatpush.bf16.msra.mxu0 %v378
  %1928 = vmatpush.bf16.msra.mxu0 %v370
  %1929 = vmatpush.bf16.msra.mxu0 %v362
  %1930 = vmatpush.bf16.msra.mxu0 %v354
  %1931 = vmatpush.bf16.msra.mxu0 %v346
  %1932 = vmatmul.bf16.gmra.mxu0 %v1910
  %v1933 = vpop.f32.mrf.mxu0
  %v1934 = vadd.f32 0.0, %v1933
  %v1935 = vpop.f32.mrf.mxu0
  %1936 = vdwg.mxu0
  %1937 = vmatpush.bf16.msra.mxu0 %v403
  %1938 = vmatpush.bf16.msra.mxu0 %v395
  %1939 = vmatpush.bf16.msra.mxu0 %v387
  %1940 = vmatpush.bf16.msra.mxu0 %v379
  %1941 = vmatpush.bf16.msra.mxu0 %v371
  %1942 = vmatpush.bf16.msra.mxu0 %v363
  %1943 = vmatpush.bf16.msra.mxu0 %v355
  %1944 = vmatpush.bf16.msra.mxu0 %v347
  %1945 = vmatmul.bf16.gmra.mxu0 %v1910
  %v1946 = vpop.f32.mrf.mxu0
  %v1947 = vadd.f32 0.0, %v1946
  %v1948 = vpop.f32.mrf.mxu0
  %1949 = vdwg.mxu0
  %1950 = vmatpush.bf16.msra.mxu0 %v404
  %1951 = vmatpush.bf16.msra.mxu0 %v396
  %1952 = vmatpush.bf16.msra.mxu0 %v388
  %1953 = vmatpush.bf16.msra.mxu0 %v380
  %1954 = vmatpush.bf16.msra.mxu0 %v372
  %1955 = vmatpush.bf16.msra.mxu0 %v364
  %1956 = vmatpush.bf16.msra.mxu0 %v356
  %1957 = vmatpush.bf16.msra.mxu0 %v348
  %1958 = vmatmul.bf16.gmra.mxu0 %v1910
  %v1959 = vpop.f32.mrf.mxu0
  %v1960 = vadd.f32 0.0, %v1959
  %v1961 = vpop.f32.mrf.mxu0
  %1962 = vdwg.mxu0
  %1963 = vmatpush.bf16.msra.mxu0 %v405
  %1964 = vmatpush.bf16.msra.mxu0 %v397
  %1965 = vmatpush.bf16.msra.mxu0 %v389
  %1966 = vmatpush.bf16.msra.mxu0 %v381
  %1967 = vmatpush.bf16.msra.mxu0 %v373
  %1968 = vmatpush.bf16.msra.mxu0 %v365
  %1969 = vmatpush.bf16.msra.mxu0 %v357
  %1970 = vmatpush.bf16.msra.mxu0 %v349
  %1971 = vmatmul.bf16.gmra.mxu0 %v1910
  %v1972 = vpop.f32.mrf.mxu0
  %v1973 = vadd.f32 0.0, %v1972
  %v1974 = vpop.f32.mrf.mxu0
  %1975 = vdwg.mxu0
  %1976 = vmatpush.bf16.msra.mxu0 %v406
  %1977 = vmatpush.bf16.msra.mxu0 %v398
  %1978 = vmatpush.bf16.msra.mxu0 %v390
  %1979 = vmatpush.bf16.msra.mxu0 %v382
  %1980 = vmatpush.bf16.msra.mxu0 %v374
  %1981 = vmatpush.bf16.msra.mxu0 %v366
  %1982 = vmatpush.bf16.msra.mxu0 %v358
  %1983 = vmatpush.bf16.msra.mxu0 %v350
  %1984 = vmatmul.bf16.gmra.mxu0 %v1910
  %v1985 = vpop.f32.mrf.mxu0
  %v1986 = vadd.f32 0.0, %v1985
  %v1987 = vpop.f32.mrf.mxu0
  %1988 = vdwg.mxu0
  %1989 = vmatpush.bf16.msra.mxu0 %v407
  %1990 = vmatpush.bf16.msra.mxu0 %v399
  %1991 = vmatpush.bf16.msra.mxu0 %v391
  %1992 = vmatpush.bf16.msra.mxu0 %v383
  %1993 = vmatpush.bf16.msra.mxu0 %v375
  %1994 = vmatpush.bf16.msra.mxu0 %v367
  %1995 = vmatpush.bf16.msra.mxu0 %v359
  %1996 = vmatpush.bf16.msra.mxu0 %v351
  %1997 = vmatmul.bf16.gmra.mxu0 %v1910
  %v1998 = vpop.f32.mrf.mxu0
  %v1999 = vadd.f32 0.0, %v1998
  %v2000 = vpop.f32.mrf.mxu0
  %2001 = vdwg.mxu0
  %2002 = vmatpush.bf16.msra.mxu0 %v408
  %2003 = vmatpush.bf16.msra.mxu0 %v400
  %2004 = vmatpush.bf16.msra.mxu0 %v392
  %2005 = vmatpush.bf16.msra.mxu0 %v384
  %2006 = vmatpush.bf16.msra.mxu0 %v376
  %2007 = vmatpush.bf16.msra.mxu0 %v368
  %2008 = vmatpush.bf16.msra.mxu0 %v360
  %2009 = vmatpush.bf16.msra.mxu0 %v352
  %2010 = vmatmul.bf16.gmra.mxu0 %v1910
  %v2011 = vpop.f32.mrf.mxu0
  %v2012 = vadd.f32 0.0, %v2011
  %v2013 = vpop.f32.mrf.mxu0
  %2014 = vdwg.mxu0
  %2015 = vmatpush.bf16.msra.mxu0 %v701
  %2016 = vmatpush.bf16.msra.mxu0 %v697
  %2017 = vmatpush.bf16.msra.mxu0 %v693
  %2018 = vmatpush.bf16.msra.mxu0 %v689
  %2019 = vmatpush.bf16.msra.mxu0 %v685
  %2020 = vmatpush.bf16.msra.mxu0 %v681
  %2021 = vmatpush.bf16.msra.mxu0 %v677
  %2022 = vmatpush.bf16.msra.mxu0 %v673
  %2023 = vmatmul.bf16.gmra.mxu0 %v1880
  %v2024 = vpop.f32.mrf.mxu0
  %v2025 = vadd.f32 0.0, %v2024
  %v2026 = vpop.f32.mrf.mxu0
  %2027 = vdwg.mxu0
  %2028 = vmatpush.bf16.msra.mxu0 %v702
  %2029 = vmatpush.bf16.msra.mxu0 %v698
  %2030 = vmatpush.bf16.msra.mxu0 %v694
  %2031 = vmatpush.bf16.msra.mxu0 %v690
  %2032 = vmatpush.bf16.msra.mxu0 %v686
  %2033 = vmatpush.bf16.msra.mxu0 %v682
  %2034 = vmatpush.bf16.msra.mxu0 %v678
  %2035 = vmatpush.bf16.msra.mxu0 %v674
  %2036 = vmatmul.bf16.gmra.mxu0 %v1880
  %v2037 = vpop.f32.mrf.mxu0
  %v2038 = vadd.f32 0.0, %v2037
  %v2039 = vpop.f32.mrf.mxu0
  %2040 = vdwg.mxu0
  %2041 = vmatpush.bf16.msra.mxu0 %v703
  %2042 = vmatpush.bf16.msra.mxu0 %v699
  %2043 = vmatpush.bf16.msra.mxu0 %v695
  %2044 = vmatpush.bf16.msra.mxu0 %v691
  %2045 = vmatpush.bf16.msra.mxu0 %v687
  %2046 = vmatpush.bf16.msra.mxu0 %v683
  %2047 = vmatpush.bf16.msra.mxu0 %v679
  %2048 = vmatpush.bf16.msra.mxu0 %v675
  %2049 = vmatmul.bf16.gmra.mxu0 %v1880
  %v2050 = vpop.f32.mrf.mxu0
  %v2051 = vadd.f32 0.0, %v2050
  %v2052 = vpop.f32.mrf.mxu0
  %2053 = vdwg.mxu0
  %2054 = vmatpush.bf16.msra.mxu0 %v704
  %2055 = vmatpush.bf16.msra.mxu0 %v700
  %2056 = vmatpush.bf16.msra.mxu0 %v696
  %2057 = vmatpush.bf16.msra.mxu0 %v692
  %2058 = vmatpush.bf16.msra.mxu0 %v688
  %2059 = vmatpush.bf16.msra.mxu0 %v684
  %2060 = vmatpush.bf16.msra.mxu0 %v680
  %2061 = vmatpush.bf16.msra.mxu0 %v676
  %2062 = vmatmul.bf16.gmra.mxu0 %v1880
  %v2063 = vpop.f32.mrf.mxu0
  %v2064 = vadd.f32 0.0, %v2063
  %v2065 = vpop.f32.mrf.mxu0
  %2066 = vdwg.mxu0
  %v2067 = vadd.f32 %v1973, %v2025
  %v2068 = vadd.f32 %v1986, %v2038
  %v2069 = vadd.f32 %v1999, %v2051
  %v2070 = vadd.f32 %v2012, %v2064
  %v2071 = vadd.f32 %v2067, %v122
  %v2072 = vadd.f32 %v2068, %v123
  %v2073 = vadd.f32 %v2069, %v124
  %v2074 = vadd.f32 %v2070, %v125
  %v2075 = vmul.f32 %v2071, 0.5
  %v2076 = vtanh.pop %v2075
  %v2077 = vmul.f32 %v2076, 0.5
  %v2078 = vadd.f32 %v2077, 0.5
  %v2079 = vmul.f32 %v2072, 0.5
  %v2080 = vtanh.pop %v2079
  %v2081 = vmul.f32 %v2080, 0.5
  %v2082 = vadd.f32 %v2081, 0.5
  %v2083 = vtanh.pop %v2073
  %v2084 = vmul.f32 %v2074, 0.5
  %v2085 = vtanh.pop %v2084
  %v2086 = vmul.f32 %v2085, 0.5
  %v2087 = vadd.f32 %v2086, 0.5
  %v2088 = vmul.f32 %v2082, %v1877
  %v2089 = vmul.f32 %v2078, %v2083
  %v2090 = vadd.f32 %v2088, %v2089
  %v2091 = vtanh.pop %v2090
  %v2092 = vmul.f32 %v2087, %v2091
  %v2093 = vpack.c.bf16 %v2092, %v2092
  %s2094 = smul.u32 7, 4
  %s2095 = smul.addr %s2094, 8
  %s2096 = scalar_lea.vmem %s0, %s2095
  %v2097 = vld [vmem:[%s2096] sm:$0xff]
  %v2098 = vld [vmem:[%s2096 + $0x8] sm:$0xff]
  %v2099 = vld [vmem:[%s2096 + $0x10] sm:$0xff]
  %v2100 = vld [vmem:[%s2096 + $0x18] sm:$0xff]
  %v2101 = vadd.f32 %v2097, %v1921
  %v2102 = vadd.f32 %v2098, %v1934
  %v2103 = vadd.f32 %v2099, %v1947
  %v2104 = vadd.f32 %v2100, %v1960
  %v2105 = vmul.f32 %v2101, 0.5
  %v2106 = vtanh.pop %v2105
  %v2107 = vmul.f32 %v2106, 0.5
  %v2108 = vadd.f32 %v2107, 0.5
  %v2109 = vmul.f32 %v2102, 0.5
  %v2110 = vtanh.pop %v2109
  %v2111 = vmul.f32 %v2110, 0.5
  %v2112 = vadd.f32 %v2111, 0.5
  %v2113 = vtanh.pop %v2103
  %v2114 = vmul.f32 %v2104, 0.5
  %v2115 = vtanh.pop %v2114
  %v2116 = vmul.f32 %v2115, 0.5
  %v2117 = vadd.f32 %v2116, 0.5
  %v2118 = vmul.f32 %v2112, %v1907
  %v2119 = vmul.f32 %v2108, %v2113
  %v2120 = vadd.f32 %v2118, %v2119
  %v2121 = vtanh.pop %v2120
  %v2122 = vmul.f32 %v2117, %v2121
  %v2123 = vpack.c.bf16 %v2122, %v2122
  %2124 = vmatpush.bf16.msra.mxu0 %v701
  %2125 = vmatpush.bf16.msra.mxu0 %v697
  %2126 = vmatpush.bf16.msra.mxu0 %v693
  %2127 = vmatpush.bf16.msra.mxu0 %v689
  %2128 = vmatpush.bf16.msra.mxu0 %v685
  %2129 = vmatpush.bf16.msra.mxu0 %v681
  %2130 = vmatpush.bf16.msra.mxu0 %v677
  %2131 = vmatpush.bf16.msra.mxu0 %v673
  %2132 = vmatmul.bf16.gmra.mxu0 %v2093
  %v2133 = vpop.f32.mrf.mxu0
  %v2134 = vadd.f32 0.0, %v2133
  %v2135 = vpop.f32.mrf.mxu0
  %2136 = vdwg.mxu0
  %2137 = vmatpush.bf16.msra.mxu0 %v702
  %2138 = vmatpush.bf16.msra.mxu0 %v698
  %2139 = vmatpush.bf16.msra.mxu0 %v694
  %2140 = vmatpush.bf16.msra.mxu0 %v690
  %2141 = vmatpush.bf16.msra.mxu0 %v686
  %2142 = vmatpush.bf16.msra.mxu0 %v682
  %2143 = vmatpush.bf16.msra.mxu0 %v678
  %2144 = vmatpush.bf16.msra.mxu0 %v674
  %2145 = vmatmul.bf16.gmra.mxu0 %v2093
  %v2146 = vpop.f32.mrf.mxu0
  %v2147 = vadd.f32 0.0, %v2146
  %v2148 = vpop.f32.mrf.mxu0
  %2149 = vdwg.mxu0
  %2150 = vmatpush.bf16.msra.mxu0 %v703
  %2151 = vmatpush.bf16.msra.mxu0 %v699
  %2152 = vmatpush.bf16.msra.mxu0 %v695
  %2153 = vmatpush.bf16.msra.mxu0 %v691
  %2154 = vmatpush.bf16.msra.mxu0 %v687
  %2155 = vmatpush.bf16.msra.mxu0 %v683
  %2156 = vmatpush.bf16.msra.mxu0 %v679
  %2157 = vmatpush.bf16.msra.mxu0 %v675
  %2158 = vmatmul.bf16.gmra.mxu0 %v2093
  %v2159 = vpop.f32.mrf.mxu0
  %v2160 = vadd.f32 0.0, %v2159
  %v2161 = vpop.f32.mrf.mxu0
  %2162 = vdwg.mxu0
  %2163 = vmatpush.bf16.msra.mxu0 %v704
  %2164 = vmatpush.bf16.msra.mxu0 %v700
  %2165 = vmatpush.bf16.msra.mxu0 %v696
  %2166 = vmatpush.bf16.msra.mxu0 %v692
  %2167 = vmatpush.bf16.msra.mxu0 %v688
  %2168 = vmatpush.bf16.msra.mxu0 %v684
  %2169 = vmatpush.bf16.msra.mxu0 %v680
  %2170 = vmatpush.bf16.msra.mxu0 %v676
  %2171 = vmatmul.bf16.gmra.mxu0 %v2093
  %v2172 = vpop.f32.mrf.mxu0
  %v2173 = vadd.f32 0.0, %v2172
  %v2174 = vpop.f32.mrf.mxu0
  %2175 = vdwg.mxu0
  %2176 = vmatpush.bf16.msra.mxu0 %v405
  %2177 = vmatpush.bf16.msra.mxu0 %v397
  %2178 = vmatpush.bf16.msra.mxu0 %v389
  %2179 = vmatpush.bf16.msra.mxu0 %v381
  %2180 = vmatpush.bf16.msra.mxu0 %v373
  %2181 = vmatpush.bf16.msra.mxu0 %v365
  %2182 = vmatpush.bf16.msra.mxu0 %v357
  %2183 = vmatpush.bf16.msra.mxu0 %v349
  %2184 = vmatmul.bf16.gmra.mxu0 %v2123
  %v2185 = vpop.f32.mrf.mxu0
  %v2186 = vadd.f32 %v2134, %v2185
  %v2187 = vpop.f32.mrf.mxu0
  %2188 = vdwg.mxu0
  %2189 = vmatpush.bf16.msra.mxu0 %v406
  %2190 = vmatpush.bf16.msra.mxu0 %v398
  %2191 = vmatpush.bf16.msra.mxu0 %v390
  %2192 = vmatpush.bf16.msra.mxu0 %v382
  %2193 = vmatpush.bf16.msra.mxu0 %v374
  %2194 = vmatpush.bf16.msra.mxu0 %v366
  %2195 = vmatpush.bf16.msra.mxu0 %v358
  %2196 = vmatpush.bf16.msra.mxu0 %v350
  %2197 = vmatmul.bf16.gmra.mxu0 %v2123
  %v2198 = vpop.f32.mrf.mxu0
  %v2199 = vadd.f32 %v2147, %v2198
  %v2200 = vpop.f32.mrf.mxu0
  %2201 = vdwg.mxu0
  %2202 = vmatpush.bf16.msra.mxu0 %v407
  %2203 = vmatpush.bf16.msra.mxu0 %v399
  %2204 = vmatpush.bf16.msra.mxu0 %v391
  %2205 = vmatpush.bf16.msra.mxu0 %v383
  %2206 = vmatpush.bf16.msra.mxu0 %v375
  %2207 = vmatpush.bf16.msra.mxu0 %v367
  %2208 = vmatpush.bf16.msra.mxu0 %v359
  %2209 = vmatpush.bf16.msra.mxu0 %v351
  %2210 = vmatmul.bf16.gmra.mxu0 %v2123
  %v2211 = vpop.f32.mrf.mxu0
  %v2212 = vadd.f32 %v2160, %v2211
  %v2213 = vpop.f32.mrf.mxu0
  %2214 = vdwg.mxu0
  %2215 = vmatpush.bf16.msra.mxu0 %v408
  %2216 = vmatpush.bf16.msra.mxu0 %v400
  %2217 = vmatpush.bf16.msra.mxu0 %v392
  %2218 = vmatpush.bf16.msra.mxu0 %v384
  %2219 = vmatpush.bf16.msra.mxu0 %v376
  %2220 = vmatpush.bf16.msra.mxu0 %v368
  %2221 = vmatpush.bf16.msra.mxu0 %v360
  %2222 = vmatpush.bf16.msra.mxu0 %v352
  %2223 = vmatmul.bf16.gmra.mxu0 %v2123
  %v2224 = vpop.f32.mrf.mxu0
  %v2225 = vadd.f32 %v2173, %v2224
  %v2226 = vpop.f32.mrf.mxu0
  %2227 = vdwg.mxu0
  %v2228 = vadd.f32 %v2186, %v122
  %v2229 = vadd.f32 %v2199, %v123
  %v2230 = vadd.f32 %v2212, %v124
  %v2231 = vadd.f32 %v2225, %v125
  %v2232 = vmul.f32 %v2228, 0.5
  %v2233 = vtanh.pop %v2232
  %v2234 = vmul.f32 %v2233, 0.5
  %v2235 = vadd.f32 %v2234, 0.5
  %v2236 = vmul.f32 %v2229, 0.5
  %v2237 = vtanh.pop %v2236
  %v2238 = vmul.f32 %v2237, 0.5
  %v2239 = vadd.f32 %v2238, 0.5
  %v2240 = vtanh.pop %v2230
  %v2241 = vmul.f32 %v2231, 0.5
  %v2242 = vtanh.pop %v2241
  %v2243 = vmul.f32 %v2242, 0.5
  %v2244 = vadd.f32 %v2243, 0.5
  %v2245 = vmul.f32 %v2239, %v2090
  %v2246 = vmul.f32 %v2235, %v2240
  %v2247 = vadd.f32 %v2245, %v2246
  %v2248 = vtanh.pop %v2247
  %v2249 = vmul.f32 %v2244, %v2248
  %v2250 = vpack.c.bf16 %v2249, %v2249
  %v2251 = vld [vmem:[%s4] sm:$0xf]
  %v2252 = vld [vmem:[%s4 + $0x4] sm:$0xf]
  %v2253 = vld [vmem:[%s4 + $0x8] sm:$0xf]
  %v2254 = vld [vmem:[%s4 + $0xc] sm:$0xf]
  %v2255 = vld [vmem:[%s4 + $0x10] sm:$0xf]
  %v2256 = vld [vmem:[%s4 + $0x14] sm:$0xf]
  %v2257 = vld [vmem:[%s4 + $0x18] sm:$0xf]
  %v2258 = vld [vmem:[%s4 + $0x1c] sm:$0xf]
  %v2259 = vld [vmem:[%s4 + $0x20] sm:$0xf]
  %v2260 = vld [vmem:[%s4 + $0x24] sm:$0xf]
  %v2261 = vld [vmem:[%s4 + $0x28] sm:$0xf]
  %v2262 = vld [vmem:[%s4 + $0x2c] sm:$0xf]
  %v2263 = vld [vmem:[%s4 + $0x30] sm:$0xf]
  %v2264 = vld [vmem:[%s4 + $0x34] sm:$0xf]
  %v2265 = vld [vmem:[%s4 + $0x38] sm:$0xf]
  %v2266 = vld [vmem:[%s4 + $0x3c] sm:$0xf]
  %v2267 = vld [vmem:[%s5] sm:$0x1]
  %v2269 = vperm.slane %v2267, 0
  %v2287 = vunpack.c.l.b16 %v2251
  %v2288 = vunpack.c.l.b16 %v2252
  %v2289 = vunpack.c.l.b16 %v2253
  %v2290 = vunpack.c.l.b16 %v2254
  %v2291 = vunpack.c.l.b16 %v2255
  %v2292 = vunpack.c.l.b16 %v2256
  %v2293 = vunpack.c.l.b16 %v2257
  %v2294 = vunpack.c.l.b16 %v2258
  %v2295 = vunpack.c.l.b16 %v2259
  %v2296 = vunpack.c.l.b16 %v2260
  %v2297 = vunpack.c.l.b16 %v2261
  %v2298 = vunpack.c.l.b16 %v2262
  %v2299 = vunpack.c.l.b16 %v2263
  %v2300 = vunpack.c.l.b16 %v2264
  %v2301 = vunpack.c.l.b16 %v2265
  %v2302 = vunpack.c.l.b16 %v2266
  %v2303 = vpack.c.b16 %v2288, %v2287
  %v2304 = vpack.c.b16 %v2290, %v2289
  %v2305 = vpack.c.b16 %v2292, %v2291
  %v2306 = vpack.c.b16 %v2294, %v2293
  %v2307 = vpack.c.b16 %v2296, %v2295
  %v2308 = vpack.c.b16 %v2298, %v2297
  %v2309 = vpack.c.b16 %v2300, %v2299
  %v2310 = vpack.c.b16 %v2302, %v2301
  %2319 = vmatpush.bf16.msra.mxu0 %v2310
  %2320 = vmatpush.bf16.msra.mxu0 %v2309
  %2321 = vmatpush.bf16.msra.mxu0 %v2308
  %2322 = vmatpush.bf16.msra.mxu0 %v2307
  %2323 = vmatpush.bf16.msra.mxu0 %v2306
  %2324 = vmatpush.bf16.msra.mxu0 %v2305
  %2325 = vmatpush.bf16.msra.mxu0 %v2304
  %2326 = vmatpush.bf16.msra.mxu0 %v2303
  %2327 = vmatmul.bf16.gmra.mxu0 %v2250
  %v2328 = vpop.f32.mrf.mxu0
  %v2329 = vadd.f32 %v2269, %v2328
  %v2330 = vpop.f32.mrf.mxu0
  %2331 = vdwg.mxu0
  %2332 = vst [vmem:[%s6] sm:$0xff] %v2329
  // Predicated region
  $region26: #{lstm_classifier_forward.1} parent=0 // pred_check
    _
  $region27: #{lstm_classifier_forward.1} parent=0 // pred_check_branch
    %2334 = sbr.rel (0) target = $region29
  $region28: #{lstm_classifier_forward.1} parent=0 // pred_region
    _
  $region29: #{lstm_classifier_forward.1} parent=0 // pred_fallthru
    _
  // Predicated region
  $region30: #{lstm_classifier_forward.1} parent=0 // pred_check
    _
  $region31: #{lstm_classifier_forward.1} parent=0 // pred_check_branch
    %2336 = sbr.rel (0) target = $region33
  $region32: #{lstm_classifier_forward.1} parent=0 // pred_region
    _
  $region33: #{lstm_classifier_forward.1} parent=0 // pred_fallthru
    _

</llo_original>
